<compile_context>
chip_gen: v7x
topology: tpu7x:2x2x1
jax: 0.10.0
libtpu: 0.0.40
codegen_flags: <defaults>
</compile_context>

<pallas_src>
import jax
import jax.numpy as jnp
from jax.experimental import pallas as pl
from jax.experimental.pallas import tpu as pltpu

BN_EPS = 1e-5


def basic_block_kernel(x_ref, w1_ref, b1_ref, wfc1_ref, wfc2_ref, w2_ref, out_ref):
    _, H, W, C = x_ref.shape
    x3 = x_ref[0]                                               # (H, W, C) f32, one image

    def conv3x3(inp_bf16, w_ref):
        """3x3 / stride 1 / pad 1 conv as a single im2col MXU matmul.

        inp_bf16: (H, W, C) bf16.  w_ref: (9*C, C) bf16 (tap-major order: dy, dx, cin).
        Returns (H*W, C) f32.
        """
        zr = jnp.zeros((1, W, C), jnp.bfloat16)
        zc = jnp.zeros((H + 2, 1, C), jnp.bfloat16)
        xp = jnp.concatenate([zr, inp_bf16, zr], axis=0)        # (H+2, W,   C)
        xp = jnp.concatenate([zc, xp, zc], axis=1)              # (H+2, W+2, C)
        cols = jnp.concatenate(
            [xp[dy:dy + H, dx:dx + W, :].reshape(H * W, C)
             for dy in range(3) for dx in range(3)], axis=-1)   # (H*W, 9*C) bf16
        return jnp.dot(cols, w_ref[...], preferred_element_type=jnp.float32)

    # ---- conv1 with bn1 folded in (w1 pre-scaled per output channel, bias added once).
    y = conv3x3(x3.astype(jnp.bfloat16), w1_ref) + b1_ref[...]  # (H*W, C) f32

    # ---- CA: channel attention.
    # TODO(synk): CA's exact definition is not in the provided snippet; implemented
    # as SE (global avg pool -> FC -> ReLU -> FC -> sigmoid -> channel scale).
    pooled = jnp.mean(y, axis=0, keepdims=True)                 # (1, C) f32
    h = jnp.maximum(
        jnp.dot(pooled.astype(jnp.bfloat16), wfc1_ref[...],
                preferred_element_type=jnp.float32), 0.0)       # (1, Cr) f32
    attn = jax.nn.sigmoid(
        jnp.dot(h.astype(jnp.bfloat16), wfc2_ref[...],
                preferred_element_type=jnp.float32))            # (1, C) f32
    y = y * attn                                                # broadcast channel scale

    # ---- conv2 + residual (downsample=None, drop_path=Identity -> plain add).
    out2 = conv3x3(y.reshape(H, W, C).astype(jnp.bfloat16), w2_ref)
    out_ref[0] = (out2 + x3.reshape(H * W, C)).reshape(H, W, C)


def basic_block_forward(x_nchw, params):
    """x_nchw: (B, C, H, W) float32. Returns (B, C, H, W) float32."""
    B, C, H, W = x_nchw.shape
    cr = params["wfc1"].shape[1]
    x_nhwc = jnp.transpose(x_nchw, (0, 2, 3, 1))

    # Fold bn1 (inference running stats) into conv1: fold in f32, then cast to bf16.
    s = params["gamma"] * jax.lax.rsqrt(params["var"] + BN_EPS)                 # (C,)
    w1f = (params["w1"] * s[None, None, None, :]).reshape(9 * C, C).astype(jnp.bfloat16)
    b1 = (params["beta"] - params["mean"] * s).reshape(1, C)                    # f32 bias
    w2f = params["w2"].reshape(9 * C, C).astype(jnp.bfloat16)
    wfc1 = params["wfc1"].astype(jnp.bfloat16)
    wfc2 = params["wfc2"].astype(jnp.bfloat16)

    # TODO(synk): for production H*W*C that exceed VMEM, add spatial (H-row) tiling
    # with 1-row halo index_maps and split CA into a two-pass (pool, then scale)
    # structure; the toy per-image tile fits comfortably, so the grid is batch-only.
    out_nhwc = pl.pallas_call(
        basic_block_kernel,
        out_shape=jax.ShapeDtypeStruct((B, H, W, C), jnp.float32),
        grid=(B,),
        in_specs=[
            pl.BlockSpec((1, H, W, C), lambda b: (b, 0, 0, 0)),   # x: one image / step
            pl.BlockSpec((9 * C, C), lambda b: (0, 0)),           # folded conv1 weight
            pl.BlockSpec((1, C), lambda b: (0, 0)),               # folded bn1 bias
            pl.BlockSpec((C, cr), lambda b: (0, 0)),              # CA fc1
            pl.BlockSpec((cr, C), lambda b: (0, 0)),              # CA fc2
            pl.BlockSpec((9 * C, C), lambda b: (0, 0)),           # conv2 weight
        ],
        out_specs=pl.BlockSpec((1, H, W, C), lambda b: (b, 0, 0, 0)),
        compiler_params=pltpu.CompilerParams(
            dimension_semantics=("parallel",)),   # megacore: shard batch across TCs
    )(x_nhwc, w1f, b1, wfc1, wfc2, w2f)

    return jnp.transpose(out_nhwc, (0, 3, 1, 2))


def reference_forward(x_nchw, params):
    """Pure-JAX reference with the same bf16-matmul / f32-accumulate precision
    choices as the kernel (the pure-f32 PyTorch forward differs only by bf16
    rounding of the MXU operands)."""
    x = jnp.transpose(x_nchw, (0, 2, 3, 1))
    dn = ("NHWC", "HWIO", "NHWC")
    s = params["gamma"] * jax.lax.rsqrt(params["var"] + BN_EPS)
    w1f = (params["w1"] * s[None, None, None, :]).astype(jnp.bfloat16)
    b1 = params["beta"] - params["mean"] * s
    out = jax.lax.conv_general_dilated(
        x.astype(jnp.bfloat16), w1f, (1, 1), "SAME", dimension_numbers=dn,
        preferred_element_type=jnp.float32) + b1
    pooled = jnp.mean(out, axis=(1, 2))
    h = jnp.maximum(
        jnp.dot(pooled.astype(jnp.bfloat16), params["wfc1"].astype(jnp.bfloat16),
                preferred_element_type=jnp.float32), 0.0)
    attn = jax.nn.sigmoid(
        jnp.dot(h.astype(jnp.bfloat16), params["wfc2"].astype(jnp.bfloat16),
                preferred_element_type=jnp.float32))
    out = out * attn[:, None, None, :]
    out = jax.lax.conv_general_dilated(
        out.astype(jnp.bfloat16), params["w2"].astype(jnp.bfloat16), (1, 1),
        "SAME", dimension_numbers=dn, preferred_element_type=jnp.float32)
    out = out + x
    return jnp.transpose(out, (0, 3, 1, 2))


def make_params(key, planes, reduction=4):
    ks = jax.random.split(key, 8)
    cr = max(planes // reduction, 1)
    return {
        # conv weights stored directly in HWIO (PyTorch OIHW transposed).
        "w1": 0.1 * jax.random.normal(ks[0], (3, 3, planes, planes), jnp.float32),
        "w2": 0.1 * jax.random.normal(ks[1], (3, 3, planes, planes), jnp.float32),
        # BatchNorm affine params + running stats.
        "gamma": 1.0 + 0.1 * jax.random.normal(ks[2], (planes,), jnp.float32),
        "beta": 0.1 * jax.random.normal(ks[3], (planes,), jnp.float32),
        "mean": 0.1 * jax.random.normal(ks[4], (planes,), jnp.float32),
        "var": jnp.abs(1.0 + 0.1 * jax.random.normal(ks[5], (planes,), jnp.float32)),
        # SE-style channel attention FCs (no bias).
        "wfc1": 0.1 * jax.random.normal(ks[6], (planes, cr), jnp.float32),
        "wfc2": 0.1 * jax.random.normal(ks[7], (cr, planes), jnp.float32),
    }


if __name__ == "__main__":
    key = jax.random.PRNGKey(0)
    kx, kp = jax.random.split(key)

    # planes=128 -> channel (lane) dim is a full vreg width: lane-dense stores,
    # elementwise work, and MXU N-dim.  inplanes == planes, stride=1.
    B, C, H, W = 2, 128, 16, 16
    x = jax.random.normal(kx, (B, C, H, W), jnp.float32)
    params = make_params(kp, planes=C, reduction=4)

    out = jax.block_until_ready(jax.jit(basic_block_forward)(x, params))
    ref = jax.block_until_ready(jax.jit(reference_forward)(x, params))

    assert out.shape == (B, C, H, W)
    err = float(jnp.max(jnp.abs(out - ref)))
    assert err < 1e-2, f"kernel mismatch vs reference: {err}"
    print("KERNEL_OK")
</pallas_src>

<mosaic_0001>
module attributes {stable_mosaic.version = 11 : i64} {
  func.func @basic_block_kernel(%arg0: i32, %arg1: memref<1x16x16x128xf32, #tpu.memory_space<vmem>>, %arg2: memref<1152x128xbf16, #tpu.memory_space<vmem>>, %arg3: memref<1x128xf32, #tpu.memory_space<vmem>>, %arg4: memref<128x32xbf16, #tpu.memory_space<vmem>>, %arg5: memref<32x128xbf16, #tpu.memory_space<vmem>>, %arg6: memref<1152x128xbf16, #tpu.memory_space<vmem>>, %arg7: memref<1x16x16x128xf32, #tpu.memory_space<vmem>>) attributes {dimension_semantics = [#tpu.dimension_semantics<parallel>], iteration_bounds = array<i64: 2>, scalar_prefetch = 0 : i64, scratch_operands = 0 : i64, tpu.core_type = #tpu.core_type<tc>, window_params = [{transform_indices = @transform_0, window_bounds = array<i64: 1, 16, 16, 128>}, {pipeline_mode = #tpu.pipeline_mode<synchronous>, transform_indices = @transform_1, window_bounds = array<i64: 1152, 128>}, {pipeline_mode = #tpu.pipeline_mode<synchronous>, transform_indices = @transform_2, window_bounds = array<i64: 1, 128>}, {pipeline_mode = #tpu.pipeline_mode<synchronous>, transform_indices = @transform_3, window_bounds = array<i64: 128, 32>}, {pipeline_mode = #tpu.pipeline_mode<synchronous>, transform_indices = @transform_4, window_bounds = array<i64: 32, 128>}, {pipeline_mode = #tpu.pipeline_mode<synchronous>, transform_indices = @transform_5, window_bounds = array<i64: 1152, 128>}, {transform_indices = @transform_6, window_bounds = array<i64: 1, 16, 16, 128>}]} {
    %c0 = arith.constant 0 : index
    %c0_0 = arith.constant 0 : index
    %c0_1 = arith.constant 0 : index
    %c0_2 = arith.constant 0 : index
    %0 = vector.load %arg1[%c0, %c0_0, %c0_1, %c0_2] : memref<1x16x16x128xf32, #tpu.memory_space<vmem>>, vector<1x16x16x128xf32>
    %1 = vector.shape_cast %0 : vector<1x16x16x128xf32> to vector<16x16x128xf32>
    %2 = arith.truncf %1 : vector<16x16x128xf32> to vector<16x16x128xbf16>
    %cst = arith.constant 0.000000e+00 : bf16
    %3 = vector.broadcast %cst : bf16 to vector<1x16x128xbf16>
    %cst_3 = arith.constant 0.000000e+00 : bf16
    %4 = vector.broadcast %cst_3 : bf16 to vector<18x1x128xbf16>
    %5 = tpu.concatenate %3, %2, %3 in 0 : vector<1x16x128xbf16>, vector<16x16x128xbf16>, vector<1x16x128xbf16> -> vector<18x16x128xbf16>
    %6 = tpu.concatenate %4, %5, %4 in 1 : vector<18x1x128xbf16>, vector<18x16x128xbf16>, vector<18x1x128xbf16> -> vector<18x18x128xbf16>
    %7 = vector.extract_strided_slice %6 {offsets = [0, 0, 0], sizes = [16, 16, 128], strides = [1, 1, 1]} : vector<18x18x128xbf16> to vector<16x16x128xbf16>
    %8 = vector.shape_cast %7 : vector<16x16x128xbf16> to vector<256x128xbf16>
    %9 = vector.extract_strided_slice %6 {offsets = [0, 1, 0], sizes = [16, 16, 128], strides = [1, 1, 1]} : vector<18x18x128xbf16> to vector<16x16x128xbf16>
    %10 = vector.shape_cast %9 : vector<16x16x128xbf16> to vector<256x128xbf16>
    %11 = vector.extract_strided_slice %6 {offsets = [0, 2, 0], sizes = [16, 16, 128], strides = [1, 1, 1]} : vector<18x18x128xbf16> to vector<16x16x128xbf16>
    %12 = vector.shape_cast %11 : vector<16x16x128xbf16> to vector<256x128xbf16>
    %13 = vector.extract_strided_slice %6 {offsets = [1, 0, 0], sizes = [16, 16, 128], strides = [1, 1, 1]} : vector<18x18x128xbf16> to vector<16x16x128xbf16>
    %14 = vector.shape_cast %13 : vector<16x16x128xbf16> to vector<256x128xbf16>
    %15 = vector.extract_strided_slice %6 {offsets = [1, 1, 0], sizes = [16, 16, 128], strides = [1, 1, 1]} : vector<18x18x128xbf16> to vector<16x16x128xbf16>
    %16 = vector.shape_cast %15 : vector<16x16x128xbf16> to vector<256x128xbf16>
    %17 = vector.extract_strided_slice %6 {offsets = [1, 2, 0], sizes = [16, 16, 128], strides = [1, 1, 1]} : vector<18x18x128xbf16> to vector<16x16x128xbf16>
    %18 = vector.shape_cast %17 : vector<16x16x128xbf16> to vector<256x128xbf16>
    %19 = vector.extract_strided_slice %6 {offsets = [2, 0, 0], sizes = [16, 16, 128], strides = [1, 1, 1]} : vector<18x18x128xbf16> to vector<16x16x128xbf16>
    %20 = vector.shape_cast %19 : vector<16x16x128xbf16> to vector<256x128xbf16>
    %21 = vector.extract_strided_slice %6 {offsets = [2, 1, 0], sizes = [16, 16, 128], strides = [1, 1, 1]} : vector<18x18x128xbf16> to vector<16x16x128xbf16>
    %22 = vector.shape_cast %21 : vector<16x16x128xbf16> to vector<256x128xbf16>
    %23 = vector.extract_strided_slice %6 {offsets = [2, 2, 0], sizes = [16, 16, 128], strides = [1, 1, 1]} : vector<18x18x128xbf16> to vector<16x16x128xbf16>
    %24 = vector.shape_cast %23 : vector<16x16x128xbf16> to vector<256x128xbf16>
    %25 = tpu.concatenate %8, %10, %12, %14, %16, %18, %20, %22, %24 in 1 : vector<256x128xbf16>, vector<256x128xbf16>, vector<256x128xbf16>, vector<256x128xbf16>, vector<256x128xbf16>, vector<256x128xbf16>, vector<256x128xbf16>, vector<256x128xbf16>, vector<256x128xbf16> -> vector<256x1152xbf16>
    %c0_4 = arith.constant 0 : index
    %c0_5 = arith.constant 0 : index
    %26 = vector.load %arg2[%c0_4, %c0_5] : memref<1152x128xbf16, #tpu.memory_space<vmem>>, vector<1152x128xbf16>
    %cst_6 = arith.constant dense<0.000000e+00> : vector<256x128xf32>
    %27 = tpu.matmul %25, %26, %cst_6 {dimension_numbers = #tpu.dot_dimension_numbers<[1], [0], [0], [1], [0, 0, 1, 1], [], []>} : vector<256x1152xbf16>, vector<1152x128xbf16>, vector<256x128xf32> -> vector<256x128xf32>
    %c0_7 = arith.constant 0 : index
    %c0_8 = arith.constant 0 : index
    %28 = vector.load %arg3[%c0_7, %c0_8] : memref<1x128xf32, #tpu.memory_space<vmem>>, vector<1x128xf32>
    %29 = vector.broadcast %28 : vector<1x128xf32> to vector<256x128xf32>
    %30 = arith.addf %27, %29 : vector<256x128xf32>
    %cst_9 = arith.constant dense<0.000000e+00> : vector<128xf32>
    %31 = vector.multi_reduction <add>, %30, %cst_9 [0] : vector<256x128xf32> to vector<128xf32>
    %32 = vector.shape_cast %31 : vector<128xf32> to vector<1x128xf32>
    %cst_10 = arith.constant 2.560000e+02 : f32
    %33 = vector.broadcast %cst_10 : f32 to vector<1x128xf32>
    %34 = arith.divf %32, %33 : vector<1x128xf32>
    %35 = arith.truncf %34 : vector<1x128xf32> to vector<1x128xbf16>
    %c0_11 = arith.constant 0 : index
    %c0_12 = arith.constant 0 : index
    %36 = vector.load %arg4[%c0_11, %c0_12] : memref<128x32xbf16, #tpu.memory_space<vmem>>, vector<128x32xbf16>
    %cst_13 = arith.constant dense<0.000000e+00> : vector<1x32xf32>
    %37 = tpu.matmul %35, %36, %cst_13 {dimension_numbers = #tpu.dot_dimension_numbers<[1], [0], [0], [1], [0, 0, 1, 1], [], []>} : vector<1x128xbf16>, vector<128x32xbf16>, vector<1x32xf32> -> vector<1x32xf32>
    %cst_14 = arith.constant 0.000000e+00 : f32
    %38 = vector.broadcast %cst_14 : f32 to vector<1x32xf32>
    %39 = arith.maximumf %37, %38 : vector<1x32xf32>
    %40 = arith.truncf %39 : vector<1x32xf32> to vector<1x32xbf16>
    %c0_15 = arith.constant 0 : index
    %c0_16 = arith.constant 0 : index
    %41 = vector.load %arg5[%c0_15, %c0_16] : memref<32x128xbf16, #tpu.memory_space<vmem>>, vector<32x128xbf16>
    %cst_17 = arith.constant dense<0.000000e+00> : vector<1x128xf32>
    %42 = tpu.matmul %40, %41, %cst_17 {dimension_numbers = #tpu.dot_dimension_numbers<[1], [0], [0], [1], [0, 0, 1, 1], [], []>} : vector<1x32xbf16>, vector<32x128xbf16>, vector<1x128xf32> -> vector<1x128xf32>
    %43 = arith.negf %42 : vector<1x128xf32>
    %44 = math.exp %43 : vector<1x128xf32>
    %cst_18 = arith.constant 1.000000e+00 : f32
    %45 = vector.broadcast %cst_18 : f32 to vector<1x128xf32>
    %46 = arith.addf %45, %44 : vector<1x128xf32>
    %47 = arith.divf %45, %46 : vector<1x128xf32>
    %48 = vector.broadcast %47 : vector<1x128xf32> to vector<256x128xf32>
    %49 = arith.mulf %30, %48 : vector<256x128xf32>
    %50 = vector.shape_cast %49 : vector<256x128xf32> to vector<16x16x128xf32>
    %51 = arith.truncf %50 : vector<16x16x128xf32> to vector<16x16x128xbf16>
    %cst_19 = arith.constant 0.000000e+00 : bf16
    %52 = vector.broadcast %cst_19 : bf16 to vector<1x16x128xbf16>
    %cst_20 = arith.constant 0.000000e+00 : bf16
    %53 = vector.broadcast %cst_20 : bf16 to vector<18x1x128xbf16>
    %54 = tpu.concatenate %52, %51, %52 in 0 : vector<1x16x128xbf16>, vector<16x16x128xbf16>, vector<1x16x128xbf16> -> vector<18x16x128xbf16>
    %55 = tpu.concatenate %53, %54, %53 in 1 : vector<18x1x128xbf16>, vector<18x16x128xbf16>, vector<18x1x128xbf16> -> vector<18x18x128xbf16>
    %56 = vector.extract_strided_slice %55 {offsets = [0, 0, 0], sizes = [16, 16, 128], strides = [1, 1, 1]} : vector<18x18x128xbf16> to vector<16x16x128xbf16>
    %57 = vector.shape_cast %56 : vector<16x16x128xbf16> to vector<256x128xbf16>
    %58 = vector.extract_strided_slice %55 {offsets = [0, 1, 0], sizes = [16, 16, 128], strides = [1, 1, 1]} : vector<18x18x128xbf16> to vector<16x16x128xbf16>
    %59 = vector.shape_cast %58 : vector<16x16x128xbf16> to vector<256x128xbf16>
    %60 = vector.extract_strided_slice %55 {offsets = [0, 2, 0], sizes = [16, 16, 128], strides = [1, 1, 1]} : vector<18x18x128xbf16> to vector<16x16x128xbf16>
    %61 = vector.shape_cast %60 : vector<16x16x128xbf16> to vector<256x128xbf16>
    %62 = vector.extract_strided_slice %55 {offsets = [1, 0, 0], sizes = [16, 16, 128], strides = [1, 1, 1]} : vector<18x18x128xbf16> to vector<16x16x128xbf16>
    %63 = vector.shape_cast %62 : vector<16x16x128xbf16> to vector<256x128xbf16>
    %64 = vector.extract_strided_slice %55 {offsets = [1, 1, 0], sizes = [16, 16, 128], strides = [1, 1, 1]} : vector<18x18x128xbf16> to vector<16x16x128xbf16>
    %65 = vector.shape_cast %64 : vector<16x16x128xbf16> to vector<256x128xbf16>
    %66 = vector.extract_strided_slice %55 {offsets = [1, 2, 0], sizes = [16, 16, 128], strides = [1, 1, 1]} : vector<18x18x128xbf16> to vector<16x16x128xbf16>
    %67 = vector.shape_cast %66 : vector<16x16x128xbf16> to vector<256x128xbf16>
    %68 = vector.extract_strided_slice %55 {offsets = [2, 0, 0], sizes = [16, 16, 128], strides = [1, 1, 1]} : vector<18x18x128xbf16> to vector<16x16x128xbf16>
    %69 = vector.shape_cast %68 : vector<16x16x128xbf16> to vector<256x128xbf16>
    %70 = vector.extract_strided_slice %55 {offsets = [2, 1, 0], sizes = [16, 16, 128], strides = [1, 1, 1]} : vector<18x18x128xbf16> to vector<16x16x128xbf16>
    %71 = vector.shape_cast %70 : vector<16x16x128xbf16> to vector<256x128xbf16>
    %72 = vector.extract_strided_slice %55 {offsets = [2, 2, 0], sizes = [16, 16, 128], strides = [1, 1, 1]} : vector<18x18x128xbf16> to vector<16x16x128xbf16>
    %73 = vector.shape_cast %72 : vector<16x16x128xbf16> to vector<256x128xbf16>
    %74 = tpu.concatenate %57, %59, %61, %63, %65, %67, %69, %71, %73 in 1 : vector<256x128xbf16>, vector<256x128xbf16>, vector<256x128xbf16>, vector<256x128xbf16>, vector<256x128xbf16>, vector<256x128xbf16>, vector<256x128xbf16>, vector<256x128xbf16>, vector<256x128xbf16> -> vector<256x1152xbf16>
    %c0_21 = arith.constant 0 : index
    %c0_22 = arith.constant 0 : index
    %75 = vector.load %arg6[%c0_21, %c0_22] : memref<1152x128xbf16, #tpu.memory_space<vmem>>, vector<1152x128xbf16>
    %cst_23 = arith.constant dense<0.000000e+00> : vector<256x128xf32>
    %76 = tpu.matmul %74, %75, %cst_23 {dimension_numbers = #tpu.dot_dimension_numbers<[1], [0], [0], [1], [0, 0, 1, 1], [], []>} : vector<256x1152xbf16>, vector<1152x128xbf16>, vector<256x128xf32> -> vector<256x128xf32>
    %77 = vector.shape_cast %1 : vector<16x16x128xf32> to vector<256x128xf32>
    %78 = arith.addf %76, %77 : vector<256x128xf32>
    %79 = vector.shape_cast %78 : vector<256x128xf32> to vector<16x16x128xf32>
    %c0_24 = arith.constant 0 : index
    %c0_25 = arith.constant 0 : index
    %c0_26 = arith.constant 0 : index
    %c0_27 = arith.constant 0 : index
    %80 = vector.load %arg7[%c0_24, %c0_25, %c0_26, %c0_27] : memref<1x16x16x128xf32, #tpu.memory_space<vmem>>, vector<1x16x16x128xf32>
    %81 = vector.shape_cast %80 : vector<1x16x16x128xf32> to vector<16x16x128xf32>
    %82 = vector.shape_cast %79 : vector<16x16x128xf32> to vector<1x16x16x128xf32>
    tpu.vector_store %arg7[%c0_24, %c0_25, %c0_26, %c0_27], %82 {strides = array<i32>} : memref<1x16x16x128xf32, #tpu.memory_space<vmem>>, vector<1x16x16x128xf32>,
    return
  }
  func.func @transform_0(%arg0: i32) -> (i32, i32, i32, i32) {
    %c0_i32 = arith.constant 0 : i32
    %c0_i32_0 = arith.constant 0 : i32
    %c0_i32_1 = arith.constant 0 : i32
    %c0_i32_2 = arith.constant 0 : i32
    return %arg0, %c0_i32, %c0_i32_0, %c0_i32_1 : i32, i32, i32, i32
  }
  func.func @transform_1(%arg0: i32) -> (i32, i32) {
    %c0_i32 = arith.constant 0 : i32
    %c0_i32_0 = arith.constant 0 : i32
    %c0_i32_1 = arith.constant 0 : i32
    return %c0_i32, %c0_i32_0 : i32, i32
  }
  func.func @transform_2(%arg0: i32) -> (i32, i32) {
    %c0_i32 = arith.constant 0 : i32
    %c0_i32_0 = arith.constant 0 : i32
    %c0_i32_1 = arith.constant 0 : i32
    return %c0_i32, %c0_i32_0 : i32, i32
  }
  func.func @transform_3(%arg0: i32) -> (i32, i32) {
    %c0_i32 = arith.constant 0 : i32
    %c0_i32_0 = arith.constant 0 : i32
    %c0_i32_1 = arith.constant 0 : i32
    return %c0_i32, %c0_i32_0 : i32, i32
  }
  func.func @transform_4(%arg0: i32) -> (i32, i32) {
    %c0_i32 = arith.constant 0 : i32
    %c0_i32_0 = arith.constant 0 : i32
    %c0_i32_1 = arith.constant 0 : i32
    return %c0_i32, %c0_i32_0 : i32, i32
  }
  func.func @transform_5(%arg0: i32) -> (i32, i32) {
    %c0_i32 = arith.constant 0 : i32
    %c0_i32_0 = arith.constant 0 : i32
    %c0_i32_1 = arith.constant 0 : i32
    return %c0_i32, %c0_i32_0 : i32, i32
  }
  func.func @transform_6(%arg0: i32) -> (i32, i32, i32, i32) {
    %c0_i32 = arith.constant 0 : i32
    %c0_i32_0 = arith.constant 0 : i32
    %c0_i32_1 = arith.constant 0 : i32
    %c0_i32_2 = arith.constant 0 : i32
    return %arg0, %c0_i32, %c0_i32_0, %c0_i32_1 : i32, i32, i32, i32
  }
}

</mosaic_0001>

<llo_original>
// kernel: basic_block_forward.1
$region0: #{basic_block_forward.1}
  #allocation0 [shape = 'u32[]', space=smem, size = 0x4, offset = 0x4, fixed_abs, tag = 'smem constant byte address 0x4 - core index']
  #allocation1 [shape = 'u32[144,128]{1,0:T(1,128)}', space=vmem, size = 0x12000, scoped, tag = 'internal scratch']
  %s0 = inlined_call_operand.vmem [shape: f32[2,16,16,128], index: 0, kind: input, shape index: {}]
  %s1 = inlined_call_operand.vmem [shape: bf16[1152,128], index: 1, kind: input, shape index: {}]
  %s2 = inlined_call_operand.vmem [shape: f32[1,128], index: 2, kind: input, shape index: {}]
  %s3 = inlined_call_operand.vmem [shape: bf16[128,32], index: 3, kind: input, shape index: {}]
  %s4 = inlined_call_operand.vmem [shape: bf16[32,128], index: 4, kind: input, shape index: {}]
  %s5 = inlined_call_operand.vmem [shape: bf16[1152,128], index: 5, kind: input, shape index: {}]
  %s6 = inlined_call_operand.hbm [shape: f32[2,16,16,128], index: 6, kind: output, shape index: {}]
  %s7 = sld [smem:[#allocation0]]
  $region57: #{basic_block_forward.1} parent=0
    _
  %s9 = ssub.s32 1, %s7
  %s10 = scalar_select 0, %s9, %s7
  $region1: #{basic_block_forward.1} parent=0
    #allocation2 [shape = 'u8[262144]{0}', space=vmem, size = 0x40000, scoped, tag = 'output window, operand 0']
    #allocation3 [shape = 's32[2]{0}', space=sflag, size = 0x8, scoped, tag = 'scoped memory for basic_block_forward.1']
    %11 = vsyncpa [#allocation3], 0
    %s12 = scalar_lea.sflag [#allocation3], 1
    %13 = vsyncpa %s12, 0
    loop: start=0, step=1, limit=4
    $region2: #{basic_block_forward.1} parent=1 // loop_pre_header
      _
    $region3: #{basic_block_forward.1} parent=1 // loop_header
      %s15 = sphi 0, %s19
      %p16 = scmp.ge.s32.totalorder %s15, 4
      %s25 = sphi 0, %s27
      %s28 = sphi 0, %s25
      %s29 = sphi 0, %s28
      %s45 = sphi 0, %s29
      %s49 = sphi 0, %s49
      %s51 = sphi 0, %s49
      %s52 = sphi 0, %s51
      %s66 = sphi 0, %s52
      %s70 = sphi 0, %s70
      %s72 = sphi 0, %s70
      %s73 = sphi 0, %s72
      %s87 = sphi 0, %s73
      %s91 = sphi 0, %s91
      %s93 = sphi 0, %s91
      %s94 = sphi 0, %s93
      %s108 = sphi 0, %s94
      %s112 = sphi 0, %s112
      %s114 = sphi 0, %s112
      %s115 = sphi 0, %s114
      %s129 = sphi 0, %s115
      %s133 = sphi 0, %s133
      %s135 = sphi 0, %s133
      %s136 = sphi 0, %s135
      %s150 = sphi 0, %s136
      %s156 = sphi 0, %s158
      %s159 = sphi 0, %s156
      %s160 = sphi 0, %s159
      %s176 = sphi 0, %s160
    $region4: #{basic_block_forward.1} parent=1 // loop_header_branch
      %18 = sbr.rel (%p16) target = $region8
    $region5: #{basic_block_forward.1} parent=1 // loop_body
      %s20 = ssub.s32 %s15, 1
      %s21 = ssub.s32 %s15, 2
      %s22 = sadd.s32 %s15, 1
      %s23 = ssub.s32 %s15, %s22
      %p24 = scmp.eq.s32.totalorder %s23, 0
      %s26 = sadd.s32 %s25, 1
      %s27 = scalar_select %p24, %s25, %s26
      %p30 = pneg %p24
      %p31 = scmp.eq.s32.totalorder %s15, 1
      %p32 = por %p30, %p31
      %p33 = scmp.ne.s32.totalorder %s25, %s28
      %p34 = scmp.eq.s32.totalorder %s15, 0
      %p35 = por %p33, %p34
      %p36 = scmp.ne.s32.totalorder %s25, %s28
      %p37 = scmp.eq.s32.totalorder %s20, 1
      %p38 = por %p36, %p37
      %p39 = scmp.ne.s32.totalorder %s28, %s29
      %p40 = scmp.eq.s32.totalorder %s20, 0
      %p41 = por %p39, %p40
      %p42 = scmp.ne.s32.totalorder %s28, %s29
      %p43 = scmp.eq.s32.totalorder %s21, 1
      %p44 = por %p42, %p43
      %p46 = scmp.ne.s32.totalorder %s29, %s45
      %p47 = scmp.eq.s32.totalorder %s21, 0
      %p48 = por %p46, %p47
      %s50 = sadd.s32 %s49, 1
      %p53 = scmp.eq.s32.totalorder %s15, 1
      %p54 = scmp.ne.s32.totalorder %s49, %s51
      %p55 = scmp.eq.s32.totalorder %s15, 0
      %p56 = por %p54, %p55
      %p57 = scmp.ne.s32.totalorder %s49, %s51
      %p58 = scmp.eq.s32.totalorder %s20, 1
      %p59 = por %p57, %p58
      %p60 = scmp.ne.s32.totalorder %s51, %s52
      %p61 = scmp.eq.s32.totalorder %s20, 0
      %p62 = por %p60, %p61
      %p63 = scmp.ne.s32.totalorder %s51, %s52
      %p64 = scmp.eq.s32.totalorder %s21, 1
      %p65 = por %p63, %p64
      %p67 = scmp.ne.s32.totalorder %s52, %s66
      %p68 = scmp.eq.s32.totalorder %s21, 0
      %p69 = por %p67, %p68
      %s71 = sadd.s32 %s70, 1
      %p74 = scmp.eq.s32.totalorder %s15, 1
      %p75 = scmp.ne.s32.totalorder %s70, %s72
      %p76 = scmp.eq.s32.totalorder %s15, 0
      %p77 = por %p75, %p76
      %p78 = scmp.ne.s32.totalorder %s70, %s72
      %p79 = scmp.eq.s32.totalorder %s20, 1
      %p80 = por %p78, %p79
      %p81 = scmp.ne.s32.totalorder %s72, %s73
      %p82 = scmp.eq.s32.totalorder %s20, 0
      %p83 = por %p81, %p82
      %p84 = scmp.ne.s32.totalorder %s72, %s73
      %p85 = scmp.eq.s32.totalorder %s21, 1
      %p86 = por %p84, %p85
      %p88 = scmp.ne.s32.totalorder %s73, %s87
      %p89 = scmp.eq.s32.totalorder %s21, 0
      %p90 = por %p88, %p89
      %s92 = sadd.s32 %s91, 1
      %p95 = scmp.eq.s32.totalorder %s15, 1
      %p96 = scmp.ne.s32.totalorder %s91, %s93
      %p97 = scmp.eq.s32.totalorder %s15, 0
      %p98 = por %p96, %p97
      %p99 = scmp.ne.s32.totalorder %s91, %s93
      %p100 = scmp.eq.s32.totalorder %s20, 1
      %p101 = por %p99, %p100
      %p102 = scmp.ne.s32.totalorder %s93, %s94
      %p103 = scmp.eq.s32.totalorder %s20, 0
      %p104 = por %p102, %p103
      %p105 = scmp.ne.s32.totalorder %s93, %s94
      %p106 = scmp.eq.s32.totalorder %s21, 1
      %p107 = por %p105, %p106
      %p109 = scmp.ne.s32.totalorder %s94, %s108
      %p110 = scmp.eq.s32.totalorder %s21, 0
      %p111 = por %p109, %p110
      %s113 = sadd.s32 %s112, 1
      %p116 = scmp.eq.s32.totalorder %s15, 1
      %p117 = scmp.ne.s32.totalorder %s112, %s114
      %p118 = scmp.eq.s32.totalorder %s15, 0
      %p119 = por %p117, %p118
      %p120 = scmp.ne.s32.totalorder %s112, %s114
      %p121 = scmp.eq.s32.totalorder %s20, 1
      %p122 = por %p120, %p121
      %p123 = scmp.ne.s32.totalorder %s114, %s115
      %p124 = scmp.eq.s32.totalorder %s20, 0
      %p125 = por %p123, %p124
      %p126 = scmp.ne.s32.totalorder %s114, %s115
      %p127 = scmp.eq.s32.totalorder %s21, 1
      %p128 = por %p126, %p127
      %p130 = scmp.ne.s32.totalorder %s115, %s129
      %p131 = scmp.eq.s32.totalorder %s21, 0
      %p132 = por %p130, %p131
      %s134 = sadd.s32 %s133, 1
      %p137 = scmp.eq.s32.totalorder %s15, 1
      %p138 = scmp.ne.s32.totalorder %s133, %s135
      %p139 = scmp.eq.s32.totalorder %s15, 0
      %p140 = por %p138, %p139
      %p141 = scmp.ne.s32.totalorder %s133, %s135
      %p142 = scmp.eq.s32.totalorder %s20, 1
      %p143 = por %p141, %p142
      %p144 = scmp.ne.s32.totalorder %s135, %s136
      %p145 = scmp.eq.s32.totalorder %s20, 0
      %p146 = por %p144, %p145
      %p147 = scmp.ne.s32.totalorder %s135, %s136
      %p148 = scmp.eq.s32.totalorder %s21, 1
      %p149 = por %p147, %p148
      %p151 = scmp.ne.s32.totalorder %s136, %s150
      %p152 = scmp.eq.s32.totalorder %s21, 0
      %p153 = por %p151, %p152
      %s154 = ssub.s32 %s15, %s22
      %p155 = scmp.eq.s32.totalorder %s154, 0
      %s157 = sadd.s32 %s156, 1
      %s158 = scalar_select %p155, %s156, %s157
      %p161 = pneg %p155
      %p162 = scmp.eq.s32.totalorder %s15, 1
      %p163 = por %p161, %p162
      %p164 = scmp.ne.s32.totalorder %s156, %s159
      %p165 = scmp.eq.s32.totalorder %s15, 0
      %p166 = por %p164, %p165
      %p167 = scmp.ne.s32.totalorder %s156, %s159
      %p168 = scmp.eq.s32.totalorder %s20, 1
      %p169 = por %p167, %p168
      %p170 = scmp.ne.s32.totalorder %s159, %s160
      %p171 = scmp.eq.s32.totalorder %s20, 0
      %p172 = por %p170, %p171
      %p173 = scmp.ne.s32.totalorder %s159, %s160
      %p174 = scmp.eq.s32.totalorder %s21, 1
      %p175 = por %p173, %p174
      %p177 = scmp.ne.s32.totalorder %s160, %s176
      %p178 = scmp.eq.s32.totalorder %s21, 0
      %p179 = por %p177, %p178
      %p180 = scmp.le.s32.totalorder 1, %s15
      %p181 = scmp.lt.s32.totalorder %s15, 3
      %p182 = pnand %p180, %p181
      %p183 = pneg %p182
      // Predicated region
      $region9: #{basic_block_forward.1} parent=5 // pred_check
        _
      $region10: #{basic_block_forward.1} parent=5 // pred_check_branch
        %185 = sbr.rel (%p182) target = $region12
      $region11: #{basic_block_forward.1} parent=5 // pred_region
        %s186 = ssub.s32 %s15, 1
        // Predicated region
        $region13: #{basic_block_forward.1} parent=11 // pred_check
          %p187 = pneg %p62
        $region14: #{basic_block_forward.1} parent=11 // pred_check_branch
          %189 = sbr.rel (%p187) target = $region16
        $region15: #{basic_block_forward.1} parent=11 // pred_region
          _
        $region16: #{basic_block_forward.1} parent=11 // pred_fallthru
          _
        // Predicated region
        $region17: #{basic_block_forward.1} parent=11 // pred_check
          %p190 = pneg %p83
        $region18: #{basic_block_forward.1} parent=11 // pred_check_branch
          %192 = sbr.rel (%p190) target = $region20
        $region19: #{basic_block_forward.1} parent=11 // pred_region
          _
        $region20: #{basic_block_forward.1} parent=11 // pred_fallthru
          _
        // Predicated region
        $region21: #{basic_block_forward.1} parent=11 // pred_check
          %p193 = pneg %p104
        $region22: #{basic_block_forward.1} parent=11 // pred_check_branch
          %195 = sbr.rel (%p193) target = $region24
        $region23: #{basic_block_forward.1} parent=11 // pred_region
          _
        $region24: #{basic_block_forward.1} parent=11 // pred_fallthru
          _
        // Predicated region
        $region25: #{basic_block_forward.1} parent=11 // pred_check
          %p196 = pneg %p125
        $region26: #{basic_block_forward.1} parent=11 // pred_check_branch
          %198 = sbr.rel (%p196) target = $region28
        $region27: #{basic_block_forward.1} parent=11 // pred_region
          _
        $region28: #{basic_block_forward.1} parent=11 // pred_fallthru
          _
        // Predicated region
        $region29: #{basic_block_forward.1} parent=11 // pred_check
          %p199 = pneg %p146
        $region30: #{basic_block_forward.1} parent=11 // pred_check_branch
          %201 = sbr.rel (%p199) target = $region32
        $region31: #{basic_block_forward.1} parent=11 // pred_region
          _
        $region32: #{basic_block_forward.1} parent=11 // pred_fallthru
          _
      $region12: #{basic_block_forward.1} parent=5 // pred_fallthru
        _
      %p202 = scmp.lt.s32.totalorder %s15, 2
      // Predicated region
      $region33: #{basic_block_forward.1} parent=5 // pred_check
        %p203 = pneg %p202
      $region34: #{basic_block_forward.1} parent=5 // pred_check_branch
        %205 = sbr.rel (%p203) target = $region36
      $region35: #{basic_block_forward.1} parent=5 // pred_region
        // Predicated region
        $region37: #{basic_block_forward.1} parent=35 // pred_check
          %p206 = pneg %p35
        $region38: #{basic_block_forward.1} parent=35 // pred_check_branch
          %208 = sbr.rel (%p206) target = $region40
        $region39: #{basic_block_forward.1} parent=35 // pred_region
          %p209 = scmp.lt.s32.totalorder %s15, 1
          %s210 = scalar_select %p209, %s15, 1
          %s211 = smul.addr %s210, 32
          %s212 = smul.addr %s211, 8
          %s213 = scalar_lea.vmem %s0, %s212
        $region40: #{basic_block_forward.1} parent=35 // pred_fallthru
          _
      $region36: #{basic_block_forward.1} parent=5 // pred_fallthru
        _
      %p214 = scmp.le.s32.totalorder 1, %s15
      %p215 = scmp.lt.s32.totalorder %s15, 3
      %p216 = pnand %p214, %p215
      %p217 = pneg %p216
      // Predicated region
      $region41: #{basic_block_forward.1} parent=5 // pred_check
        _
      $region42: #{basic_block_forward.1} parent=5 // pred_check_branch
        %219 = sbr.rel (%p216) target = $region44
      $region43: #{basic_block_forward.1} parent=5 // pred_region
        %s220 = ssub.s32 %s15, 1
        %p221 = scmp.lt.s32.totalorder %s20, 1
        %s222 = scalar_select %p221, %s20, 1
        %s223 = smul.addr %s222, 32
        %s224 = smul.addr %s223, 8
        %s225 = scalar_lea.vmem %s0, %s224
        %p226 = pneg %p41
        %p227 = pneg %p38
        %p228 = pneg %p62
        %p229 = pneg %p59
        %p230 = pneg %p83
        %p231 = pneg %p80
        %p232 = pneg %p104
        %p233 = pneg %p101
        %p234 = pneg %p125
        %p235 = pneg %p122
        %p236 = pneg %p146
        %p237 = pneg %p143
        %p238 = pneg %p172
        %p239 = pneg %p169
        %s240 = sand.u32 %s159, 1
        %s241 = scalar_lea.sflag [#allocation3], %s240
        %s242 = sand.u32 %s159, 1
        %s243 = smul.addr %s242, 256
        %s244 = scalar_lea.vmem [#allocation2], %s243
        %p245 = scmp.lt.s32.totalorder %s20, 1
        %s246 = scalar_select %p245, %s20, 1
        %s247 = smul.addr %s246, 32
        %s248 = smul.addr %s247, 8
        %s249 = scalar_lea.vmem %s0, %s248
        %v251 = vld [vmem:[%s249] sm:$0xff]
        %v252 = vld [vmem:[%s249 + $0x8] sm:$0xff]
        %v253 = vld [vmem:[%s249 + $0x10] sm:$0xff]
        %v254 = vld [vmem:[%s249 + $0x18] sm:$0xff]
        %v255 = vld [vmem:[%s249 + $0x20] sm:$0xff]
        %v256 = vld [vmem:[%s249 + $0x28] sm:$0xff]
        %v257 = vld [vmem:[%s249 + $0x30] sm:$0xff]
        %v258 = vld [vmem:[%s249 + $0x38] sm:$0xff]
        %v259 = vld [vmem:[%s249 + $0x40] sm:$0xff]
        %v260 = vld [vmem:[%s249 + $0x48] sm:$0xff]
        %v261 = vld [vmem:[%s249 + $0x50] sm:$0xff]
        %v262 = vld [vmem:[%s249 + $0x58] sm:$0xff]
        %v263 = vld [vmem:[%s249 + $0x60] sm:$0xff]
        %v264 = vld [vmem:[%s249 + $0x68] sm:$0xff]
        %v265 = vld [vmem:[%s249 + $0x70] sm:$0xff]
        %v266 = vld [vmem:[%s249 + $0x78] sm:$0xff]
        %v267 = vld [vmem:[%s249 + $0x80] sm:$0xff]
        %v268 = vld [vmem:[%s249 + $0x88] sm:$0xff]
        %v269 = vld [vmem:[%s249 + $0x90] sm:$0xff]
        %v270 = vld [vmem:[%s249 + $0x98] sm:$0xff]
        %v271 = vld [vmem:[%s249 + $0xa0] sm:$0xff]
        %v272 = vld [vmem:[%s249 + $0xa8] sm:$0xff]
        %v273 = vld [vmem:[%s249 + $0xb0] sm:$0xff]
        %v274 = vld [vmem:[%s249 + $0xb8] sm:$0xff]
        %v275 = vld [vmem:[%s249 + $0xc0] sm:$0xff]
        %v276 = vld [vmem:[%s249 + $0xc8] sm:$0xff]
        %v277 = vld [vmem:[%s249 + $0xd0] sm:$0xff]
        %v278 = vld [vmem:[%s249 + $0xd8] sm:$0xff]
        %v279 = vld [vmem:[%s249 + $0xe0] sm:$0xff]
        %v280 = vld [vmem:[%s249 + $0xe8] sm:$0xff]
        %v281 = vld [vmem:[%s249 + $0xf0] sm:$0xff]
        %v282 = vld [vmem:[%s249 + $0xf8] sm:$0xff]
        %v283 = vpack.c.bf16 %v252, %v251
        %v284 = vpack.c.bf16 %v254, %v253
        %v285 = vpack.c.bf16 %v256, %v255
        %v286 = vpack.c.bf16 %v258, %v257
        %v287 = vpack.c.bf16 %v260, %v259
        %v288 = vpack.c.bf16 %v262, %v261
        %v289 = vpack.c.bf16 %v264, %v263
        %v290 = vpack.c.bf16 %v266, %v265
        %v291 = vpack.c.bf16 %v268, %v267
        %v292 = vpack.c.bf16 %v270, %v269
        %v293 = vpack.c.bf16 %v272, %v271
        %v294 = vpack.c.bf16 %v274, %v273
        %v295 = vpack.c.bf16 %v276, %v275
        %v296 = vpack.c.bf16 %v278, %v277
        %v297 = vpack.c.bf16 %v280, %v279
        %v298 = vpack.c.bf16 %v282, %v281
        %v300 = vshrl.u32 0, 16
        %v302 = vrot.slane %v300, 7
        %v303 = vshll.u32 0, 16
        %v305 = vor.u32 %v302, %v303
        %v307 = vshrl.u32 %v283, 16
        %v309 = vrot.slane %v307, 7
        %v310 = vshll.u32 %v283, 16
        %v312 = vor.u32 %v309, %v310
        %v314 = vshrl.u32 %v284, 16
        %v316 = vrot.slane %v314, 7
        %v317 = vshll.u32 %v284, 16
        %v319 = vor.u32 %v316, %v317
        %v321 = vshrl.u32 %v285, 16
        %v323 = vrot.slane %v321, 7
        %v324 = vshll.u32 %v285, 16
        %v326 = vor.u32 %v323, %v324
        %v328 = vshrl.u32 %v286, 16
        %v330 = vrot.slane %v328, 7
        %v331 = vshll.u32 %v286, 16
        %v333 = vor.u32 %v330, %v331
        %v335 = vshrl.u32 %v287, 16
        %v337 = vrot.slane %v335, 7
        %v338 = vshll.u32 %v287, 16
        %v340 = vor.u32 %v337, %v338
        %v342 = vshrl.u32 %v288, 16
        %v344 = vrot.slane %v342, 7
        %v345 = vshll.u32 %v288, 16
        %v347 = vor.u32 %v344, %v345
        %v349 = vshrl.u32 %v289, 16
        %v351 = vrot.slane %v349, 7
        %v352 = vshll.u32 %v289, 16
        %v354 = vor.u32 %v351, %v352
        %v356 = vshrl.u32 %v290, 16
        %v358 = vrot.slane %v356, 7
        %v359 = vshll.u32 %v290, 16
        %v361 = vor.u32 %v358, %v359
        %v363 = vshrl.u32 %v291, 16
        %v365 = vrot.slane %v363, 7
        %v366 = vshll.u32 %v291, 16
        %v368 = vor.u32 %v365, %v366
        %v370 = vshrl.u32 %v292, 16
        %v372 = vrot.slane %v370, 7
        %v373 = vshll.u32 %v292, 16
        %v375 = vor.u32 %v372, %v373
        %v377 = vshrl.u32 %v293, 16
        %v379 = vrot.slane %v377, 7
        %v380 = vshll.u32 %v293, 16
        %v382 = vor.u32 %v379, %v380
        %v384 = vshrl.u32 %v294, 16
        %v386 = vrot.slane %v384, 7
        %v387 = vshll.u32 %v294, 16
        %v389 = vor.u32 %v386, %v387
        %v391 = vshrl.u32 %v295, 16
        %v393 = vrot.slane %v391, 7
        %v394 = vshll.u32 %v295, 16
        %v396 = vor.u32 %v393, %v394
        %v398 = vshrl.u32 %v296, 16
        %v400 = vrot.slane %v398, 7
        %v401 = vshll.u32 %v296, 16
        %v403 = vor.u32 %v400, %v401
        %v405 = vshrl.u32 %v297, 16
        %v407 = vrot.slane %v405, 7
        %v408 = vshll.u32 %v297, 16
        %v410 = vor.u32 %v407, %v408
        %v412 = vshrl.u32 %v298, 16
        %v414 = vrot.slane %v412, 7
        %v415 = vshll.u32 %v298, 16
        %v417 = vor.u32 %v414, %v415
        %vm452 = vcmask 1040384
        %vm453 = vsmask.f32 256
        %vm454 = vmand %vm452, %vm453
        %v455 = vsel %vm454, 0, %v305
        %v456 = vsel %vm454, 0, %v312
        %v457 = vsel %vm454, 0, %v319
        %v458 = vsel %vm454, 0, %v326
        %v459 = vsel %vm454, 0, %v333
        %v460 = vsel %vm454, 0, %v340
        %v461 = vsel %vm454, 0, %v347
        %v462 = vsel %vm454, 0, %v354
        %v463 = vsel %vm454, 0, %v361
        %v464 = vsel %vm454, 0, %v368
        %v465 = vsel %vm454, 0, %v375
        %v466 = vsel %vm454, 0, %v382
        %v467 = vsel %vm454, 0, %v389
        %v468 = vsel %vm454, 0, %v396
        %v469 = vsel %vm454, 0, %v403
        %v470 = vsel %vm454, 0, %v410
        %v471 = vsel %vm454, 0, %v417
        %v472 = vsel %vm454, %v302, 0
        %v473 = vsel %vm454, %v309, 0
        %v474 = vsel %vm454, %v316, 0
        %v475 = vsel %vm454, %v323, 0
        %v476 = vsel %vm454, %v330, 0
        %v477 = vsel %vm454, %v337, 0
        %v478 = vsel %vm454, %v344, 0
        %v479 = vsel %vm454, %v351, 0
        %v480 = vsel %vm454, %v358, 0
        %v481 = vsel %vm454, %v365, 0
        %v482 = vsel %vm454, %v372, 0
        %v483 = vsel %vm454, %v379, 0
        %v484 = vsel %vm454, %v386, 0
        %v485 = vsel %vm454, %v393, 0
        %v486 = vsel %vm454, %v400, 0
        %v487 = vsel %vm454, %v407, 0
        %v488 = vsel %vm454, %v414, 0
        %vm489 = vsmask.f32 7424
        %v491 = vshrl.u32 %v455, 16
        %v493 = vshll.u32 %v455, 16
        %v495 = vrot.slane %v493, 1
        %v496 = vor.u32 %v491, %v495
        %v498 = vshll.u32 %v472, 16
        %v500 = vrot.slane %v498, 1
        %v501 = vsel %vm489, %v496, %v500
        %v503 = vshrl.u32 %v456, 16
        %v505 = vshll.u32 %v456, 16
        %v507 = vrot.slane %v505, 1
        %v508 = vor.u32 %v503, %v507
        %v510 = vshll.u32 %v473, 16
        %v512 = vrot.slane %v510, 1
        %v513 = vsel %vm489, %v508, %v512
        %v515 = vshrl.u32 %v457, 16
        %v517 = vshll.u32 %v457, 16
        %v519 = vrot.slane %v517, 1
        %v520 = vor.u32 %v515, %v519
        %v522 = vshll.u32 %v474, 16
        %v524 = vrot.slane %v522, 1
        %v525 = vsel %vm489, %v520, %v524
        %v527 = vshrl.u32 %v458, 16
        %v529 = vshll.u32 %v458, 16
        %v531 = vrot.slane %v529, 1
        %v532 = vor.u32 %v527, %v531
        %v534 = vshll.u32 %v475, 16
        %v536 = vrot.slane %v534, 1
        %v537 = vsel %vm489, %v532, %v536
        %v539 = vshrl.u32 %v459, 16
        %v541 = vshll.u32 %v459, 16
        %v543 = vrot.slane %v541, 1
        %v544 = vor.u32 %v539, %v543
        %v546 = vshll.u32 %v476, 16
        %v548 = vrot.slane %v546, 1
        %v549 = vsel %vm489, %v544, %v548
        %v551 = vshrl.u32 %v460, 16
        %v553 = vshll.u32 %v460, 16
        %v555 = vrot.slane %v553, 1
        %v556 = vor.u32 %v551, %v555
        %v558 = vshll.u32 %v477, 16
        %v560 = vrot.slane %v558, 1
        %v561 = vsel %vm489, %v556, %v560
        %v563 = vshrl.u32 %v461, 16
        %v565 = vshll.u32 %v461, 16
        %v567 = vrot.slane %v565, 1
        %v568 = vor.u32 %v563, %v567
        %v570 = vshll.u32 %v478, 16
        %v572 = vrot.slane %v570, 1
        %v573 = vsel %vm489, %v568, %v572
        %v575 = vshrl.u32 %v462, 16
        %v577 = vshll.u32 %v462, 16
        %v579 = vrot.slane %v577, 1
        %v580 = vor.u32 %v575, %v579
        %v582 = vshll.u32 %v479, 16
        %v584 = vrot.slane %v582, 1
        %v585 = vsel %vm489, %v580, %v584
        %v587 = vshrl.u32 %v463, 16
        %v589 = vshll.u32 %v463, 16
        %v591 = vrot.slane %v589, 1
        %v592 = vor.u32 %v587, %v591
        %v594 = vshll.u32 %v480, 16
        %v596 = vrot.slane %v594, 1
        %v597 = vsel %vm489, %v592, %v596
        %v599 = vshrl.u32 %v464, 16
        %v601 = vshll.u32 %v464, 16
        %v603 = vrot.slane %v601, 1
        %v604 = vor.u32 %v599, %v603
        %v606 = vshll.u32 %v481, 16
        %v608 = vrot.slane %v606, 1
        %v609 = vsel %vm489, %v604, %v608
        %v611 = vshrl.u32 %v465, 16
        %v613 = vshll.u32 %v465, 16
        %v615 = vrot.slane %v613, 1
        %v616 = vor.u32 %v611, %v615
        %v618 = vshll.u32 %v482, 16
        %v620 = vrot.slane %v618, 1
        %v621 = vsel %vm489, %v616, %v620
        %v623 = vshrl.u32 %v466, 16
        %v625 = vshll.u32 %v466, 16
        %v627 = vrot.slane %v625, 1
        %v628 = vor.u32 %v623, %v627
        %v630 = vshll.u32 %v483, 16
        %v632 = vrot.slane %v630, 1
        %v633 = vsel %vm489, %v628, %v632
        %v635 = vshrl.u32 %v467, 16
        %v637 = vshll.u32 %v467, 16
        %v639 = vrot.slane %v637, 1
        %v640 = vor.u32 %v635, %v639
        %v642 = vshll.u32 %v484, 16
        %v644 = vrot.slane %v642, 1
        %v645 = vsel %vm489, %v640, %v644
        %v647 = vshrl.u32 %v468, 16
        %v649 = vshll.u32 %v468, 16
        %v651 = vrot.slane %v649, 1
        %v652 = vor.u32 %v647, %v651
        %v654 = vshll.u32 %v485, 16
        %v656 = vrot.slane %v654, 1
        %v657 = vsel %vm489, %v652, %v656
        %v659 = vshrl.u32 %v469, 16
        %v661 = vshll.u32 %v469, 16
        %v663 = vrot.slane %v661, 1
        %v664 = vor.u32 %v659, %v663
        %v666 = vshll.u32 %v486, 16
        %v668 = vrot.slane %v666, 1
        %v669 = vsel %vm489, %v664, %v668
        %v671 = vshrl.u32 %v470, 16
        %v673 = vshll.u32 %v470, 16
        %v675 = vrot.slane %v673, 1
        %v676 = vor.u32 %v671, %v675
        %v678 = vshll.u32 %v487, 16
        %v680 = vrot.slane %v678, 1
        %v681 = vsel %vm489, %v676, %v680
        %vm730 = vcmask 1046528
        %v731 = vrot.slane %v455, 1
        %v732 = vrot.slane %v472, 1
        %v733 = vsel %vm730, %v731, %v732
        %v734 = vrot.slane %v456, 1
        %v735 = vrot.slane %v473, 1
        %v736 = vsel %vm730, %v734, %v735
        %v737 = vrot.slane %v457, 1
        %v738 = vrot.slane %v474, 1
        %v739 = vsel %vm730, %v737, %v738
        %v740 = vrot.slane %v458, 1
        %v741 = vrot.slane %v475, 1
        %v742 = vsel %vm730, %v740, %v741
        %v743 = vrot.slane %v459, 1
        %v744 = vrot.slane %v476, 1
        %v745 = vsel %vm730, %v743, %v744
        %v746 = vrot.slane %v460, 1
        %v747 = vrot.slane %v477, 1
        %v748 = vsel %vm730, %v746, %v747
        %v749 = vrot.slane %v461, 1
        %v750 = vrot.slane %v478, 1
        %v751 = vsel %vm730, %v749, %v750
        %v752 = vrot.slane %v462, 1
        %v753 = vrot.slane %v479, 1
        %v754 = vsel %vm730, %v752, %v753
        %v755 = vrot.slane %v463, 1
        %v756 = vrot.slane %v480, 1
        %v757 = vsel %vm730, %v755, %v756
        %v758 = vrot.slane %v464, 1
        %v759 = vrot.slane %v481, 1
        %v760 = vsel %vm730, %v758, %v759
        %v761 = vrot.slane %v465, 1
        %v762 = vrot.slane %v482, 1
        %v763 = vsel %vm730, %v761, %v762
        %v764 = vrot.slane %v466, 1
        %v765 = vrot.slane %v483, 1
        %v766 = vsel %vm730, %v764, %v765
        %v767 = vrot.slane %v467, 1
        %v768 = vrot.slane %v484, 1
        %v769 = vsel %vm730, %v767, %v768
        %v770 = vrot.slane %v468, 1
        %v771 = vrot.slane %v485, 1
        %v772 = vsel %vm730, %v770, %v771
        %v773 = vrot.slane %v469, 1
        %v774 = vrot.slane %v486, 1
        %v775 = vsel %vm730, %v773, %v774
        %v776 = vrot.slane %v470, 1
        %v777 = vrot.slane %v487, 1
        %v778 = vsel %vm730, %v776, %v777
        %v796 = vshrl.u32 %v471, 16
        %v798 = vshll.u32 %v471, 16
        %v800 = vrot.slane %v798, 1
        %v801 = vor.u32 %v796, %v800
        %v803 = vshll.u32 %v488, 16
        %v805 = vrot.slane %v803, 1
        %v806 = vsel %vm489, %v801, %v805
        %v810 = vrot.slane %v471, 1
        %v811 = vrot.slane %v488, 1
        %v812 = vsel %vm730, %v810, %v811
        %v814 = vld [vmem:[%s1] sm:$0xf]
        %v815 = vld [vmem:[%s1 + $0x4] sm:$0xf]
        %v816 = vld [vmem:[%s1 + $0x8] sm:$0xf]
        %v817 = vld [vmem:[%s1 + $0xc] sm:$0xf]
        %v818 = vld [vmem:[%s1 + $0x10] sm:$0xf]
        %v819 = vld [vmem:[%s1 + $0x14] sm:$0xf]
        %v820 = vld [vmem:[%s1 + $0x18] sm:$0xf]
        %v821 = vld [vmem:[%s1 + $0x1c] sm:$0xf]
        %v822 = vld [vmem:[%s1 + $0x20] sm:$0xf]
        %v823 = vld [vmem:[%s1 + $0x24] sm:$0xf]
        %v824 = vld [vmem:[%s1 + $0x28] sm:$0xf]
        %v825 = vld [vmem:[%s1 + $0x2c] sm:$0xf]
        %v826 = vld [vmem:[%s1 + $0x30] sm:$0xf]
        %v827 = vld [vmem:[%s1 + $0x34] sm:$0xf]
        %v828 = vld [vmem:[%s1 + $0x38] sm:$0xf]
        %v829 = vld [vmem:[%s1 + $0x3c] sm:$0xf]
        %v830 = vld [vmem:[%s1 + $0x40] sm:$0xf]
        %v831 = vld [vmem:[%s1 + $0x44] sm:$0xf]
        %v832 = vld [vmem:[%s1 + $0x48] sm:$0xf]
        %v833 = vld [vmem:[%s1 + $0x4c] sm:$0xf]
        %v834 = vld [vmem:[%s1 + $0x50] sm:$0xf]
        %v835 = vld [vmem:[%s1 + $0x54] sm:$0xf]
        %v836 = vld [vmem:[%s1 + $0x58] sm:$0xf]
        %v837 = vld [vmem:[%s1 + $0x5c] sm:$0xf]
        %v838 = vld [vmem:[%s1 + $0x60] sm:$0xf]
        %v839 = vld [vmem:[%s1 + $0x64] sm:$0xf]
        %v840 = vld [vmem:[%s1 + $0x68] sm:$0xf]
        %v841 = vld [vmem:[%s1 + $0x6c] sm:$0xf]
        %v842 = vld [vmem:[%s1 + $0x70] sm:$0xf]
        %v843 = vld [vmem:[%s1 + $0x74] sm:$0xf]
        %v844 = vld [vmem:[%s1 + $0x78] sm:$0xf]
        %v845 = vld [vmem:[%s1 + $0x7c] sm:$0xf]
        %v846 = vld [vmem:[%s1 + $0x80] sm:$0xf]
        %v847 = vld [vmem:[%s1 + $0x84] sm:$0xf]
        %v848 = vld [vmem:[%s1 + $0x88] sm:$0xf]
        %v849 = vld [vmem:[%s1 + $0x8c] sm:$0xf]
        %v850 = vld [vmem:[%s1 + $0x90] sm:$0xf]
        %v851 = vld [vmem:[%s1 + $0x94] sm:$0xf]
        %v852 = vld [vmem:[%s1 + $0x98] sm:$0xf]
        %v853 = vld [vmem:[%s1 + $0x9c] sm:$0xf]
        %v854 = vld [vmem:[%s1 + $0xa0] sm:$0xf]
        %v855 = vld [vmem:[%s1 + $0xa4] sm:$0xf]
        %v856 = vld [vmem:[%s1 + $0xa8] sm:$0xf]
        %v857 = vld [vmem:[%s1 + $0xac] sm:$0xf]
        %v858 = vld [vmem:[%s1 + $0xb0] sm:$0xf]
        %v859 = vld [vmem:[%s1 + $0xb4] sm:$0xf]
        %v860 = vld [vmem:[%s1 + $0xb8] sm:$0xf]
        %v861 = vld [vmem:[%s1 + $0xbc] sm:$0xf]
        %v862 = vld [vmem:[%s1 + $0xc0] sm:$0xf]
        %v863 = vld [vmem:[%s1 + $0xc4] sm:$0xf]
        %v864 = vld [vmem:[%s1 + $0xc8] sm:$0xf]
        %v865 = vld [vmem:[%s1 + $0xcc] sm:$0xf]
        %v866 = vld [vmem:[%s1 + $0xd0] sm:$0xf]
        %v867 = vld [vmem:[%s1 + $0xd4] sm:$0xf]
        %v868 = vld [vmem:[%s1 + $0xd8] sm:$0xf]
        %v869 = vld [vmem:[%s1 + $0xdc] sm:$0xf]
        %v870 = vld [vmem:[%s1 + $0xe0] sm:$0xf]
        %v871 = vld [vmem:[%s1 + $0xe4] sm:$0xf]
        %v872 = vld [vmem:[%s1 + $0xe8] sm:$0xf]
        %v873 = vld [vmem:[%s1 + $0xec] sm:$0xf]
        %v874 = vld [vmem:[%s1 + $0xf0] sm:$0xf]
        %v875 = vld [vmem:[%s1 + $0xf4] sm:$0xf]
        %v876 = vld [vmem:[%s1 + $0xf8] sm:$0xf]
        %v877 = vld [vmem:[%s1 + $0xfc] sm:$0xf]
        %v878 = vld [vmem:[%s1 + $0x100] sm:$0xf]
        %v879 = vld [vmem:[%s1 + $0x104] sm:$0xf]
        %v880 = vld [vmem:[%s1 + $0x108] sm:$0xf]
        %v881 = vld [vmem:[%s1 + $0x10c] sm:$0xf]
        %v882 = vld [vmem:[%s1 + $0x110] sm:$0xf]
        %v883 = vld [vmem:[%s1 + $0x114] sm:$0xf]
        %v884 = vld [vmem:[%s1 + $0x118] sm:$0xf]
        %v885 = vld [vmem:[%s1 + $0x11c] sm:$0xf]
        %v886 = vld [vmem:[%s1 + $0x120] sm:$0xf]
        %v887 = vld [vmem:[%s1 + $0x124] sm:$0xf]
        %v888 = vld [vmem:[%s1 + $0x128] sm:$0xf]
        %v889 = vld [vmem:[%s1 + $0x12c] sm:$0xf]
        %v890 = vld [vmem:[%s1 + $0x130] sm:$0xf]
        %v891 = vld [vmem:[%s1 + $0x134] sm:$0xf]
        %v892 = vld [vmem:[%s1 + $0x138] sm:$0xf]
        %v893 = vld [vmem:[%s1 + $0x13c] sm:$0xf]
        %v894 = vld [vmem:[%s1 + $0x140] sm:$0xf]
        %v895 = vld [vmem:[%s1 + $0x144] sm:$0xf]
        %v896 = vld [vmem:[%s1 + $0x148] sm:$0xf]
        %v897 = vld [vmem:[%s1 + $0x14c] sm:$0xf]
        %v898 = vld [vmem:[%s1 + $0x150] sm:$0xf]
        %v899 = vld [vmem:[%s1 + $0x154] sm:$0xf]
        %v900 = vld [vmem:[%s1 + $0x158] sm:$0xf]
        %v901 = vld [vmem:[%s1 + $0x15c] sm:$0xf]
        %v902 = vld [vmem:[%s1 + $0x160] sm:$0xf]
        %v903 = vld [vmem:[%s1 + $0x164] sm:$0xf]
        %v904 = vld [vmem:[%s1 + $0x168] sm:$0xf]
        %v905 = vld [vmem:[%s1 + $0x16c] sm:$0xf]
        %v906 = vld [vmem:[%s1 + $0x170] sm:$0xf]
        %v907 = vld [vmem:[%s1 + $0x174] sm:$0xf]
        %v908 = vld [vmem:[%s1 + $0x178] sm:$0xf]
        %v909 = vld [vmem:[%s1 + $0x17c] sm:$0xf]
        %v910 = vld [vmem:[%s1 + $0x180] sm:$0xf]
        %v911 = vld [vmem:[%s1 + $0x184] sm:$0xf]
        %v912 = vld [vmem:[%s1 + $0x188] sm:$0xf]
        %v913 = vld [vmem:[%s1 + $0x18c] sm:$0xf]
        %v914 = vld [vmem:[%s1 + $0x190] sm:$0xf]
        %v915 = vld [vmem:[%s1 + $0x194] sm:$0xf]
        %v916 = vld [vmem:[%s1 + $0x198] sm:$0xf]
        %v917 = vld [vmem:[%s1 + $0x19c] sm:$0xf]
        %v918 = vld [vmem:[%s1 + $0x1a0] sm:$0xf]
        %v919 = vld [vmem:[%s1 + $0x1a4] sm:$0xf]
        %v920 = vld [vmem:[%s1 + $0x1a8] sm:$0xf]
        %v921 = vld [vmem:[%s1 + $0x1ac] sm:$0xf]
        %v922 = vld [vmem:[%s1 + $0x1b0] sm:$0xf]
        %v923 = vld [vmem:[%s1 + $0x1b4] sm:$0xf]
        %v924 = vld [vmem:[%s1 + $0x1b8] sm:$0xf]
        %v925 = vld [vmem:[%s1 + $0x1bc] sm:$0xf]
        %v926 = vld [vmem:[%s1 + $0x1c0] sm:$0xf]
        %v927 = vld [vmem:[%s1 + $0x1c4] sm:$0xf]
        %v928 = vld [vmem:[%s1 + $0x1c8] sm:$0xf]
        %v929 = vld [vmem:[%s1 + $0x1cc] sm:$0xf]
        %v930 = vld [vmem:[%s1 + $0x1d0] sm:$0xf]
        %v931 = vld [vmem:[%s1 + $0x1d4] sm:$0xf]
        %v932 = vld [vmem:[%s1 + $0x1d8] sm:$0xf]
        %v933 = vld [vmem:[%s1 + $0x1dc] sm:$0xf]
        %v934 = vld [vmem:[%s1 + $0x1e0] sm:$0xf]
        %v935 = vld [vmem:[%s1 + $0x1e4] sm:$0xf]
        %v936 = vld [vmem:[%s1 + $0x1e8] sm:$0xf]
        %v937 = vld [vmem:[%s1 + $0x1ec] sm:$0xf]
        %v938 = vld [vmem:[%s1 + $0x1f0] sm:$0xf]
        %v939 = vld [vmem:[%s1 + $0x1f4] sm:$0xf]
        %v940 = vld [vmem:[%s1 + $0x1f8] sm:$0xf]
        %v941 = vld [vmem:[%s1 + $0x1fc] sm:$0xf]
        %v942 = vld [vmem:[%s1 + $0x200] sm:$0xf]
        %v943 = vld [vmem:[%s1 + $0x204] sm:$0xf]
        %v944 = vld [vmem:[%s1 + $0x208] sm:$0xf]
        %v945 = vld [vmem:[%s1 + $0x20c] sm:$0xf]
        %v946 = vld [vmem:[%s1 + $0x210] sm:$0xf]
        %v947 = vld [vmem:[%s1 + $0x214] sm:$0xf]
        %v948 = vld [vmem:[%s1 + $0x218] sm:$0xf]
        %v949 = vld [vmem:[%s1 + $0x21c] sm:$0xf]
        %v950 = vld [vmem:[%s1 + $0x220] sm:$0xf]
        %v951 = vld [vmem:[%s1 + $0x224] sm:$0xf]
        %v952 = vld [vmem:[%s1 + $0x228] sm:$0xf]
        %v953 = vld [vmem:[%s1 + $0x22c] sm:$0xf]
        %v954 = vld [vmem:[%s1 + $0x230] sm:$0xf]
        %v955 = vld [vmem:[%s1 + $0x234] sm:$0xf]
        %v956 = vld [vmem:[%s1 + $0x238] sm:$0xf]
        %v957 = vld [vmem:[%s1 + $0x23c] sm:$0xf]
        %v958 = vld [vmem:[%s2] sm:$0x1]
        %v960 = vlaneseq
        %v961 = vshrl.u32 %v960, 7
        %v962 = vsub.s32 0, %v961
        %v963 = vrot.slane %v958, %v962
        %v1109 = vunpack.c.l.b16 %v814
        %v1110 = vunpack.c.l.b16 %v815
        %v1111 = vunpack.c.l.b16 %v816
        %v1112 = vunpack.c.l.b16 %v817
        %v1113 = vunpack.c.l.b16 %v818
        %v1114 = vunpack.c.l.b16 %v819
        %v1115 = vunpack.c.l.b16 %v820
        %v1116 = vunpack.c.l.b16 %v821
        %v1117 = vunpack.c.l.b16 %v822
        %v1118 = vunpack.c.l.b16 %v823
        %v1119 = vunpack.c.l.b16 %v824
        %v1120 = vunpack.c.l.b16 %v825
        %v1121 = vunpack.c.l.b16 %v826
        %v1122 = vunpack.c.l.b16 %v827
        %v1123 = vunpack.c.l.b16 %v828
        %v1124 = vunpack.c.l.b16 %v829
        %v1125 = vunpack.c.l.b16 %v830
        %v1126 = vunpack.c.l.b16 %v831
        %v1127 = vunpack.c.l.b16 %v832
        %v1128 = vunpack.c.l.b16 %v833
        %v1129 = vunpack.c.l.b16 %v834
        %v1130 = vunpack.c.l.b16 %v835
        %v1131 = vunpack.c.l.b16 %v836
        %v1132 = vunpack.c.l.b16 %v837
        %v1133 = vunpack.c.l.b16 %v838
        %v1134 = vunpack.c.l.b16 %v839
        %v1135 = vunpack.c.l.b16 %v840
        %v1136 = vunpack.c.l.b16 %v841
        %v1137 = vunpack.c.l.b16 %v842
        %v1138 = vunpack.c.l.b16 %v843
        %v1139 = vunpack.c.l.b16 %v844
        %v1140 = vunpack.c.l.b16 %v845
        %v1141 = vunpack.c.l.b16 %v846
        %v1142 = vunpack.c.l.b16 %v847
        %v1143 = vunpack.c.l.b16 %v848
        %v1144 = vunpack.c.l.b16 %v849
        %v1145 = vunpack.c.l.b16 %v850
        %v1146 = vunpack.c.l.b16 %v851
        %v1147 = vunpack.c.l.b16 %v852
        %v1148 = vunpack.c.l.b16 %v853
        %v1149 = vunpack.c.l.b16 %v854
        %v1150 = vunpack.c.l.b16 %v855
        %v1151 = vunpack.c.l.b16 %v856
        %v1152 = vunpack.c.l.b16 %v857
        %v1153 = vunpack.c.l.b16 %v858
        %v1154 = vunpack.c.l.b16 %v859
        %v1155 = vunpack.c.l.b16 %v860
        %v1156 = vunpack.c.l.b16 %v861
        %v1157 = vunpack.c.l.b16 %v862
        %v1158 = vunpack.c.l.b16 %v863
        %v1159 = vunpack.c.l.b16 %v864
        %v1160 = vunpack.c.l.b16 %v865
        %v1161 = vunpack.c.l.b16 %v866
        %v1162 = vunpack.c.l.b16 %v867
        %v1163 = vunpack.c.l.b16 %v868
        %v1164 = vunpack.c.l.b16 %v869
        %v1165 = vunpack.c.l.b16 %v870
        %v1166 = vunpack.c.l.b16 %v871
        %v1167 = vunpack.c.l.b16 %v872
        %v1168 = vunpack.c.l.b16 %v873
        %v1169 = vunpack.c.l.b16 %v874
        %v1170 = vunpack.c.l.b16 %v875
        %v1171 = vunpack.c.l.b16 %v876
        %v1172 = vunpack.c.l.b16 %v877
        %v1173 = vunpack.c.l.b16 %v878
        %v1174 = vunpack.c.l.b16 %v879
        %v1175 = vunpack.c.l.b16 %v880
        %v1176 = vunpack.c.l.b16 %v881
        %v1177 = vunpack.c.l.b16 %v882
        %v1178 = vunpack.c.l.b16 %v883
        %v1179 = vunpack.c.l.b16 %v884
        %v1180 = vunpack.c.l.b16 %v885
        %v1181 = vunpack.c.l.b16 %v886
        %v1182 = vunpack.c.l.b16 %v887
        %v1183 = vunpack.c.l.b16 %v888
        %v1184 = vunpack.c.l.b16 %v889
        %v1185 = vunpack.c.l.b16 %v890
        %v1186 = vunpack.c.l.b16 %v891
        %v1187 = vunpack.c.l.b16 %v892
        %v1188 = vunpack.c.l.b16 %v893
        %v1189 = vunpack.c.l.b16 %v894
        %v1190 = vunpack.c.l.b16 %v895
        %v1191 = vunpack.c.l.b16 %v896
        %v1192 = vunpack.c.l.b16 %v897
        %v1193 = vunpack.c.l.b16 %v898
        %v1194 = vunpack.c.l.b16 %v899
        %v1195 = vunpack.c.l.b16 %v900
        %v1196 = vunpack.c.l.b16 %v901
        %v1197 = vunpack.c.l.b16 %v902
        %v1198 = vunpack.c.l.b16 %v903
        %v1199 = vunpack.c.l.b16 %v904
        %v1200 = vunpack.c.l.b16 %v905
        %v1201 = vunpack.c.l.b16 %v906
        %v1202 = vunpack.c.l.b16 %v907
        %v1203 = vunpack.c.l.b16 %v908
        %v1204 = vunpack.c.l.b16 %v909
        %v1205 = vunpack.c.l.b16 %v910
        %v1206 = vunpack.c.l.b16 %v911
        %v1207 = vunpack.c.l.b16 %v912
        %v1208 = vunpack.c.l.b16 %v913
        %v1209 = vunpack.c.l.b16 %v914
        %v1210 = vunpack.c.l.b16 %v915
        %v1211 = vunpack.c.l.b16 %v916
        %v1212 = vunpack.c.l.b16 %v917
        %v1213 = vunpack.c.l.b16 %v918
        %v1214 = vunpack.c.l.b16 %v919
        %v1215 = vunpack.c.l.b16 %v920
        %v1216 = vunpack.c.l.b16 %v921
        %v1217 = vunpack.c.l.b16 %v922
        %v1218 = vunpack.c.l.b16 %v923
        %v1219 = vunpack.c.l.b16 %v924
        %v1220 = vunpack.c.l.b16 %v925
        %v1221 = vunpack.c.l.b16 %v926
        %v1222 = vunpack.c.l.b16 %v927
        %v1223 = vunpack.c.l.b16 %v928
        %v1224 = vunpack.c.l.b16 %v929
        %v1225 = vunpack.c.l.b16 %v930
        %v1226 = vunpack.c.l.b16 %v931
        %v1227 = vunpack.c.l.b16 %v932
        %v1228 = vunpack.c.l.b16 %v933
        %v1229 = vunpack.c.l.b16 %v934
        %v1230 = vunpack.c.l.b16 %v935
        %v1231 = vunpack.c.l.b16 %v936
        %v1232 = vunpack.c.l.b16 %v937
        %v1233 = vunpack.c.l.b16 %v938
        %v1234 = vunpack.c.l.b16 %v939
        %v1235 = vunpack.c.l.b16 %v940
        %v1236 = vunpack.c.l.b16 %v941
        %v1237 = vunpack.c.l.b16 %v942
        %v1238 = vunpack.c.l.b16 %v943
        %v1239 = vunpack.c.l.b16 %v944
        %v1240 = vunpack.c.l.b16 %v945
        %v1241 = vunpack.c.l.b16 %v946
        %v1242 = vunpack.c.l.b16 %v947
        %v1243 = vunpack.c.l.b16 %v948
        %v1244 = vunpack.c.l.b16 %v949
        %v1245 = vunpack.c.l.b16 %v950
        %v1246 = vunpack.c.l.b16 %v951
        %v1247 = vunpack.c.l.b16 %v952
        %v1248 = vunpack.c.l.b16 %v953
        %v1249 = vunpack.c.l.b16 %v954
        %v1250 = vunpack.c.l.b16 %v955
        %v1251 = vunpack.c.l.b16 %v956
        %v1252 = vunpack.c.l.b16 %v957
        %v1253 = vpack.c.b16 %v1110, %v1109
        %v1254 = vpack.c.b16 %v1112, %v1111
        %v1255 = vpack.c.b16 %v1114, %v1113
        %v1256 = vpack.c.b16 %v1116, %v1115
        %v1257 = vpack.c.b16 %v1118, %v1117
        %v1258 = vpack.c.b16 %v1120, %v1119
        %v1259 = vpack.c.b16 %v1122, %v1121
        %v1260 = vpack.c.b16 %v1124, %v1123
        %v1261 = vpack.c.b16 %v1126, %v1125
        %v1262 = vpack.c.b16 %v1128, %v1127
        %v1263 = vpack.c.b16 %v1130, %v1129
        %v1264 = vpack.c.b16 %v1132, %v1131
        %v1265 = vpack.c.b16 %v1134, %v1133
        %v1266 = vpack.c.b16 %v1136, %v1135
        %v1267 = vpack.c.b16 %v1138, %v1137
        %v1268 = vpack.c.b16 %v1140, %v1139
        %v1269 = vpack.c.b16 %v1142, %v1141
        %v1270 = vpack.c.b16 %v1144, %v1143
        %v1271 = vpack.c.b16 %v1146, %v1145
        %v1272 = vpack.c.b16 %v1148, %v1147
        %v1273 = vpack.c.b16 %v1150, %v1149
        %v1274 = vpack.c.b16 %v1152, %v1151
        %v1275 = vpack.c.b16 %v1154, %v1153
        %v1276 = vpack.c.b16 %v1156, %v1155
        %v1277 = vpack.c.b16 %v1158, %v1157
        %v1278 = vpack.c.b16 %v1160, %v1159
        %v1279 = vpack.c.b16 %v1162, %v1161
        %v1280 = vpack.c.b16 %v1164, %v1163
        %v1281 = vpack.c.b16 %v1166, %v1165
        %v1282 = vpack.c.b16 %v1168, %v1167
        %v1283 = vpack.c.b16 %v1170, %v1169
        %v1284 = vpack.c.b16 %v1172, %v1171
        %v1285 = vpack.c.b16 %v1174, %v1173
        %v1286 = vpack.c.b16 %v1176, %v1175
        %v1287 = vpack.c.b16 %v1178, %v1177
        %v1288 = vpack.c.b16 %v1180, %v1179
        %v1289 = vpack.c.b16 %v1182, %v1181
        %v1290 = vpack.c.b16 %v1184, %v1183
        %v1291 = vpack.c.b16 %v1186, %v1185
        %v1292 = vpack.c.b16 %v1188, %v1187
        %v1293 = vpack.c.b16 %v1190, %v1189
        %v1294 = vpack.c.b16 %v1192, %v1191
        %v1295 = vpack.c.b16 %v1194, %v1193
        %v1296 = vpack.c.b16 %v1196, %v1195
        %v1297 = vpack.c.b16 %v1198, %v1197
        %v1298 = vpack.c.b16 %v1200, %v1199
        %v1299 = vpack.c.b16 %v1202, %v1201
        %v1300 = vpack.c.b16 %v1204, %v1203
        %v1301 = vpack.c.b16 %v1206, %v1205
        %v1302 = vpack.c.b16 %v1208, %v1207
        %v1303 = vpack.c.b16 %v1210, %v1209
        %v1304 = vpack.c.b16 %v1212, %v1211
        %v1305 = vpack.c.b16 %v1214, %v1213
        %v1306 = vpack.c.b16 %v1216, %v1215
        %v1307 = vpack.c.b16 %v1218, %v1217
        %v1308 = vpack.c.b16 %v1220, %v1219
        %v1309 = vpack.c.b16 %v1222, %v1221
        %v1310 = vpack.c.b16 %v1224, %v1223
        %v1311 = vpack.c.b16 %v1226, %v1225
        %v1312 = vpack.c.b16 %v1228, %v1227
        %v1313 = vpack.c.b16 %v1230, %v1229
        %v1314 = vpack.c.b16 %v1232, %v1231
        %v1315 = vpack.c.b16 %v1234, %v1233
        %v1316 = vpack.c.b16 %v1236, %v1235
        %v1317 = vpack.c.b16 %v1238, %v1237
        %v1318 = vpack.c.b16 %v1240, %v1239
        %v1319 = vpack.c.b16 %v1242, %v1241
        %v1320 = vpack.c.b16 %v1244, %v1243
        %v1321 = vpack.c.b16 %v1246, %v1245
        %v1322 = vpack.c.b16 %v1248, %v1247
        %v1323 = vpack.c.b16 %v1250, %v1249
        %v1324 = vpack.c.b16 %v1252, %v1251
        %1397 = vmatprep.subr.bf16.mxu0 0
        %1398 = vmatpush1.bf16.msra.mxu0 %v1253
        %1399 = vmatprep.subr.bf16.mxu0 0
        %1400 = vmatpush1.bf16.msra.mxu0 %v1254
        %1401 = vmatprep.subr.bf16.mxu0 0
        %1402 = vmatpush1.bf16.msra.mxu0 %v1255
        %1403 = vmatprep.subr.bf16.mxu0 0
        %1404 = vmatpush1.bf16.msra.mxu0 %v1256
        %1405 = vmatprep.subr.bf16.mxu0 0
        %1406 = vmatpush1.bf16.msra.mxu0 %v1257
        %1407 = vmatprep.subr.bf16.mxu0 0
        %1408 = vmatpush1.bf16.msra.mxu0 %v1258
        %1409 = vmatprep.subr.bf16.mxu0 0
        %1410 = vmatpush1.bf16.msra.mxu0 %v1259
        %1411 = vmatprep.subr.bf16.mxu0 0
        %1412 = vmatpush1.bf16.msra.mxu0 %v1260
        %1413 = vmatprep.subr.bf16.mxu0 0
        %1414 = vmatpush1.bf16.msra.mxu0 %v1261
        %1415 = vmatprep.subr.bf16.mxu0 0
        %1416 = vmatpush1.bf16.msra.mxu0 %v1262
        %1417 = vmatprep.subr.bf16.mxu0 0
        %1418 = vmatpush1.bf16.msra.mxu0 %v1263
        %1419 = vmatprep.subr.bf16.mxu0 0
        %1420 = vmatpush1.bf16.msra.mxu0 %v1264
        %1421 = vmatprep.subr.bf16.mxu0 0
        %1422 = vmatpush1.bf16.msra.mxu0 %v1265
        %1423 = vmatprep.subr.bf16.mxu0 0
        %1424 = vmatpush1.bf16.msra.mxu0 %v1266
        %1425 = vmatprep.subr.bf16.mxu0 0
        %1426 = vmatpush1.bf16.msra.mxu0 %v1267
        %1427 = vmatprep.subr.bf16.mxu0 0
        %1428 = vmatpush1.bf16.msra.mxu0 %v1268
        %1429 = vmatprep.mubr.bf16.mxu0 %v501
        %1430 = vmatmul.mubr.bf16.gmra.mrb[0].mxu0 %v455
        %v1431 = vpop.f32.mrb[0].mxu0
        %v1432 = vadd.f32 %v963, %v1431
        %v1433 = vpop.f32.mrb[0].mxu0
        %v1434 = vpop.f32.mrb[0].mxu0
        %v1435 = vadd.f32 %v963, %v1434
        %v1436 = vpop.f32.mrb[0].mxu0
        %1437 = vmatprep.mubr.bf16.mxu0 %v513
        %1438 = vmatmul.mubr.bf16.gmra.mrb[0].mxu0 %v456
        %v1439 = vpop.f32.mrb[0].mxu0
        %v1440 = vadd.f32 %v963, %v1439
        %v1441 = vpop.f32.mrb[0].mxu0
        %v1442 = vpop.f32.mrb[0].mxu0
        %v1443 = vadd.f32 %v963, %v1442
        %v1444 = vpop.f32.mrb[0].mxu0
        %1445 = vmatprep.mubr.bf16.mxu0 %v525
        %1446 = vmatmul.mubr.bf16.gmra.mrb[0].mxu0 %v457
        %v1447 = vpop.f32.mrb[0].mxu0
        %v1448 = vadd.f32 %v963, %v1447
        %v1449 = vpop.f32.mrb[0].mxu0
        %v1450 = vpop.f32.mrb[0].mxu0
        %v1451 = vadd.f32 %v963, %v1450
        %v1452 = vpop.f32.mrb[0].mxu0
        %1453 = vmatprep.mubr.bf16.mxu0 %v537
        %1454 = vmatmul.mubr.bf16.gmra.mrb[0].mxu0 %v458
        %v1455 = vpop.f32.mrb[0].mxu0
        %v1456 = vadd.f32 %v963, %v1455
        %v1457 = vpop.f32.mrb[0].mxu0
        %v1458 = vpop.f32.mrb[0].mxu0
        %v1459 = vadd.f32 %v963, %v1458
        %v1460 = vpop.f32.mrb[0].mxu0
        %1461 = vmatprep.mubr.bf16.mxu0 %v549
        %1462 = vmatmul.mubr.bf16.gmra.mrb[0].mxu0 %v459
        %v1463 = vpop.f32.mrb[0].mxu0
        %v1464 = vadd.f32 %v963, %v1463
        %v1465 = vpop.f32.mrb[0].mxu0
        %v1466 = vpop.f32.mrb[0].mxu0
        %v1467 = vadd.f32 %v963, %v1466
        %v1468 = vpop.f32.mrb[0].mxu0
        %1469 = vmatprep.mubr.bf16.mxu0 %v561
        %1470 = vmatmul.mubr.bf16.gmra.mrb[0].mxu0 %v460
        %v1471 = vpop.f32.mrb[0].mxu0
        %v1472 = vadd.f32 %v963, %v1471
        %v1473 = vpop.f32.mrb[0].mxu0
        %v1474 = vpop.f32.mrb[0].mxu0
        %v1475 = vadd.f32 %v963, %v1474
        %v1476 = vpop.f32.mrb[0].mxu0
        %1477 = vmatprep.mubr.bf16.mxu0 %v573
        %1478 = vmatmul.mubr.bf16.gmra.mrb[0].mxu0 %v461
        %v1479 = vpop.f32.mrb[0].mxu0
        %v1480 = vadd.f32 %v963, %v1479
        %v1481 = vpop.f32.mrb[0].mxu0
        %v1482 = vpop.f32.mrb[0].mxu0
        %v1483 = vadd.f32 %v963, %v1482
        %v1484 = vpop.f32.mrb[0].mxu0
        %1485 = vmatprep.mubr.bf16.mxu0 %v585
        %1486 = vmatmul.mubr.bf16.gmra.mrb[0].mxu0 %v462
        %v1487 = vpop.f32.mrb[0].mxu0
        %v1488 = vadd.f32 %v963, %v1487
        %v1489 = vpop.f32.mrb[0].mxu0
        %v1490 = vpop.f32.mrb[0].mxu0
        %v1491 = vadd.f32 %v963, %v1490
        %v1492 = vpop.f32.mrb[0].mxu0
        %1493 = vmatprep.mubr.bf16.mxu0 %v597
        %1494 = vmatmul.mubr.bf16.gmra.mrb[0].mxu0 %v463
        %v1495 = vpop.f32.mrb[0].mxu0
        %v1496 = vadd.f32 %v963, %v1495
        %v1497 = vpop.f32.mrb[0].mxu0
        %v1498 = vpop.f32.mrb[0].mxu0
        %v1499 = vadd.f32 %v963, %v1498
        %v1500 = vpop.f32.mrb[0].mxu0
        %1501 = vmatprep.mubr.bf16.mxu0 %v609
        %1502 = vmatmul.mubr.bf16.gmra.mrb[0].mxu0 %v464
        %v1503 = vpop.f32.mrb[0].mxu0
        %v1504 = vadd.f32 %v963, %v1503
        %v1505 = vpop.f32.mrb[0].mxu0
        %v1506 = vpop.f32.mrb[0].mxu0
        %v1507 = vadd.f32 %v963, %v1506
        %v1508 = vpop.f32.mrb[0].mxu0
        %1509 = vmatprep.mubr.bf16.mxu0 %v621
        %1510 = vmatmul.mubr.bf16.gmra.mrb[0].mxu0 %v465
        %v1511 = vpop.f32.mrb[0].mxu0
        %v1512 = vadd.f32 %v963, %v1511
        %v1513 = vpop.f32.mrb[0].mxu0
        %v1514 = vpop.f32.mrb[0].mxu0
        %v1515 = vadd.f32 %v963, %v1514
        %v1516 = vpop.f32.mrb[0].mxu0
        %1517 = vmatprep.mubr.bf16.mxu0 %v633
        %1518 = vmatmul.mubr.bf16.gmra.mrb[0].mxu0 %v466
        %v1519 = vpop.f32.mrb[0].mxu0
        %v1520 = vadd.f32 %v963, %v1519
        %v1521 = vpop.f32.mrb[0].mxu0
        %v1522 = vpop.f32.mrb[0].mxu0
        %v1523 = vadd.f32 %v963, %v1522
        %v1524 = vpop.f32.mrb[0].mxu0
        %1525 = vmatprep.mubr.bf16.mxu0 %v645
        %1526 = vmatmul.mubr.bf16.gmra.mrb[0].mxu0 %v467
        %v1527 = vpop.f32.mrb[0].mxu0
        %v1528 = vadd.f32 %v963, %v1527
        %v1529 = vpop.f32.mrb[0].mxu0
        %v1530 = vpop.f32.mrb[0].mxu0
        %v1531 = vadd.f32 %v963, %v1530
        %v1532 = vpop.f32.mrb[0].mxu0
        %1533 = vmatprep.mubr.bf16.mxu0 %v657
        %1534 = vmatmul.mubr.bf16.gmra.mrb[0].mxu0 %v468
        %v1535 = vpop.f32.mrb[0].mxu0
        %v1536 = vadd.f32 %v963, %v1535
        %v1537 = vpop.f32.mrb[0].mxu0
        %v1538 = vpop.f32.mrb[0].mxu0
        %v1539 = vadd.f32 %v963, %v1538
        %v1540 = vpop.f32.mrb[0].mxu0
        %1541 = vmatprep.mubr.bf16.mxu0 %v669
        %1542 = vmatmul.mubr.bf16.gmra.mrb[0].mxu0 %v469
        %v1543 = vpop.f32.mrb[0].mxu0
        %v1544 = vadd.f32 %v963, %v1543
        %v1545 = vpop.f32.mrb[0].mxu0
        %v1546 = vpop.f32.mrb[0].mxu0
        %v1547 = vadd.f32 %v963, %v1546
        %v1548 = vpop.f32.mrb[0].mxu0
        %1549 = vmatprep.mubr.bf16.mxu0 %v681
        %1550 = vmatmul.mubr.bf16.gmra.mrb[0].mxu0 %v470
        %v1551 = vpop.f32.mrb[0].mxu0
        %v1552 = vadd.f32 %v963, %v1551
        %v1553 = vpop.f32.mrb[0].mxu0
        %v1554 = vpop.f32.mrb[0].mxu0
        %v1555 = vadd.f32 %v963, %v1554
        %v1556 = vpop.f32.mrb[0].mxu0
        %1557 = vdwg.mxu0
        %1558 = vmatprep.subr.bf16.mxu0 0
        %1559 = vmatpush1.bf16.msra.mxu0 %v1269
        %1560 = vmatprep.subr.bf16.mxu0 0
        %1561 = vmatpush1.bf16.msra.mxu0 %v1270
        %1562 = vmatprep.subr.bf16.mxu0 0
        %1563 = vmatpush1.bf16.msra.mxu0 %v1271
        %1564 = vmatprep.subr.bf16.mxu0 0
        %1565 = vmatpush1.bf16.msra.mxu0 %v1272
        %1566 = vmatprep.subr.bf16.mxu0 0
        %1567 = vmatpush1.bf16.msra.mxu0 %v1273
        %1568 = vmatprep.subr.bf16.mxu0 0
        %1569 = vmatpush1.bf16.msra.mxu0 %v1274
        %1570 = vmatprep.subr.bf16.mxu0 0
        %1571 = vmatpush1.bf16.msra.mxu0 %v1275
        %1572 = vmatprep.subr.bf16.mxu0 0
        %1573 = vmatpush1.bf16.msra.mxu0 %v1276
        %1574 = vmatprep.subr.bf16.mxu0 0
        %1575 = vmatpush1.bf16.msra.mxu0 %v1277
        %1576 = vmatprep.subr.bf16.mxu0 0
        %1577 = vmatpush1.bf16.msra.mxu0 %v1278
        %1578 = vmatprep.subr.bf16.mxu0 0
        %1579 = vmatpush1.bf16.msra.mxu0 %v1279
        %1580 = vmatprep.subr.bf16.mxu0 0
        %1581 = vmatpush1.bf16.msra.mxu0 %v1280
        %1582 = vmatprep.subr.bf16.mxu0 0
        %1583 = vmatpush1.bf16.msra.mxu0 %v1281
        %1584 = vmatprep.subr.bf16.mxu0 0
        %1585 = vmatpush1.bf16.msra.mxu0 %v1282
        %1586 = vmatprep.subr.bf16.mxu0 0
        %1587 = vmatpush1.bf16.msra.mxu0 %v1283
        %1588 = vmatprep.subr.bf16.mxu0 0
        %1589 = vmatpush1.bf16.msra.mxu0 %v1284
        %1590 = vmatprep.mubr.bf16.mxu0 %v456
        %1591 = vmatmul.mubr.bf16.gmra.mrb[0].mxu0 %v733
        %v1592 = vpop.f32.mrb[0].mxu0
        %v1593 = vadd.f32 %v1432, %v1592
        %v1594 = vpop.f32.mrb[0].mxu0
        %v1595 = vpop.f32.mrb[0].mxu0
        %v1596 = vadd.f32 %v1435, %v1595
        %v1597 = vpop.f32.mrb[0].mxu0
        %1598 = vmatprep.mubr.bf16.mxu0 %v457
        %1599 = vmatmul.mubr.bf16.gmra.mrb[0].mxu0 %v736
        %v1600 = vpop.f32.mrb[0].mxu0
        %v1601 = vadd.f32 %v1440, %v1600
        %v1602 = vpop.f32.mrb[0].mxu0
        %v1603 = vpop.f32.mrb[0].mxu0
        %v1604 = vadd.f32 %v1443, %v1603
        %v1605 = vpop.f32.mrb[0].mxu0
        %1606 = vmatprep.mubr.bf16.mxu0 %v458
        %1607 = vmatmul.mubr.bf16.gmra.mrb[0].mxu0 %v739
        %v1608 = vpop.f32.mrb[0].mxu0
        %v1609 = vadd.f32 %v1448, %v1608
        %v1610 = vpop.f32.mrb[0].mxu0
        %v1611 = vpop.f32.mrb[0].mxu0
        %v1612 = vadd.f32 %v1451, %v1611
        %v1613 = vpop.f32.mrb[0].mxu0
        %1614 = vmatprep.mubr.bf16.mxu0 %v459
        %1615 = vmatmul.mubr.bf16.gmra.mrb[0].mxu0 %v742
        %v1616 = vpop.f32.mrb[0].mxu0
        %v1617 = vadd.f32 %v1456, %v1616
        %v1618 = vpop.f32.mrb[0].mxu0
        %v1619 = vpop.f32.mrb[0].mxu0
        %v1620 = vadd.f32 %v1459, %v1619
        %v1621 = vpop.f32.mrb[0].mxu0
        %1622 = vmatprep.mubr.bf16.mxu0 %v460
        %1623 = vmatmul.mubr.bf16.gmra.mrb[0].mxu0 %v745
        %v1624 = vpop.f32.mrb[0].mxu0
        %v1625 = vadd.f32 %v1464, %v1624
        %v1626 = vpop.f32.mrb[0].mxu0
        %v1627 = vpop.f32.mrb[0].mxu0
        %v1628 = vadd.f32 %v1467, %v1627
        %v1629 = vpop.f32.mrb[0].mxu0
        %1630 = vmatprep.mubr.bf16.mxu0 %v461
        %1631 = vmatmul.mubr.bf16.gmra.mrb[0].mxu0 %v748
        %v1632 = vpop.f32.mrb[0].mxu0
        %v1633 = vadd.f32 %v1472, %v1632
        %v1634 = vpop.f32.mrb[0].mxu0
        %v1635 = vpop.f32.mrb[0].mxu0
        %v1636 = vadd.f32 %v1475, %v1635
        %v1637 = vpop.f32.mrb[0].mxu0
        %1638 = vmatprep.mubr.bf16.mxu0 %v462
        %1639 = vmatmul.mubr.bf16.gmra.mrb[0].mxu0 %v751
        %v1640 = vpop.f32.mrb[0].mxu0
        %v1641 = vadd.f32 %v1480, %v1640
        %v1642 = vpop.f32.mrb[0].mxu0
        %v1643 = vpop.f32.mrb[0].mxu0
        %v1644 = vadd.f32 %v1483, %v1643
        %v1645 = vpop.f32.mrb[0].mxu0
        %1646 = vmatprep.mubr.bf16.mxu0 %v463
        %1647 = vmatmul.mubr.bf16.gmra.mrb[0].mxu0 %v754
        %v1648 = vpop.f32.mrb[0].mxu0
        %v1649 = vadd.f32 %v1488, %v1648
        %v1650 = vpop.f32.mrb[0].mxu0
        %v1651 = vpop.f32.mrb[0].mxu0
        %v1652 = vadd.f32 %v1491, %v1651
        %v1653 = vpop.f32.mrb[0].mxu0
        %1654 = vmatprep.mubr.bf16.mxu0 %v464
        %1655 = vmatmul.mubr.bf16.gmra.mrb[0].mxu0 %v757
        %v1656 = vpop.f32.mrb[0].mxu0
        %v1657 = vadd.f32 %v1496, %v1656
        %v1658 = vpop.f32.mrb[0].mxu0
        %v1659 = vpop.f32.mrb[0].mxu0
        %v1660 = vadd.f32 %v1499, %v1659
        %v1661 = vpop.f32.mrb[0].mxu0
        %1662 = vmatprep.mubr.bf16.mxu0 %v465
        %1663 = vmatmul.mubr.bf16.gmra.mrb[0].mxu0 %v760
        %v1664 = vpop.f32.mrb[0].mxu0
        %v1665 = vadd.f32 %v1504, %v1664
        %v1666 = vpop.f32.mrb[0].mxu0
        %v1667 = vpop.f32.mrb[0].mxu0
        %v1668 = vadd.f32 %v1507, %v1667
        %v1669 = vpop.f32.mrb[0].mxu0
        %1670 = vmatprep.mubr.bf16.mxu0 %v466
        %1671 = vmatmul.mubr.bf16.gmra.mrb[0].mxu0 %v763
        %v1672 = vpop.f32.mrb[0].mxu0
        %v1673 = vadd.f32 %v1512, %v1672
        %v1674 = vpop.f32.mrb[0].mxu0
        %v1675 = vpop.f32.mrb[0].mxu0
        %v1676 = vadd.f32 %v1515, %v1675
        %v1677 = vpop.f32.mrb[0].mxu0
        %1678 = vmatprep.mubr.bf16.mxu0 %v467
        %1679 = vmatmul.mubr.bf16.gmra.mrb[0].mxu0 %v766
        %v1680 = vpop.f32.mrb[0].mxu0
        %v1681 = vadd.f32 %v1520, %v1680
        %v1682 = vpop.f32.mrb[0].mxu0
        %v1683 = vpop.f32.mrb[0].mxu0
        %v1684 = vadd.f32 %v1523, %v1683
        %v1685 = vpop.f32.mrb[0].mxu0
        %1686 = vmatprep.mubr.bf16.mxu0 %v468
        %1687 = vmatmul.mubr.bf16.gmra.mrb[0].mxu0 %v769
        %v1688 = vpop.f32.mrb[0].mxu0
        %v1689 = vadd.f32 %v1528, %v1688
        %v1690 = vpop.f32.mrb[0].mxu0
        %v1691 = vpop.f32.mrb[0].mxu0
        %v1692 = vadd.f32 %v1531, %v1691
        %v1693 = vpop.f32.mrb[0].mxu0
        %1694 = vmatprep.mubr.bf16.mxu0 %v469
        %1695 = vmatmul.mubr.bf16.gmra.mrb[0].mxu0 %v772
        %v1696 = vpop.f32.mrb[0].mxu0
        %v1697 = vadd.f32 %v1536, %v1696
        %v1698 = vpop.f32.mrb[0].mxu0
        %v1699 = vpop.f32.mrb[0].mxu0
        %v1700 = vadd.f32 %v1539, %v1699
        %v1701 = vpop.f32.mrb[0].mxu0
        %1702 = vmatprep.mubr.bf16.mxu0 %v470
        %1703 = vmatmul.mubr.bf16.gmra.mrb[0].mxu0 %v775
        %v1704 = vpop.f32.mrb[0].mxu0
        %v1705 = vadd.f32 %v1544, %v1704
        %v1706 = vpop.f32.mrb[0].mxu0
        %v1707 = vpop.f32.mrb[0].mxu0
        %v1708 = vadd.f32 %v1547, %v1707
        %v1709 = vpop.f32.mrb[0].mxu0
        %1710 = vmatprep.mubr.bf16.mxu0 %v471
        %1711 = vmatmul.mubr.bf16.gmra.mrb[0].mxu0 %v778
        %v1712 = vpop.f32.mrb[0].mxu0
        %v1713 = vadd.f32 %v1552, %v1712
        %v1714 = vpop.f32.mrb[0].mxu0
        %v1715 = vpop.f32.mrb[0].mxu0
        %v1716 = vadd.f32 %v1555, %v1715
        %v1717 = vpop.f32.mrb[0].mxu0
        %1718 = vdwg.mxu0
        %1719 = vmatprep.subr.bf16.mxu0 0
        %1720 = vmatpush1.bf16.msra.mxu0 %v1285
        %1721 = vmatprep.subr.bf16.mxu0 0
        %1722 = vmatpush1.bf16.msra.mxu0 %v1286
        %1723 = vmatprep.subr.bf16.mxu0 0
        %1724 = vmatpush1.bf16.msra.mxu0 %v1287
        %1725 = vmatprep.subr.bf16.mxu0 0
        %1726 = vmatpush1.bf16.msra.mxu0 %v1288
        %1727 = vmatprep.subr.bf16.mxu0 0
        %1728 = vmatpush1.bf16.msra.mxu0 %v1289
        %1729 = vmatprep.subr.bf16.mxu0 0
        %1730 = vmatpush1.bf16.msra.mxu0 %v1290
        %1731 = vmatprep.subr.bf16.mxu0 0
        %1732 = vmatpush1.bf16.msra.mxu0 %v1291
        %1733 = vmatprep.subr.bf16.mxu0 0
        %1734 = vmatpush1.bf16.msra.mxu0 %v1292
        %1735 = vmatprep.subr.bf16.mxu0 0
        %1736 = vmatpush1.bf16.msra.mxu0 %v1293
        %1737 = vmatprep.subr.bf16.mxu0 0
        %1738 = vmatpush1.bf16.msra.mxu0 %v1294
        %1739 = vmatprep.subr.bf16.mxu0 0
        %1740 = vmatpush1.bf16.msra.mxu0 %v1295
        %1741 = vmatprep.subr.bf16.mxu0 0
        %1742 = vmatpush1.bf16.msra.mxu0 %v1296
        %1743 = vmatprep.subr.bf16.mxu0 0
        %1744 = vmatpush1.bf16.msra.mxu0 %v1297
        %1745 = vmatprep.subr.bf16.mxu0 0
        %1746 = vmatpush1.bf16.msra.mxu0 %v1298
        %1747 = vmatprep.subr.bf16.mxu0 0
        %1748 = vmatpush1.bf16.msra.mxu0 %v1299
        %1749 = vmatprep.subr.bf16.mxu0 0
        %1750 = vmatpush1.bf16.msra.mxu0 %v1300
        %1751 = vmatprep.mubr.bf16.mxu0 %v736
        %1752 = vmatmul.mubr.bf16.gmra.mrb[0].mxu0 %v513
        %v1753 = vpop.f32.mrb[0].mxu0
        %v1754 = vadd.f32 %v1593, %v1753
        %v1755 = vpop.f32.mrb[0].mxu0
        %v1756 = vpop.f32.mrb[0].mxu0
        %v1757 = vadd.f32 %v1596, %v1756
        %v1758 = vpop.f32.mrb[0].mxu0
        %1759 = vmatprep.mubr.bf16.mxu0 %v739
        %1760 = vmatmul.mubr.bf16.gmra.mrb[0].mxu0 %v525
        %v1761 = vpop.f32.mrb[0].mxu0
        %v1762 = vadd.f32 %v1601, %v1761
        %v1763 = vpop.f32.mrb[0].mxu0
        %v1764 = vpop.f32.mrb[0].mxu0
        %v1765 = vadd.f32 %v1604, %v1764
        %v1766 = vpop.f32.mrb[0].mxu0
        %1767 = vmatprep.mubr.bf16.mxu0 %v742
        %1768 = vmatmul.mubr.bf16.gmra.mrb[0].mxu0 %v537
        %v1769 = vpop.f32.mrb[0].mxu0
        %v1770 = vadd.f32 %v1609, %v1769
        %v1771 = vpop.f32.mrb[0].mxu0
        %v1772 = vpop.f32.mrb[0].mxu0
        %v1773 = vadd.f32 %v1612, %v1772
        %v1774 = vpop.f32.mrb[0].mxu0
        %1775 = vmatprep.mubr.bf16.mxu0 %v745
        %1776 = vmatmul.mubr.bf16.gmra.mrb[0].mxu0 %v549
        %v1777 = vpop.f32.mrb[0].mxu0
        %v1778 = vadd.f32 %v1617, %v1777
        %v1779 = vpop.f32.mrb[0].mxu0
        %v1780 = vpop.f32.mrb[0].mxu0
        %v1781 = vadd.f32 %v1620, %v1780
        %v1782 = vpop.f32.mrb[0].mxu0
        %1783 = vmatprep.mubr.bf16.mxu0 %v748
        %1784 = vmatmul.mubr.bf16.gmra.mrb[0].mxu0 %v561
        %v1785 = vpop.f32.mrb[0].mxu0
        %v1786 = vadd.f32 %v1625, %v1785
        %v1787 = vpop.f32.mrb[0].mxu0
        %v1788 = vpop.f32.mrb[0].mxu0
        %v1789 = vadd.f32 %v1628, %v1788
        %v1790 = vpop.f32.mrb[0].mxu0
        %1791 = vmatprep.mubr.bf16.mxu0 %v751
        %1792 = vmatmul.mubr.bf16.gmra.mrb[0].mxu0 %v573
        %v1793 = vpop.f32.mrb[0].mxu0
        %v1794 = vadd.f32 %v1633, %v1793
        %v1795 = vpop.f32.mrb[0].mxu0
        %v1796 = vpop.f32.mrb[0].mxu0
        %v1797 = vadd.f32 %v1636, %v1796
        %v1798 = vpop.f32.mrb[0].mxu0
        %1799 = vmatprep.mubr.bf16.mxu0 %v754
        %1800 = vmatmul.mubr.bf16.gmra.mrb[0].mxu0 %v585
        %v1801 = vpop.f32.mrb[0].mxu0
        %v1802 = vadd.f32 %v1641, %v1801
        %v1803 = vpop.f32.mrb[0].mxu0
        %v1804 = vpop.f32.mrb[0].mxu0
        %v1805 = vadd.f32 %v1644, %v1804
        %v1806 = vpop.f32.mrb[0].mxu0
        %1807 = vmatprep.mubr.bf16.mxu0 %v757
        %1808 = vmatmul.mubr.bf16.gmra.mrb[0].mxu0 %v597
        %v1809 = vpop.f32.mrb[0].mxu0
        %v1810 = vadd.f32 %v1649, %v1809
        %v1811 = vpop.f32.mrb[0].mxu0
        %v1812 = vpop.f32.mrb[0].mxu0
        %v1813 = vadd.f32 %v1652, %v1812
        %v1814 = vpop.f32.mrb[0].mxu0
        %1815 = vmatprep.mubr.bf16.mxu0 %v760
        %1816 = vmatmul.mubr.bf16.gmra.mrb[0].mxu0 %v609
        %v1817 = vpop.f32.mrb[0].mxu0
        %v1818 = vadd.f32 %v1657, %v1817
        %v1819 = vpop.f32.mrb[0].mxu0
        %v1820 = vpop.f32.mrb[0].mxu0
        %v1821 = vadd.f32 %v1660, %v1820
        %v1822 = vpop.f32.mrb[0].mxu0
        %1823 = vmatprep.mubr.bf16.mxu0 %v763
        %1824 = vmatmul.mubr.bf16.gmra.mrb[0].mxu0 %v621
        %v1825 = vpop.f32.mrb[0].mxu0
        %v1826 = vadd.f32 %v1665, %v1825
        %v1827 = vpop.f32.mrb[0].mxu0
        %v1828 = vpop.f32.mrb[0].mxu0
        %v1829 = vadd.f32 %v1668, %v1828
        %v1830 = vpop.f32.mrb[0].mxu0
        %1831 = vmatprep.mubr.bf16.mxu0 %v766
        %1832 = vmatmul.mubr.bf16.gmra.mrb[0].mxu0 %v633
        %v1833 = vpop.f32.mrb[0].mxu0
        %v1834 = vadd.f32 %v1673, %v1833
        %v1835 = vpop.f32.mrb[0].mxu0
        %v1836 = vpop.f32.mrb[0].mxu0
        %v1837 = vadd.f32 %v1676, %v1836
        %v1838 = vpop.f32.mrb[0].mxu0
        %1839 = vmatprep.mubr.bf16.mxu0 %v769
        %1840 = vmatmul.mubr.bf16.gmra.mrb[0].mxu0 %v645
        %v1841 = vpop.f32.mrb[0].mxu0
        %v1842 = vadd.f32 %v1681, %v1841
        %v1843 = vpop.f32.mrb[0].mxu0
        %v1844 = vpop.f32.mrb[0].mxu0
        %v1845 = vadd.f32 %v1684, %v1844
        %v1846 = vpop.f32.mrb[0].mxu0
        %1847 = vmatprep.mubr.bf16.mxu0 %v772
        %1848 = vmatmul.mubr.bf16.gmra.mrb[0].mxu0 %v657
        %v1849 = vpop.f32.mrb[0].mxu0
        %v1850 = vadd.f32 %v1689, %v1849
        %v1851 = vpop.f32.mrb[0].mxu0
        %v1852 = vpop.f32.mrb[0].mxu0
        %v1853 = vadd.f32 %v1692, %v1852
        %v1854 = vpop.f32.mrb[0].mxu0
        %1855 = vmatprep.mubr.bf16.mxu0 %v775
        %1856 = vmatmul.mubr.bf16.gmra.mrb[0].mxu0 %v669
        %v1857 = vpop.f32.mrb[0].mxu0
        %v1858 = vadd.f32 %v1697, %v1857
        %v1859 = vpop.f32.mrb[0].mxu0
        %v1860 = vpop.f32.mrb[0].mxu0
        %v1861 = vadd.f32 %v1700, %v1860
        %v1862 = vpop.f32.mrb[0].mxu0
        %1863 = vmatprep.mubr.bf16.mxu0 %v778
        %1864 = vmatmul.mubr.bf16.gmra.mrb[0].mxu0 %v681
        %v1865 = vpop.f32.mrb[0].mxu0
        %v1866 = vadd.f32 %v1705, %v1865
        %v1867 = vpop.f32.mrb[0].mxu0
        %v1868 = vpop.f32.mrb[0].mxu0
        %v1869 = vadd.f32 %v1708, %v1868
        %v1870 = vpop.f32.mrb[0].mxu0
        %1871 = vmatprep.mubr.bf16.mxu0 %v812
        %1872 = vmatmul.mubr.bf16.gmra.mrb[0].mxu0 %v806
        %v1873 = vpop.f32.mrb[0].mxu0
        %v1874 = vadd.f32 %v1713, %v1873
        %v1875 = vpop.f32.mrb[0].mxu0
        %v1876 = vpop.f32.mrb[0].mxu0
        %v1877 = vadd.f32 %v1716, %v1876
        %v1878 = vpop.f32.mrb[0].mxu0
        %1879 = vdwg.mxu0
        %1880 = vmatprep.subr.bf16.mxu0 0
        %1881 = vmatpush1.bf16.msra.mxu0 %v1301
        %1882 = vmatprep.subr.bf16.mxu0 0
        %1883 = vmatpush1.bf16.msra.mxu0 %v1302
        %1884 = vmatprep.subr.bf16.mxu0 0
        %1885 = vmatpush1.bf16.msra.mxu0 %v1303
        %1886 = vmatprep.subr.bf16.mxu0 0
        %1887 = vmatpush1.bf16.msra.mxu0 %v1304
        %1888 = vmatprep.subr.bf16.mxu0 0
        %1889 = vmatpush1.bf16.msra.mxu0 %v1305
        %1890 = vmatprep.subr.bf16.mxu0 0
        %1891 = vmatpush1.bf16.msra.mxu0 %v1306
        %1892 = vmatprep.subr.bf16.mxu0 0
        %1893 = vmatpush1.bf16.msra.mxu0 %v1307
        %1894 = vmatprep.subr.bf16.mxu0 0
        %1895 = vmatpush1.bf16.msra.mxu0 %v1308
        %1896 = vmatprep.subr.bf16.mxu0 0
        %1897 = vmatpush1.bf16.msra.mxu0 %v1309
        %1898 = vmatprep.subr.bf16.mxu0 0
        %1899 = vmatpush1.bf16.msra.mxu0 %v1310
        %1900 = vmatprep.subr.bf16.mxu0 0
        %1901 = vmatpush1.bf16.msra.mxu0 %v1311
        %1902 = vmatprep.subr.bf16.mxu0 0
        %1903 = vmatpush1.bf16.msra.mxu0 %v1312
        %1904 = vmatprep.subr.bf16.mxu0 0
        %1905 = vmatpush1.bf16.msra.mxu0 %v1313
        %1906 = vmatprep.subr.bf16.mxu0 0
        %1907 = vmatpush1.bf16.msra.mxu0 %v1314
        %1908 = vmatprep.subr.bf16.mxu0 0
        %1909 = vmatpush1.bf16.msra.mxu0 %v1315
        %1910 = vmatprep.subr.bf16.mxu0 0
        %1911 = vmatpush1.bf16.msra.mxu0 %v1316
        %1912 = vmatprep.mubr.bf16.mxu0 %v525
        %1913 = vmatmul.mubr.bf16.gmra.mrb[0].mxu0 %v457
        %v1914 = vpop.f32.mrb[0].mxu0
        %v1915 = vadd.f32 %v1754, %v1914
        %v1916 = vpop.f32.mrb[0].mxu0
        %v1917 = vpop.f32.mrb[0].mxu0
        %v1918 = vadd.f32 %v1757, %v1917
        %v1919 = vpop.f32.mrb[0].mxu0
        %1920 = vmatprep.mubr.bf16.mxu0 %v537
        %1921 = vmatmul.mubr.bf16.gmra.mrb[0].mxu0 %v458
        %v1922 = vpop.f32.mrb[0].mxu0
        %v1923 = vadd.f32 %v1762, %v1922
        %v1924 = vpop.f32.mrb[0].mxu0
        %v1925 = vpop.f32.mrb[0].mxu0
        %v1926 = vadd.f32 %v1765, %v1925
        %v1927 = vpop.f32.mrb[0].mxu0
        %1928 = vmatprep.mubr.bf16.mxu0 %v549
        %1929 = vmatmul.mubr.bf16.gmra.mrb[0].mxu0 %v459
        %v1930 = vpop.f32.mrb[0].mxu0
        %v1931 = vadd.f32 %v1770, %v1930
        %v1932 = vpop.f32.mrb[0].mxu0
        %v1933 = vpop.f32.mrb[0].mxu0
        %v1934 = vadd.f32 %v1773, %v1933
        %v1935 = vpop.f32.mrb[0].mxu0
        %1936 = vmatprep.mubr.bf16.mxu0 %v561
        %1937 = vmatmul.mubr.bf16.gmra.mrb[0].mxu0 %v460
        %v1938 = vpop.f32.mrb[0].mxu0
        %v1939 = vadd.f32 %v1778, %v1938
        %v1940 = vpop.f32.mrb[0].mxu0
        %v1941 = vpop.f32.mrb[0].mxu0
        %v1942 = vadd.f32 %v1781, %v1941
        %v1943 = vpop.f32.mrb[0].mxu0
        %1944 = vmatprep.mubr.bf16.mxu0 %v573
        %1945 = vmatmul.mubr.bf16.gmra.mrb[0].mxu0 %v461
        %v1946 = vpop.f32.mrb[0].mxu0
        %v1947 = vadd.f32 %v1786, %v1946
        %v1948 = vpop.f32.mrb[0].mxu0
        %v1949 = vpop.f32.mrb[0].mxu0
        %v1950 = vadd.f32 %v1789, %v1949
        %v1951 = vpop.f32.mrb[0].mxu0
        %1952 = vmatprep.mubr.bf16.mxu0 %v585
        %1953 = vmatmul.mubr.bf16.gmra.mrb[0].mxu0 %v462
        %v1954 = vpop.f32.mrb[0].mxu0
        %v1955 = vadd.f32 %v1794, %v1954
        %v1956 = vpop.f32.mrb[0].mxu0
        %v1957 = vpop.f32.mrb[0].mxu0
        %v1958 = vadd.f32 %v1797, %v1957
        %v1959 = vpop.f32.mrb[0].mxu0
        %1960 = vmatprep.mubr.bf16.mxu0 %v597
        %1961 = vmatmul.mubr.bf16.gmra.mrb[0].mxu0 %v463
        %v1962 = vpop.f32.mrb[0].mxu0
        %v1963 = vadd.f32 %v1802, %v1962
        %v1964 = vpop.f32.mrb[0].mxu0
        %v1965 = vpop.f32.mrb[0].mxu0
        %v1966 = vadd.f32 %v1805, %v1965
        %v1967 = vpop.f32.mrb[0].mxu0
        %1968 = vmatprep.mubr.bf16.mxu0 %v609
        %1969 = vmatmul.mubr.bf16.gmra.mrb[0].mxu0 %v464
        %v1970 = vpop.f32.mrb[0].mxu0
        %v1971 = vadd.f32 %v1810, %v1970
        %v1972 = vpop.f32.mrb[0].mxu0
        %v1973 = vpop.f32.mrb[0].mxu0
        %v1974 = vadd.f32 %v1813, %v1973
        %v1975 = vpop.f32.mrb[0].mxu0
        %1976 = vmatprep.mubr.bf16.mxu0 %v621
        %1977 = vmatmul.mubr.bf16.gmra.mrb[0].mxu0 %v465
        %v1978 = vpop.f32.mrb[0].mxu0
        %v1979 = vadd.f32 %v1818, %v1978
        %v1980 = vpop.f32.mrb[0].mxu0
        %v1981 = vpop.f32.mrb[0].mxu0
        %v1982 = vadd.f32 %v1821, %v1981
        %v1983 = vpop.f32.mrb[0].mxu0
        %1984 = vmatprep.mubr.bf16.mxu0 %v633
        %1985 = vmatmul.mubr.bf16.gmra.mrb[0].mxu0 %v466
        %v1986 = vpop.f32.mrb[0].mxu0
        %v1987 = vadd.f32 %v1826, %v1986
        %v1988 = vpop.f32.mrb[0].mxu0
        %v1989 = vpop.f32.mrb[0].mxu0
        %v1990 = vadd.f32 %v1829, %v1989
        %v1991 = vpop.f32.mrb[0].mxu0
        %1992 = vmatprep.mubr.bf16.mxu0 %v645
        %1993 = vmatmul.mubr.bf16.gmra.mrb[0].mxu0 %v467
        %v1994 = vpop.f32.mrb[0].mxu0
        %v1995 = vadd.f32 %v1834, %v1994
        %v1996 = vpop.f32.mrb[0].mxu0
        %v1997 = vpop.f32.mrb[0].mxu0
        %v1998 = vadd.f32 %v1837, %v1997
        %v1999 = vpop.f32.mrb[0].mxu0
        %2000 = vmatprep.mubr.bf16.mxu0 %v657
        %2001 = vmatmul.mubr.bf16.gmra.mrb[0].mxu0 %v468
        %v2002 = vpop.f32.mrb[0].mxu0
        %v2003 = vadd.f32 %v1842, %v2002
        %v2004 = vpop.f32.mrb[0].mxu0
        %v2005 = vpop.f32.mrb[0].mxu0
        %v2006 = vadd.f32 %v1845, %v2005
        %v2007 = vpop.f32.mrb[0].mxu0
        %2008 = vmatprep.mubr.bf16.mxu0 %v669
        %2009 = vmatmul.mubr.bf16.gmra.mrb[0].mxu0 %v469
        %v2010 = vpop.f32.mrb[0].mxu0
        %v2011 = vadd.f32 %v1850, %v2010
        %v2012 = vpop.f32.mrb[0].mxu0
        %v2013 = vpop.f32.mrb[0].mxu0
        %v2014 = vadd.f32 %v1853, %v2013
        %v2015 = vpop.f32.mrb[0].mxu0
        %2016 = vmatprep.mubr.bf16.mxu0 %v681
        %2017 = vmatmul.mubr.bf16.gmra.mrb[0].mxu0 %v470
        %v2018 = vpop.f32.mrb[0].mxu0
        %v2019 = vadd.f32 %v1858, %v2018
        %v2020 = vpop.f32.mrb[0].mxu0
        %v2021 = vpop.f32.mrb[0].mxu0
        %v2022 = vadd.f32 %v1861, %v2021
        %v2023 = vpop.f32.mrb[0].mxu0
        %2024 = vmatprep.mubr.bf16.mxu0 %v806
        %2025 = vmatmul.mubr.bf16.gmra.mrb[0].mxu0 %v471
        %v2026 = vpop.f32.mrb[0].mxu0
        %v2027 = vadd.f32 %v1866, %v2026
        %v2028 = vpop.f32.mrb[0].mxu0
        %v2029 = vpop.f32.mrb[0].mxu0
        %v2030 = vadd.f32 %v1869, %v2029
        %v2031 = vpop.f32.mrb[0].mxu0
        %2032 = vmatprep.mubr.bf16.mxu0 %v501
        %2033 = vmatmul.mubr.bf16.gmra.mrb[0].mxu0 %v455
        %v2034 = vpop.f32.mrb[0].mxu0
        %v2035 = vadd.f32 %v1874, %v2034
        %v2036 = vpop.f32.mrb[0].mxu0
        %v2037 = vpop.f32.mrb[0].mxu0
        %v2038 = vadd.f32 %v1877, %v2037
        %v2039 = vpop.f32.mrb[0].mxu0
        %2040 = vdwg.mxu0
        %2041 = vmatprep.subr.bf16.mxu0 0
        %2042 = vmatpush1.bf16.msra.mxu0 %v1317
        %2043 = vmatprep.subr.bf16.mxu0 0
        %2044 = vmatpush1.bf16.msra.mxu0 %v1318
        %2045 = vmatprep.subr.bf16.mxu0 0
        %2046 = vmatpush1.bf16.msra.mxu0 %v1319
        %2047 = vmatprep.subr.bf16.mxu0 0
        %2048 = vmatpush1.bf16.msra.mxu0 %v1320
        %2049 = vmatprep.subr.bf16.mxu0 0
        %2050 = vmatpush1.bf16.msra.mxu0 %v1321
        %2051 = vmatprep.subr.bf16.mxu0 0
        %2052 = vmatpush1.bf16.msra.mxu0 %v1322
        %2053 = vmatprep.subr.bf16.mxu0 0
        %2054 = vmatpush1.bf16.msra.mxu0 %v1323
        %2055 = vmatprep.subr.bf16.mxu0 0
        %2056 = vmatpush1.bf16.msra.mxu0 %v1324
        %2057 = vmatprep.subr.bf16.mxu0 0
        %2058 = vmatpush1.bf16.msra.mxu0 0
        %2059 = vmatprep.subr.bf16.mxu0 0
        %2060 = vmatpush1.bf16.msra.mxu0 0
        %2061 = vmatprep.subr.bf16.mxu0 0
        %2062 = vmatpush1.bf16.msra.mxu0 0
        %2063 = vmatprep.subr.bf16.mxu0 0
        %2064 = vmatpush1.bf16.msra.mxu0 0
        %2065 = vmatprep.subr.bf16.mxu0 0
        %2066 = vmatpush1.bf16.msra.mxu0 0
        %2067 = vmatprep.subr.bf16.mxu0 0
        %2068 = vmatpush1.bf16.msra.mxu0 0
        %2069 = vmatprep.subr.bf16.mxu0 0
        %2070 = vmatpush1.bf16.msra.mxu0 0
        %2071 = vmatprep.subr.bf16.mxu0 0
        %2072 = vmatpush1.bf16.msra.mxu0 0
        %2073 = vmatprep.mubr.bf16.mxu0 0
        %2074 = vmatmul.mubr.bf16.gmra.mrb[0].mxu0 %v739
        %v2075 = vpop.f32.mrb[0].mxu0
        %v2076 = vadd.f32 %v1915, %v2075
        %v2077 = vpop.f32.mrb[0].mxu0
        %v2078 = vpop.f32.mrb[0].mxu0
        %v2079 = vadd.f32 %v1918, %v2078
        %v2080 = vpop.f32.mrb[0].mxu0
        %2081 = vmatprep.mubr.bf16.mxu0 0
        %2082 = vmatmul.mubr.bf16.gmra.mrb[0].mxu0 %v742
        %v2083 = vpop.f32.mrb[0].mxu0
        %v2084 = vadd.f32 %v1923, %v2083
        %v2085 = vpop.f32.mrb[0].mxu0
        %v2086 = vpop.f32.mrb[0].mxu0
        %v2087 = vadd.f32 %v1926, %v2086
        %v2088 = vpop.f32.mrb[0].mxu0
        %2089 = vmatprep.mubr.bf16.mxu0 0
        %2090 = vmatmul.mubr.bf16.gmra.mrb[0].mxu0 %v745
        %v2091 = vpop.f32.mrb[0].mxu0
        %v2092 = vadd.f32 %v1931, %v2091
        %v2093 = vpop.f32.mrb[0].mxu0
        %v2094 = vpop.f32.mrb[0].mxu0
        %v2095 = vadd.f32 %v1934, %v2094
        %v2096 = vpop.f32.mrb[0].mxu0
        %2097 = vmatprep.mubr.bf16.mxu0 0
        %2098 = vmatmul.mubr.bf16.gmra.mrb[0].mxu0 %v748
        %v2099 = vpop.f32.mrb[0].mxu0
        %v2100 = vadd.f32 %v1939, %v2099
        %v2101 = vpop.f32.mrb[0].mxu0
        %v2102 = vpop.f32.mrb[0].mxu0
        %v2103 = vadd.f32 %v1942, %v2102
        %v2104 = vpop.f32.mrb[0].mxu0
        %2105 = vmatprep.mubr.bf16.mxu0 0
        %2106 = vmatmul.mubr.bf16.gmra.mrb[0].mxu0 %v751
        %v2107 = vpop.f32.mrb[0].mxu0
        %v2108 = vadd.f32 %v1947, %v2107
        %v2109 = vpop.f32.mrb[0].mxu0
        %v2110 = vpop.f32.mrb[0].mxu0
        %v2111 = vadd.f32 %v1950, %v2110
        %v2112 = vpop.f32.mrb[0].mxu0
        %2113 = vmatprep.mubr.bf16.mxu0 0
        %2114 = vmatmul.mubr.bf16.gmra.mrb[0].mxu0 %v754
        %v2115 = vpop.f32.mrb[0].mxu0
        %v2116 = vadd.f32 %v1955, %v2115
        %v2117 = vpop.f32.mrb[0].mxu0
        %v2118 = vpop.f32.mrb[0].mxu0
        %v2119 = vadd.f32 %v1958, %v2118
        %v2120 = vpop.f32.mrb[0].mxu0
        %2121 = vmatprep.mubr.bf16.mxu0 0
        %2122 = vmatmul.mubr.bf16.gmra.mrb[0].mxu0 %v757
        %v2123 = vpop.f32.mrb[0].mxu0
        %v2124 = vadd.f32 %v1963, %v2123
        %v2125 = vpop.f32.mrb[0].mxu0
        %v2126 = vpop.f32.mrb[0].mxu0
        %v2127 = vadd.f32 %v1966, %v2126
        %v2128 = vpop.f32.mrb[0].mxu0
        %2129 = vmatprep.mubr.bf16.mxu0 0
        %2130 = vmatmul.mubr.bf16.gmra.mrb[0].mxu0 %v760
        %v2131 = vpop.f32.mrb[0].mxu0
        %v2132 = vadd.f32 %v1971, %v2131
        %v2133 = vpop.f32.mrb[0].mxu0
        %v2134 = vpop.f32.mrb[0].mxu0
        %v2135 = vadd.f32 %v1974, %v2134
        %v2136 = vpop.f32.mrb[0].mxu0
        %2137 = vmatprep.mubr.bf16.mxu0 0
        %2138 = vmatmul.mubr.bf16.gmra.mrb[0].mxu0 %v763
        %v2139 = vpop.f32.mrb[0].mxu0
        %v2140 = vadd.f32 %v1979, %v2139
        %v2141 = vpop.f32.mrb[0].mxu0
        %v2142 = vpop.f32.mrb[0].mxu0
        %v2143 = vadd.f32 %v1982, %v2142
        %v2144 = vpop.f32.mrb[0].mxu0
        %2145 = vmatprep.mubr.bf16.mxu0 0
        %2146 = vmatmul.mubr.bf16.gmra.mrb[0].mxu0 %v766
        %v2147 = vpop.f32.mrb[0].mxu0
        %v2148 = vadd.f32 %v1987, %v2147
        %v2149 = vpop.f32.mrb[0].mxu0
        %v2150 = vpop.f32.mrb[0].mxu0
        %v2151 = vadd.f32 %v1990, %v2150
        %v2152 = vpop.f32.mrb[0].mxu0
        %2153 = vmatprep.mubr.bf16.mxu0 0
        %2154 = vmatmul.mubr.bf16.gmra.mrb[0].mxu0 %v769
        %v2155 = vpop.f32.mrb[0].mxu0
        %v2156 = vadd.f32 %v1995, %v2155
        %v2157 = vpop.f32.mrb[0].mxu0
        %v2158 = vpop.f32.mrb[0].mxu0
        %v2159 = vadd.f32 %v1998, %v2158
        %v2160 = vpop.f32.mrb[0].mxu0
        %2161 = vmatprep.mubr.bf16.mxu0 0
        %2162 = vmatmul.mubr.bf16.gmra.mrb[0].mxu0 %v772
        %v2163 = vpop.f32.mrb[0].mxu0
        %v2164 = vadd.f32 %v2003, %v2163
        %v2165 = vpop.f32.mrb[0].mxu0
        %v2166 = vpop.f32.mrb[0].mxu0
        %v2167 = vadd.f32 %v2006, %v2166
        %v2168 = vpop.f32.mrb[0].mxu0
        %2169 = vmatprep.mubr.bf16.mxu0 0
        %2170 = vmatmul.mubr.bf16.gmra.mrb[0].mxu0 %v775
        %v2171 = vpop.f32.mrb[0].mxu0
        %v2172 = vadd.f32 %v2011, %v2171
        %v2173 = vpop.f32.mrb[0].mxu0
        %v2174 = vpop.f32.mrb[0].mxu0
        %v2175 = vadd.f32 %v2014, %v2174
        %v2176 = vpop.f32.mrb[0].mxu0
        %2177 = vmatprep.mubr.bf16.mxu0 0
        %2178 = vmatmul.mubr.bf16.gmra.mrb[0].mxu0 %v778
        %v2179 = vpop.f32.mrb[0].mxu0
        %v2180 = vadd.f32 %v2019, %v2179
        %v2181 = vpop.f32.mrb[0].mxu0
        %v2182 = vpop.f32.mrb[0].mxu0
        %v2183 = vadd.f32 %v2022, %v2182
        %v2184 = vpop.f32.mrb[0].mxu0
        %2185 = vmatprep.mubr.bf16.mxu0 0
        %2186 = vmatmul.mubr.bf16.gmra.mrb[0].mxu0 %v812
        %v2187 = vpop.f32.mrb[0].mxu0
        %v2188 = vadd.f32 %v2027, %v2187
        %v2189 = vpop.f32.mrb[0].mxu0
        %v2190 = vpop.f32.mrb[0].mxu0
        %v2191 = vadd.f32 %v2030, %v2190
        %v2192 = vpop.f32.mrb[0].mxu0
        %2193 = vmatprep.mubr.bf16.mxu0 0
        %2194 = vmatmul.mubr.bf16.gmra.mrb[0].mxu0 %v733
        %v2195 = vpop.f32.mrb[0].mxu0
        %v2196 = vadd.f32 %v2035, %v2195
        %v2197 = vpop.f32.mrb[0].mxu0
        %v2198 = vpop.f32.mrb[0].mxu0
        %v2199 = vadd.f32 %v2038, %v2198
        %v2200 = vpop.f32.mrb[0].mxu0
        %2201 = vdwg.mxu0
        %v2202 = vadd.f32 %v2076, %v2079
        %v2203 = vadd.f32 %v2202, %v2084
        %v2204 = vadd.f32 %v2203, %v2087
        %v2205 = vadd.f32 %v2204, %v2092
        %v2206 = vadd.f32 %v2205, %v2095
        %v2207 = vadd.f32 %v2206, %v2100
        %v2208 = vadd.f32 %v2207, %v2103
        %v2209 = vadd.f32 %v2208, %v2108
        %v2210 = vadd.f32 %v2209, %v2111
        %v2211 = vadd.f32 %v2210, %v2116
        %v2212 = vadd.f32 %v2211, %v2119
        %v2213 = vadd.f32 %v2212, %v2124
        %v2214 = vadd.f32 %v2213, %v2127
        %v2215 = vadd.f32 %v2214, %v2132
        %v2216 = vadd.f32 %v2215, %v2135
        %v2217 = vadd.f32 %v2216, %v2140
        %v2218 = vadd.f32 %v2217, %v2143
        %v2219 = vadd.f32 %v2218, %v2148
        %v2220 = vadd.f32 %v2219, %v2151
        %v2221 = vadd.f32 %v2220, %v2156
        %v2222 = vadd.f32 %v2221, %v2159
        %v2223 = vadd.f32 %v2222, %v2164
        %v2224 = vadd.f32 %v2223, %v2167
        %v2225 = vadd.f32 %v2224, %v2172
        %v2226 = vadd.f32 %v2225, %v2175
        %v2227 = vadd.f32 %v2226, %v2180
        %v2228 = vadd.f32 %v2227, %v2183
        %v2229 = vadd.f32 %v2228, %v2188
        %v2230 = vadd.f32 %v2229, %v2191
        %v2231 = vadd.f32 %v2230, %v2196
        %v2232 = vadd.f32 %v2231, %v2199
        %v2233 = vrot.slane %v2232, 4
        %v2234 = vadd.f32 %v2232, %v2233
        %v2235 = vrot.slane %v2234, 2
        %v2236 = vadd.f32 %v2234, %v2235
        %v2237 = vrot.slane %v2236, 1
        %v2238 = vadd.f32 %v2236, %v2237
        %v2239 = vrcp.pop 256.0
        %v2240 = vmul.f32 %v2238, %v2239
        %v2241 = vpack.c.bf16 %v2240, %v2240
        %v2242 = vld [vmem:[%s3] sm:$0xf]
        %v2243 = vld [vmem:[%s3 + $0x4] sm:$0xf]
        %v2244 = vld [vmem:[%s3 + $0x8] sm:$0xf]
        %v2245 = vld [vmem:[%s3 + $0xc] sm:$0xf]
        %v2246 = vld [vmem:[%s3 + $0x10] sm:$0xf]
        %v2247 = vld [vmem:[%s3 + $0x14] sm:$0xf]
        %v2248 = vld [vmem:[%s3 + $0x18] sm:$0xf]
        %v2249 = vld [vmem:[%s3 + $0x1c] sm:$0xf]
        %v2250 = vld [vmem:[%s3 + $0x20] sm:$0xf]
        %v2251 = vld [vmem:[%s3 + $0x24] sm:$0xf]
        %v2252 = vld [vmem:[%s3 + $0x28] sm:$0xf]
        %v2253 = vld [vmem:[%s3 + $0x2c] sm:$0xf]
        %v2254 = vld [vmem:[%s3 + $0x30] sm:$0xf]
        %v2255 = vld [vmem:[%s3 + $0x34] sm:$0xf]
        %v2256 = vld [vmem:[%s3 + $0x38] sm:$0xf]
        %v2257 = vld [vmem:[%s3 + $0x3c] sm:$0xf]
        %v2274 = vunpack.c.l.b16 %v2242
        %v2275 = vunpack.c.l.b16 %v2243
        %v2276 = vunpack.c.l.b16 %v2244
        %v2277 = vunpack.c.l.b16 %v2245
        %v2278 = vunpack.c.l.b16 %v2246
        %v2279 = vunpack.c.l.b16 %v2247
        %v2280 = vunpack.c.l.b16 %v2248
        %v2281 = vunpack.c.l.b16 %v2249
        %v2282 = vunpack.c.l.b16 %v2250
        %v2283 = vunpack.c.l.b16 %v2251
        %v2284 = vunpack.c.l.b16 %v2252
        %v2285 = vunpack.c.l.b16 %v2253
        %v2286 = vunpack.c.l.b16 %v2254
        %v2287 = vunpack.c.l.b16 %v2255
        %v2288 = vunpack.c.l.b16 %v2256
        %v2289 = vunpack.c.l.b16 %v2257
        %v2290 = vpack.c.b16 %v2275, %v2274
        %v2291 = vpack.c.b16 %v2277, %v2276
        %v2292 = vpack.c.b16 %v2279, %v2278
        %v2293 = vpack.c.b16 %v2281, %v2280
        %v2294 = vpack.c.b16 %v2283, %v2282
        %v2295 = vpack.c.b16 %v2285, %v2284
        %v2296 = vpack.c.b16 %v2287, %v2286
        %v2297 = vpack.c.b16 %v2289, %v2288
        %2306 = vmatprep.subr.bf16.mxu0 0
        %2307 = vmatpush1.bf16.msra.mxu0 %v2290
        %2308 = vmatprep.subr.bf16.mxu0 0
        %2309 = vmatpush1.bf16.msra.mxu0 %v2291
        %2310 = vmatprep.subr.bf16.mxu0 0
        %2311 = vmatpush1.bf16.msra.mxu0 %v2292
        %2312 = vmatprep.subr.bf16.mxu0 0
        %2313 = vmatpush1.bf16.msra.mxu0 %v2293
        %2314 = vmatprep.subr.bf16.mxu0 0
        %2315 = vmatpush1.bf16.msra.mxu0 %v2294
        %2316 = vmatprep.subr.bf16.mxu0 0
        %2317 = vmatpush1.bf16.msra.mxu0 %v2295
        %2318 = vmatprep.subr.bf16.mxu0 0
        %2319 = vmatpush1.bf16.msra.mxu0 %v2296
        %2320 = vmatprep.subr.bf16.mxu0 0
        %2321 = vmatpush1.bf16.msra.mxu0 %v2297
        %2322 = vmatprep.subr.bf16.mxu0 0
        %2323 = vmatpush1.bf16.msra.mxu0 0
        %2324 = vmatprep.subr.bf16.mxu0 0
        %2325 = vmatpush1.bf16.msra.mxu0 0
        %2326 = vmatprep.subr.bf16.mxu0 0
        %2327 = vmatpush1.bf16.msra.mxu0 0
        %2328 = vmatprep.subr.bf16.mxu0 0
        %2329 = vmatpush1.bf16.msra.mxu0 0
        %2330 = vmatprep.subr.bf16.mxu0 0
        %2331 = vmatpush1.bf16.msra.mxu0 0
        %2332 = vmatprep.subr.bf16.mxu0 0
        %2333 = vmatpush1.bf16.msra.mxu0 0
        %2334 = vmatprep.subr.bf16.mxu0 0
        %2335 = vmatpush1.bf16.msra.mxu0 0
        %2336 = vmatprep.subr.bf16.mxu0 0
        %2337 = vmatpush1.bf16.msra.mxu0 0
        %2338 = vmatprep.mubr.bf16.mxu0 0
        %2339 = vmatmul.mubr.bf16.gmra.mrb[0].mxu0 %v2241
        %v2340 = vpop.f32.mrb[0].mxu0
        %v2341 = vadd.f32 0.0, %v2340
        %v2342 = vpop.f32.mrb[0].mxu0
        %v2343 = vpop.f32.mrb[0].mxu0
        %v2344 = vpop.f32.mrb[0].mxu0
        %2345 = vdwg.mxu0
        %v2346 = vmax.f32 %v2341, 0.0
        %v2347 = vpack.c.bf16 %v2346, %v2346
        %v2348 = vld [vmem:[%s4] sm:$0xf]
        %v2349 = vld [vmem:[%s4 + $0x4] sm:$0xf]
        %v2350 = vld [vmem:[%s4 + $0x8] sm:$0xf]
        %v2351 = vld [vmem:[%s4 + $0xc] sm:$0xf]
        %v2356 = vunpack.c.l.b16 %v2348
        %v2357 = vunpack.c.l.b16 %v2349
        %v2358 = vunpack.c.l.b16 %v2350
        %v2359 = vunpack.c.l.b16 %v2351
        %v2360 = vpack.c.b16 %v2357, %v2356
        %v2361 = vpack.c.b16 %v2359, %v2358
        %vm2364 = vcmask 261120
        %v2366 = vsel %vm2364, %v2347, 0
        %2368 = vmatprep.subr.bf16.mxu0 0
        %2369 = vmatpush1.bf16.msra.mxu0 %v2360
        %2370 = vmatprep.subr.bf16.mxu0 0
        %2371 = vmatpush1.bf16.msra.mxu0 %v2361
        %2372 = vmatprep.subr.bf16.mxu0 0
        %2373 = vmatpush1.bf16.msra.mxu0 0
        %2374 = vmatprep.subr.bf16.mxu0 0
        %2375 = vmatpush1.bf16.msra.mxu0 0
        %2376 = vmatprep.subr.bf16.mxu0 0
        %2377 = vmatpush1.bf16.msra.mxu0 0
        %2378 = vmatprep.subr.bf16.mxu0 0
        %2379 = vmatpush1.bf16.msra.mxu0 0
        %2380 = vmatprep.subr.bf16.mxu0 0
        %2381 = vmatpush1.bf16.msra.mxu0 0
        %2382 = vmatprep.subr.bf16.mxu0 0
        %2383 = vmatpush1.bf16.msra.mxu0 0
        %2384 = vmatprep.subr.bf16.mxu0 0
        %2385 = vmatpush1.bf16.msra.mxu0 0
        %2386 = vmatprep.subr.bf16.mxu0 0
        %2387 = vmatpush1.bf16.msra.mxu0 0
        %2388 = vmatprep.subr.bf16.mxu0 0
        %2389 = vmatpush1.bf16.msra.mxu0 0
        %2390 = vmatprep.subr.bf16.mxu0 0
        %2391 = vmatpush1.bf16.msra.mxu0 0
        %2392 = vmatprep.subr.bf16.mxu0 0
        %2393 = vmatpush1.bf16.msra.mxu0 0
        %2394 = vmatprep.subr.bf16.mxu0 0
        %2395 = vmatpush1.bf16.msra.mxu0 0
        %2396 = vmatprep.subr.bf16.mxu0 0
        %2397 = vmatpush1.bf16.msra.mxu0 0
        %2398 = vmatprep.subr.bf16.mxu0 0
        %2399 = vmatpush1.bf16.msra.mxu0 0
        %2400 = vmatprep.mubr.bf16.mxu0 0
        %2401 = vmatmul.mubr.bf16.gmra.mrb[0].mxu0 %v2366
        %v2402 = vpop.f32.mrb[0].mxu0
        %v2403 = vadd.f32 0.0, %v2402
        %v2404 = vpop.f32.mrb[0].mxu0
        %v2405 = vpop.f32.mrb[0].mxu0
        %v2406 = vpop.f32.mrb[0].mxu0
        %2407 = vdwg.mxu0
        %v2408 = vxor.u32 %v2403, 2147483648
        %v2409 = vmul.f32 %v2408, 1.442695
        %v2410 = vpow.pop %v2409
        %v2411 = vadd.f32 %v2410, 1.0
        %v2412 = vrcp.pop %v2411
        %v2413 = vmul.f32 1.0, %v2412
        %v2414 = vlaneseq
        %v2415 = vshrl.u32 %v2414, 7
        %v2416 = vsub.s32 0, %v2415
        %v2417 = vrot.slane %v2413, %v2416
        %v2418 = vmul.f32 %v2076, %v2417
        %v2419 = vmul.f32 %v2079, %v2417
        %v2420 = vmul.f32 %v2084, %v2417
        %v2421 = vmul.f32 %v2087, %v2417
        %v2422 = vmul.f32 %v2092, %v2417
        %v2423 = vmul.f32 %v2095, %v2417
        %v2424 = vmul.f32 %v2100, %v2417
        %v2425 = vmul.f32 %v2103, %v2417
        %v2426 = vmul.f32 %v2108, %v2417
        %v2427 = vmul.f32 %v2111, %v2417
        %v2428 = vmul.f32 %v2116, %v2417
        %v2429 = vmul.f32 %v2119, %v2417
        %v2430 = vmul.f32 %v2124, %v2417
        %v2431 = vmul.f32 %v2127, %v2417
        %v2432 = vmul.f32 %v2132, %v2417
        %v2433 = vmul.f32 %v2135, %v2417
        %v2434 = vmul.f32 %v2140, %v2417
        %v2435 = vmul.f32 %v2143, %v2417
        %v2436 = vmul.f32 %v2148, %v2417
        %v2437 = vmul.f32 %v2151, %v2417
        %v2438 = vmul.f32 %v2156, %v2417
        %v2439 = vmul.f32 %v2159, %v2417
        %v2440 = vmul.f32 %v2164, %v2417
        %v2441 = vmul.f32 %v2167, %v2417
        %v2442 = vmul.f32 %v2172, %v2417
        %v2443 = vmul.f32 %v2175, %v2417
        %v2444 = vmul.f32 %v2180, %v2417
        %v2445 = vmul.f32 %v2183, %v2417
        %v2446 = vmul.f32 %v2188, %v2417
        %v2447 = vmul.f32 %v2191, %v2417
        %v2448 = vmul.f32 %v2196, %v2417
        %v2449 = vmul.f32 %v2199, %v2417
        %v2450 = vpack.c.bf16 %v2419, %v2418
        %v2451 = vpack.c.bf16 %v2421, %v2420
        %v2452 = vpack.c.bf16 %v2423, %v2422
        %v2453 = vpack.c.bf16 %v2425, %v2424
        %v2454 = vpack.c.bf16 %v2427, %v2426
        %v2455 = vpack.c.bf16 %v2429, %v2428
        %v2456 = vpack.c.bf16 %v2431, %v2430
        %v2457 = vpack.c.bf16 %v2433, %v2432
        %v2458 = vpack.c.bf16 %v2435, %v2434
        %v2459 = vpack.c.bf16 %v2437, %v2436
        %v2460 = vpack.c.bf16 %v2439, %v2438
        %v2461 = vpack.c.bf16 %v2441, %v2440
        %v2462 = vpack.c.bf16 %v2443, %v2442
        %v2463 = vpack.c.bf16 %v2445, %v2444
        %v2464 = vpack.c.bf16 %v2447, %v2446
        %v2465 = vpack.c.bf16 %v2449, %v2448
        %v2467 = vshrl.u32 %v2450, 16
        %v2469 = vrot.slane %v2467, 7
        %v2470 = vshll.u32 %v2450, 16
        %v2472 = vor.u32 %v2469, %v2470
        %v2474 = vshrl.u32 %v2451, 16
        %v2476 = vrot.slane %v2474, 7
        %v2477 = vshll.u32 %v2451, 16
        %v2479 = vor.u32 %v2476, %v2477
        %v2481 = vshrl.u32 %v2452, 16
        %v2483 = vrot.slane %v2481, 7
        %v2484 = vshll.u32 %v2452, 16
        %v2486 = vor.u32 %v2483, %v2484
        %v2488 = vshrl.u32 %v2453, 16
        %v2490 = vrot.slane %v2488, 7
        %v2491 = vshll.u32 %v2453, 16
        %v2493 = vor.u32 %v2490, %v2491
        %v2495 = vshrl.u32 %v2454, 16
        %v2497 = vrot.slane %v2495, 7
        %v2498 = vshll.u32 %v2454, 16
        %v2500 = vor.u32 %v2497, %v2498
        %v2502 = vshrl.u32 %v2455, 16
        %v2504 = vrot.slane %v2502, 7
        %v2505 = vshll.u32 %v2455, 16
        %v2507 = vor.u32 %v2504, %v2505
        %v2509 = vshrl.u32 %v2456, 16
        %v2511 = vrot.slane %v2509, 7
        %v2512 = vshll.u32 %v2456, 16
        %v2514 = vor.u32 %v2511, %v2512
        %v2516 = vshrl.u32 %v2457, 16
        %v2518 = vrot.slane %v2516, 7
        %v2519 = vshll.u32 %v2457, 16
        %v2521 = vor.u32 %v2518, %v2519
        %v2523 = vshrl.u32 %v2458, 16
        %v2525 = vrot.slane %v2523, 7
        %v2526 = vshll.u32 %v2458, 16
        %v2528 = vor.u32 %v2525, %v2526
        %v2530 = vshrl.u32 %v2459, 16
        %v2532 = vrot.slane %v2530, 7
        %v2533 = vshll.u32 %v2459, 16
        %v2535 = vor.u32 %v2532, %v2533
        %v2537 = vshrl.u32 %v2460, 16
        %v2539 = vrot.slane %v2537, 7
        %v2540 = vshll.u32 %v2460, 16
        %v2542 = vor.u32 %v2539, %v2540
        %v2544 = vshrl.u32 %v2461, 16
        %v2546 = vrot.slane %v2544, 7
        %v2547 = vshll.u32 %v2461, 16
        %v2549 = vor.u32 %v2546, %v2547
        %v2551 = vshrl.u32 %v2462, 16
        %v2553 = vrot.slane %v2551, 7
        %v2554 = vshll.u32 %v2462, 16
        %v2556 = vor.u32 %v2553, %v2554
        %v2558 = vshrl.u32 %v2463, 16
        %v2560 = vrot.slane %v2558, 7
        %v2561 = vshll.u32 %v2463, 16
        %v2563 = vor.u32 %v2560, %v2561
        %v2565 = vshrl.u32 %v2464, 16
        %v2567 = vrot.slane %v2565, 7
        %v2568 = vshll.u32 %v2464, 16
        %v2570 = vor.u32 %v2567, %v2568
        %v2572 = vshrl.u32 %v2465, 16
        %v2574 = vrot.slane %v2572, 7
        %v2575 = vshll.u32 %v2465, 16
        %v2577 = vor.u32 %v2574, %v2575
        %v2610 = vsel %vm454, 0, %v2472
        %v2611 = vsel %vm454, 0, %v2479
        %v2612 = vsel %vm454, 0, %v2486
        %v2613 = vsel %vm454, 0, %v2493
        %v2614 = vsel %vm454, 0, %v2500
        %v2615 = vsel %vm454, 0, %v2507
        %v2616 = vsel %vm454, 0, %v2514
        %v2617 = vsel %vm454, 0, %v2521
        %v2618 = vsel %vm454, 0, %v2528
        %v2619 = vsel %vm454, 0, %v2535
        %v2620 = vsel %vm454, 0, %v2542
        %v2621 = vsel %vm454, 0, %v2549
        %v2622 = vsel %vm454, 0, %v2556
        %v2623 = vsel %vm454, 0, %v2563
        %v2624 = vsel %vm454, 0, %v2570
        %v2625 = vsel %vm454, 0, %v2577
        %v2626 = vsel %vm454, %v2469, 0
        %v2627 = vsel %vm454, %v2476, 0
        %v2628 = vsel %vm454, %v2483, 0
        %v2629 = vsel %vm454, %v2490, 0
        %v2630 = vsel %vm454, %v2497, 0
        %v2631 = vsel %vm454, %v2504, 0
        %v2632 = vsel %vm454, %v2511, 0
        %v2633 = vsel %vm454, %v2518, 0
        %v2634 = vsel %vm454, %v2525, 0
        %v2635 = vsel %vm454, %v2532, 0
        %v2636 = vsel %vm454, %v2539, 0
        %v2637 = vsel %vm454, %v2546, 0
        %v2638 = vsel %vm454, %v2553, 0
        %v2639 = vsel %vm454, %v2560, 0
        %v2640 = vsel %vm454, %v2567, 0
        %v2641 = vsel %vm454, %v2574, 0
        %v2643 = vshrl.u32 %v2610, 16
        %v2645 = vshll.u32 %v2610, 16
        %v2647 = vrot.slane %v2645, 1
        %v2648 = vor.u32 %v2643, %v2647
        %v2650 = vshll.u32 %v2626, 16
        %v2652 = vrot.slane %v2650, 1
        %v2653 = vsel %vm489, %v2648, %v2652
        %v2655 = vshrl.u32 %v2611, 16
        %v2657 = vshll.u32 %v2611, 16
        %v2659 = vrot.slane %v2657, 1
        %v2660 = vor.u32 %v2655, %v2659
        %v2662 = vshll.u32 %v2627, 16
        %v2664 = vrot.slane %v2662, 1
        %v2665 = vsel %vm489, %v2660, %v2664
        %v2667 = vshrl.u32 %v2612, 16
        %v2669 = vshll.u32 %v2612, 16
        %v2671 = vrot.slane %v2669, 1
        %v2672 = vor.u32 %v2667, %v2671
        %v2674 = vshll.u32 %v2628, 16
        %v2676 = vrot.slane %v2674, 1
        %v2677 = vsel %vm489, %v2672, %v2676
        %v2679 = vshrl.u32 %v2613, 16
        %v2681 = vshll.u32 %v2613, 16
        %v2683 = vrot.slane %v2681, 1
        %v2684 = vor.u32 %v2679, %v2683
        %v2686 = vshll.u32 %v2629, 16
        %v2688 = vrot.slane %v2686, 1
        %v2689 = vsel %vm489, %v2684, %v2688
        %v2691 = vshrl.u32 %v2614, 16
        %v2693 = vshll.u32 %v2614, 16
        %v2695 = vrot.slane %v2693, 1
        %v2696 = vor.u32 %v2691, %v2695
        %v2698 = vshll.u32 %v2630, 16
        %v2700 = vrot.slane %v2698, 1
        %v2701 = vsel %vm489, %v2696, %v2700
        %v2703 = vshrl.u32 %v2615, 16
        %v2705 = vshll.u32 %v2615, 16
        %v2707 = vrot.slane %v2705, 1
        %v2708 = vor.u32 %v2703, %v2707
        %v2710 = vshll.u32 %v2631, 16
        %v2712 = vrot.slane %v2710, 1
        %v2713 = vsel %vm489, %v2708, %v2712
        %v2715 = vshrl.u32 %v2616, 16
        %v2717 = vshll.u32 %v2616, 16
        %v2719 = vrot.slane %v2717, 1
        %v2720 = vor.u32 %v2715, %v2719
        %v2722 = vshll.u32 %v2632, 16
        %v2724 = vrot.slane %v2722, 1
        %v2725 = vsel %vm489, %v2720, %v2724
        %v2727 = vshrl.u32 %v2617, 16
        %v2729 = vshll.u32 %v2617, 16
        %v2731 = vrot.slane %v2729, 1
        %v2732 = vor.u32 %v2727, %v2731
        %v2734 = vshll.u32 %v2633, 16
        %v2736 = vrot.slane %v2734, 1
        %v2737 = vsel %vm489, %v2732, %v2736
        %v2739 = vshrl.u32 %v2618, 16
        %v2741 = vshll.u32 %v2618, 16
        %v2743 = vrot.slane %v2741, 1
        %v2744 = vor.u32 %v2739, %v2743
        %v2746 = vshll.u32 %v2634, 16
        %v2748 = vrot.slane %v2746, 1
        %v2749 = vsel %vm489, %v2744, %v2748
        %v2751 = vshrl.u32 %v2619, 16
        %v2753 = vshll.u32 %v2619, 16
        %v2755 = vrot.slane %v2753, 1
        %v2756 = vor.u32 %v2751, %v2755
        %v2758 = vshll.u32 %v2635, 16
        %v2760 = vrot.slane %v2758, 1
        %v2761 = vsel %vm489, %v2756, %v2760
        %v2763 = vshrl.u32 %v2620, 16
        %v2765 = vshll.u32 %v2620, 16
        %v2767 = vrot.slane %v2765, 1
        %v2768 = vor.u32 %v2763, %v2767
        %v2770 = vshll.u32 %v2636, 16
        %v2772 = vrot.slane %v2770, 1
        %v2773 = vsel %vm489, %v2768, %v2772
        %v2775 = vshrl.u32 %v2621, 16
        %v2777 = vshll.u32 %v2621, 16
        %v2779 = vrot.slane %v2777, 1
        %v2780 = vor.u32 %v2775, %v2779
        %v2782 = vshll.u32 %v2637, 16
        %v2784 = vrot.slane %v2782, 1
        %v2785 = vsel %vm489, %v2780, %v2784
        %v2787 = vshrl.u32 %v2622, 16
        %v2789 = vshll.u32 %v2622, 16
        %v2791 = vrot.slane %v2789, 1
        %v2792 = vor.u32 %v2787, %v2791
        %v2794 = vshll.u32 %v2638, 16
        %v2796 = vrot.slane %v2794, 1
        %v2797 = vsel %vm489, %v2792, %v2796
        %v2799 = vshrl.u32 %v2623, 16
        %v2801 = vshll.u32 %v2623, 16
        %v2803 = vrot.slane %v2801, 1
        %v2804 = vor.u32 %v2799, %v2803
        %v2806 = vshll.u32 %v2639, 16
        %v2808 = vrot.slane %v2806, 1
        %v2809 = vsel %vm489, %v2804, %v2808
        %v2811 = vshrl.u32 %v2624, 16
        %v2813 = vshll.u32 %v2624, 16
        %v2815 = vrot.slane %v2813, 1
        %v2816 = vor.u32 %v2811, %v2815
        %v2818 = vshll.u32 %v2640, 16
        %v2820 = vrot.slane %v2818, 1
        %v2821 = vsel %vm489, %v2816, %v2820
        %v2867 = vrot.slane %v2610, 1
        %v2868 = vrot.slane %v2626, 1
        %v2869 = vsel %vm730, %v2867, %v2868
        %v2870 = vrot.slane %v2611, 1
        %v2871 = vrot.slane %v2627, 1
        %v2872 = vsel %vm730, %v2870, %v2871
        %v2873 = vrot.slane %v2612, 1
        %v2874 = vrot.slane %v2628, 1
        %v2875 = vsel %vm730, %v2873, %v2874
        %v2876 = vrot.slane %v2613, 1
        %v2877 = vrot.slane %v2629, 1
        %v2878 = vsel %vm730, %v2876, %v2877
        %v2879 = vrot.slane %v2614, 1
        %v2880 = vrot.slane %v2630, 1
        %v2881 = vsel %vm730, %v2879, %v2880
        %v2882 = vrot.slane %v2615, 1
        %v2883 = vrot.slane %v2631, 1
        %v2884 = vsel %vm730, %v2882, %v2883
        %v2885 = vrot.slane %v2616, 1
        %v2886 = vrot.slane %v2632, 1
        %v2887 = vsel %vm730, %v2885, %v2886
        %v2888 = vrot.slane %v2617, 1
        %v2889 = vrot.slane %v2633, 1
        %v2890 = vsel %vm730, %v2888, %v2889
        %v2891 = vrot.slane %v2618, 1
        %v2892 = vrot.slane %v2634, 1
        %v2893 = vsel %vm730, %v2891, %v2892
        %v2894 = vrot.slane %v2619, 1
        %v2895 = vrot.slane %v2635, 1
        %v2896 = vsel %vm730, %v2894, %v2895
        %v2897 = vrot.slane %v2620, 1
        %v2898 = vrot.slane %v2636, 1
        %v2899 = vsel %vm730, %v2897, %v2898
        %v2900 = vrot.slane %v2621, 1
        %v2901 = vrot.slane %v2637, 1
        %v2902 = vsel %vm730, %v2900, %v2901
        %v2903 = vrot.slane %v2622, 1
        %v2904 = vrot.slane %v2638, 1
        %v2905 = vsel %vm730, %v2903, %v2904
        %v2906 = vrot.slane %v2623, 1
        %v2907 = vrot.slane %v2639, 1
        %v2908 = vsel %vm730, %v2906, %v2907
        %v2909 = vrot.slane %v2624, 1
        %v2910 = vrot.slane %v2640, 1
        %v2911 = vsel %vm730, %v2909, %v2910
        %v2928 = vshrl.u32 %v2625, 16
        %v2930 = vshll.u32 %v2625, 16
        %v2932 = vrot.slane %v2930, 1
        %v2933 = vor.u32 %v2928, %v2932
        %v2935 = vshll.u32 %v2641, 16
        %v2937 = vrot.slane %v2935, 1
        %v2938 = vsel %vm489, %v2933, %v2937
        %v2942 = vrot.slane %v2625, 1
        %v2943 = vrot.slane %v2641, 1
        %v2944 = vsel %vm730, %v2942, %v2943
        %v2946 = vld [vmem:[%s5] sm:$0xf]
        %v2947 = vld [vmem:[%s5 + $0x4] sm:$0xf]
        %v2948 = vld [vmem:[%s5 + $0x8] sm:$0xf]
        %v2949 = vld [vmem:[%s5 + $0xc] sm:$0xf]
        %v2950 = vld [vmem:[%s5 + $0x10] sm:$0xf]
        %v2951 = vld [vmem:[%s5 + $0x14] sm:$0xf]
        %v2952 = vld [vmem:[%s5 + $0x18] sm:$0xf]
        %v2953 = vld [vmem:[%s5 + $0x1c] sm:$0xf]
        %v2954 = vld [vmem:[%s5 + $0x20] sm:$0xf]
        %v2955 = vld [vmem:[%s5 + $0x24] sm:$0xf]
        %v2956 = vld [vmem:[%s5 + $0x28] sm:$0xf]
        %v2957 = vld [vmem:[%s5 + $0x2c] sm:$0xf]
        %v2958 = vld [vmem:[%s5 + $0x30] sm:$0xf]
        %v2959 = vld [vmem:[%s5 + $0x34] sm:$0xf]
        %v2960 = vld [vmem:[%s5 + $0x38] sm:$0xf]
        %v2961 = vld [vmem:[%s5 + $0x3c] sm:$0xf]
        %v2962 = vld [vmem:[%s5 + $0x40] sm:$0xf]
        %v2963 = vld [vmem:[%s5 + $0x44] sm:$0xf]
        %v2964 = vld [vmem:[%s5 + $0x48] sm:$0xf]
        %v2965 = vld [vmem:[%s5 + $0x4c] sm:$0xf]
        %v2966 = vld [vmem:[%s5 + $0x50] sm:$0xf]
        %v2967 = vld [vmem:[%s5 + $0x54] sm:$0xf]
        %v2968 = vld [vmem:[%s5 + $0x58] sm:$0xf]
        %v2969 = vld [vmem:[%s5 + $0x5c] sm:$0xf]
        %v2970 = vld [vmem:[%s5 + $0x60] sm:$0xf]
        %v2971 = vld [vmem:[%s5 + $0x64] sm:$0xf]
        %v2972 = vld [vmem:[%s5 + $0x68] sm:$0xf]
        %v2973 = vld [vmem:[%s5 + $0x6c] sm:$0xf]
        %v2974 = vld [vmem:[%s5 + $0x70] sm:$0xf]
        %v2975 = vld [vmem:[%s5 + $0x74] sm:$0xf]
        %v2976 = vld [vmem:[%s5 + $0x78] sm:$0xf]
        %v2977 = vld [vmem:[%s5 + $0x7c] sm:$0xf]
        %v2978 = vld [vmem:[%s5 + $0x80] sm:$0xf]
        %v2979 = vld [vmem:[%s5 + $0x84] sm:$0xf]
        %v2980 = vld [vmem:[%s5 + $0x88] sm:$0xf]
        %v2981 = vld [vmem:[%s5 + $0x8c] sm:$0xf]
        %v2982 = vld [vmem:[%s5 + $0x90] sm:$0xf]
        %v2983 = vld [vmem:[%s5 + $0x94] sm:$0xf]
        %v2984 = vld [vmem:[%s5 + $0x98] sm:$0xf]
        %v2985 = vld [vmem:[%s5 + $0x9c] sm:$0xf]
        %v2986 = vld [vmem:[%s5 + $0xa0] sm:$0xf]
        %v2987 = vld [vmem:[%s5 + $0xa4] sm:$0xf]
        %v2988 = vld [vmem:[%s5 + $0xa8] sm:$0xf]
        %v2989 = vld [vmem:[%s5 + $0xac] sm:$0xf]
        %v2990 = vld [vmem:[%s5 + $0xb0] sm:$0xf]
        %v2991 = vld [vmem:[%s5 + $0xb4] sm:$0xf]
        %v2992 = vld [vmem:[%s5 + $0xb8] sm:$0xf]
        %v2993 = vld [vmem:[%s5 + $0xbc] sm:$0xf]
        %v2994 = vld [vmem:[%s5 + $0xc0] sm:$0xf]
        %v2995 = vld [vmem:[%s5 + $0xc4] sm:$0xf]
        %v2996 = vld [vmem:[%s5 + $0xc8] sm:$0xf]
        %v2997 = vld [vmem:[%s5 + $0xcc] sm:$0xf]
        %v2998 = vld [vmem:[%s5 + $0xd0] sm:$0xf]
        %v2999 = vld [vmem:[%s5 + $0xd4] sm:$0xf]
        %v3000 = vld [vmem:[%s5 + $0xd8] sm:$0xf]
        %v3001 = vld [vmem:[%s5 + $0xdc] sm:$0xf]
        %v3002 = vld [vmem:[%s5 + $0xe0] sm:$0xf]
        %v3003 = vld [vmem:[%s5 + $0xe4] sm:$0xf]
        %v3004 = vld [vmem:[%s5 + $0xe8] sm:$0xf]
        %v3005 = vld [vmem:[%s5 + $0xec] sm:$0xf]
        %v3006 = vld [vmem:[%s5 + $0xf0] sm:$0xf]
        %v3007 = vld [vmem:[%s5 + $0xf4] sm:$0xf]
        %v3008 = vld [vmem:[%s5 + $0xf8] sm:$0xf]
        %v3009 = vld [vmem:[%s5 + $0xfc] sm:$0xf]
        %v3010 = vld [vmem:[%s5 + $0x100] sm:$0xf]
        %v3011 = vld [vmem:[%s5 + $0x104] sm:$0xf]
        %v3012 = vld [vmem:[%s5 + $0x108] sm:$0xf]
        %v3013 = vld [vmem:[%s5 + $0x10c] sm:$0xf]
        %v3014 = vld [vmem:[%s5 + $0x110] sm:$0xf]
        %v3015 = vld [vmem:[%s5 + $0x114] sm:$0xf]
        %v3016 = vld [vmem:[%s5 + $0x118] sm:$0xf]
        %v3017 = vld [vmem:[%s5 + $0x11c] sm:$0xf]
        %v3018 = vld [vmem:[%s5 + $0x120] sm:$0xf]
        %v3019 = vld [vmem:[%s5 + $0x124] sm:$0xf]
        %v3020 = vld [vmem:[%s5 + $0x128] sm:$0xf]
        %v3021 = vld [vmem:[%s5 + $0x12c] sm:$0xf]
        %v3022 = vld [vmem:[%s5 + $0x130] sm:$0xf]
        %v3023 = vld [vmem:[%s5 + $0x134] sm:$0xf]
        %v3024 = vld [vmem:[%s5 + $0x138] sm:$0xf]
        %v3025 = vld [vmem:[%s5 + $0x13c] sm:$0xf]
        %v3026 = vld [vmem:[%s5 + $0x140] sm:$0xf]
        %v3027 = vld [vmem:[%s5 + $0x144] sm:$0xf]
        %v3028 = vld [vmem:[%s5 + $0x148] sm:$0xf]
        %v3029 = vld [vmem:[%s5 + $0x14c] sm:$0xf]
        %v3030 = vld [vmem:[%s5 + $0x150] sm:$0xf]
        %v3031 = vld [vmem:[%s5 + $0x154] sm:$0xf]
        %v3032 = vld [vmem:[%s5 + $0x158] sm:$0xf]
        %v3033 = vld [vmem:[%s5 + $0x15c] sm:$0xf]
        %v3034 = vld [vmem:[%s5 + $0x160] sm:$0xf]
        %v3035 = vld [vmem:[%s5 + $0x164] sm:$0xf]
        %v3036 = vld [vmem:[%s5 + $0x168] sm:$0xf]
        %v3037 = vld [vmem:[%s5 + $0x16c] sm:$0xf]
        %v3038 = vld [vmem:[%s5 + $0x170] sm:$0xf]
        %v3039 = vld [vmem:[%s5 + $0x174] sm:$0xf]
        %v3040 = vld [vmem:[%s5 + $0x178] sm:$0xf]
        %v3041 = vld [vmem:[%s5 + $0x17c] sm:$0xf]
        %v3042 = vld [vmem:[%s5 + $0x180] sm:$0xf]
        %v3043 = vld [vmem:[%s5 + $0x184] sm:$0xf]
        %v3044 = vld [vmem:[%s5 + $0x188] sm:$0xf]
        %v3045 = vld [vmem:[%s5 + $0x18c] sm:$0xf]
        %v3046 = vld [vmem:[%s5 + $0x190] sm:$0xf]
        %v3047 = vld [vmem:[%s5 + $0x194] sm:$0xf]
        %v3048 = vld [vmem:[%s5 + $0x198] sm:$0xf]
        %v3049 = vld [vmem:[%s5 + $0x19c] sm:$0xf]
        %v3050 = vld [vmem:[%s5 + $0x1a0] sm:$0xf]
        %v3051 = vld [vmem:[%s5 + $0x1a4] sm:$0xf]
        %v3052 = vld [vmem:[%s5 + $0x1a8] sm:$0xf]
        %v3053 = vld [vmem:[%s5 + $0x1ac] sm:$0xf]
        %v3054 = vld [vmem:[%s5 + $0x1b0] sm:$0xf]
        %v3055 = vld [vmem:[%s5 + $0x1b4] sm:$0xf]
        %v3056 = vld [vmem:[%s5 + $0x1b8] sm:$0xf]
        %v3057 = vld [vmem:[%s5 + $0x1bc] sm:$0xf]
        %v3058 = vld [vmem:[%s5 + $0x1c0] sm:$0xf]
        %v3059 = vld [vmem:[%s5 + $0x1c4] sm:$0xf]
        %v3060 = vld [vmem:[%s5 + $0x1c8] sm:$0xf]
        %v3061 = vld [vmem:[%s5 + $0x1cc] sm:$0xf]
        %v3062 = vld [vmem:[%s5 + $0x1d0] sm:$0xf]
        %v3063 = vld [vmem:[%s5 + $0x1d4] sm:$0xf]
        %v3064 = vld [vmem:[%s5 + $0x1d8] sm:$0xf]
        %v3065 = vld [vmem:[%s5 + $0x1dc] sm:$0xf]
        %v3066 = vld [vmem:[%s5 + $0x1e0] sm:$0xf]
        %v3067 = vld [vmem:[%s5 + $0x1e4] sm:$0xf]
        %v3068 = vld [vmem:[%s5 + $0x1e8] sm:$0xf]
        %v3069 = vld [vmem:[%s5 + $0x1ec] sm:$0xf]
        %v3070 = vld [vmem:[%s5 + $0x1f0] sm:$0xf]
        %v3071 = vld [vmem:[%s5 + $0x1f4] sm:$0xf]
        %v3072 = vld [vmem:[%s5 + $0x1f8] sm:$0xf]
        %v3073 = vld [vmem:[%s5 + $0x1fc] sm:$0xf]
        %v3074 = vld [vmem:[%s5 + $0x200] sm:$0xf]
        %v3075 = vld [vmem:[%s5 + $0x204] sm:$0xf]
        %v3076 = vld [vmem:[%s5 + $0x208] sm:$0xf]
        %v3077 = vld [vmem:[%s5 + $0x20c] sm:$0xf]
        %v3078 = vld [vmem:[%s5 + $0x210] sm:$0xf]
        %v3079 = vld [vmem:[%s5 + $0x214] sm:$0xf]
        %v3080 = vld [vmem:[%s5 + $0x218] sm:$0xf]
        %v3081 = vld [vmem:[%s5 + $0x21c] sm:$0xf]
        %v3082 = vld [vmem:[%s5 + $0x220] sm:$0xf]
        %v3083 = vld [vmem:[%s5 + $0x224] sm:$0xf]
        %v3084 = vld [vmem:[%s5 + $0x228] sm:$0xf]
        %v3085 = vld [vmem:[%s5 + $0x22c] sm:$0xf]
        %v3086 = vld [vmem:[%s5 + $0x230] sm:$0xf]
        %v3087 = vld [vmem:[%s5 + $0x234] sm:$0xf]
        %v3088 = vld [vmem:[%s5 + $0x238] sm:$0xf]
        %v3089 = vld [vmem:[%s5 + $0x23c] sm:$0xf]
        %v3234 = vunpack.c.l.b16 %v2946
        %v3235 = vunpack.c.l.b16 %v2947
        %v3236 = vunpack.c.l.b16 %v2948
        %v3237 = vunpack.c.l.b16 %v2949
        %v3238 = vunpack.c.l.b16 %v2950
        %v3239 = vunpack.c.l.b16 %v2951
        %v3240 = vunpack.c.l.b16 %v2952
        %v3241 = vunpack.c.l.b16 %v2953
        %v3242 = vunpack.c.l.b16 %v2954
        %v3243 = vunpack.c.l.b16 %v2955
        %v3244 = vunpack.c.l.b16 %v2956
        %v3245 = vunpack.c.l.b16 %v2957
        %v3246 = vunpack.c.l.b16 %v2958
        %v3247 = vunpack.c.l.b16 %v2959
        %v3248 = vunpack.c.l.b16 %v2960
        %v3249 = vunpack.c.l.b16 %v2961
        %v3250 = vunpack.c.l.b16 %v2962
        %v3251 = vunpack.c.l.b16 %v2963
        %v3252 = vunpack.c.l.b16 %v2964
        %v3253 = vunpack.c.l.b16 %v2965
        %v3254 = vunpack.c.l.b16 %v2966
        %v3255 = vunpack.c.l.b16 %v2967
        %v3256 = vunpack.c.l.b16 %v2968
        %v3257 = vunpack.c.l.b16 %v2969
        %v3258 = vunpack.c.l.b16 %v2970
        %v3259 = vunpack.c.l.b16 %v2971
        %v3260 = vunpack.c.l.b16 %v2972
        %v3261 = vunpack.c.l.b16 %v2973
        %v3262 = vunpack.c.l.b16 %v2974
        %v3263 = vunpack.c.l.b16 %v2975
        %v3264 = vunpack.c.l.b16 %v2976
        %v3265 = vunpack.c.l.b16 %v2977
        %v3266 = vunpack.c.l.b16 %v2978
        %v3267 = vunpack.c.l.b16 %v2979
        %v3268 = vunpack.c.l.b16 %v2980
        %v3269 = vunpack.c.l.b16 %v2981
        %v3270 = vunpack.c.l.b16 %v2982
        %v3271 = vunpack.c.l.b16 %v2983
        %v3272 = vunpack.c.l.b16 %v2984
        %v3273 = vunpack.c.l.b16 %v2985
        %v3274 = vunpack.c.l.b16 %v2986
        %v3275 = vunpack.c.l.b16 %v2987
        %v3276 = vunpack.c.l.b16 %v2988
        %v3277 = vunpack.c.l.b16 %v2989
        %v3278 = vunpack.c.l.b16 %v2990
        %v3279 = vunpack.c.l.b16 %v2991
        %v3280 = vunpack.c.l.b16 %v2992
        %v3281 = vunpack.c.l.b16 %v2993
        %v3282 = vunpack.c.l.b16 %v2994
        %v3283 = vunpack.c.l.b16 %v2995
        %v3284 = vunpack.c.l.b16 %v2996
        %v3285 = vunpack.c.l.b16 %v2997
        %v3286 = vunpack.c.l.b16 %v2998
        %v3287 = vunpack.c.l.b16 %v2999
        %v3288 = vunpack.c.l.b16 %v3000
        %v3289 = vunpack.c.l.b16 %v3001
        %v3290 = vunpack.c.l.b16 %v3002
        %v3291 = vunpack.c.l.b16 %v3003
        %v3292 = vunpack.c.l.b16 %v3004
        %v3293 = vunpack.c.l.b16 %v3005
        %v3294 = vunpack.c.l.b16 %v3006
        %v3295 = vunpack.c.l.b16 %v3007
        %v3296 = vunpack.c.l.b16 %v3008
        %v3297 = vunpack.c.l.b16 %v3009
        %v3298 = vunpack.c.l.b16 %v3010
        %v3299 = vunpack.c.l.b16 %v3011
        %v3300 = vunpack.c.l.b16 %v3012
        %v3301 = vunpack.c.l.b16 %v3013
        %v3302 = vunpack.c.l.b16 %v3014
        %v3303 = vunpack.c.l.b16 %v3015
        %v3304 = vunpack.c.l.b16 %v3016
        %v3305 = vunpack.c.l.b16 %v3017
        %v3306 = vunpack.c.l.b16 %v3018
        %v3307 = vunpack.c.l.b16 %v3019
        %v3308 = vunpack.c.l.b16 %v3020
        %v3309 = vunpack.c.l.b16 %v3021
        %v3310 = vunpack.c.l.b16 %v3022
        %v3311 = vunpack.c.l.b16 %v3023
        %v3312 = vunpack.c.l.b16 %v3024
        %v3313 = vunpack.c.l.b16 %v3025
        %v3314 = vunpack.c.l.b16 %v3026
        %v3315 = vunpack.c.l.b16 %v3027
        %v3316 = vunpack.c.l.b16 %v3028
        %v3317 = vunpack.c.l.b16 %v3029
        %v3318 = vunpack.c.l.b16 %v3030
        %v3319 = vunpack.c.l.b16 %v3031
        %v3320 = vunpack.c.l.b16 %v3032
        %v3321 = vunpack.c.l.b16 %v3033
        %v3322 = vunpack.c.l.b16 %v3034
        %v3323 = vunpack.c.l.b16 %v3035
        %v3324 = vunpack.c.l.b16 %v3036
        %v3325 = vunpack.c.l.b16 %v3037
        %v3326 = vunpack.c.l.b16 %v3038
        %v3327 = vunpack.c.l.b16 %v3039
        %v3328 = vunpack.c.l.b16 %v3040
        %v3329 = vunpack.c.l.b16 %v3041
        %v3330 = vunpack.c.l.b16 %v3042
        %v3331 = vunpack.c.l.b16 %v3043
        %v3332 = vunpack.c.l.b16 %v3044
        %v3333 = vunpack.c.l.b16 %v3045
        %v3334 = vunpack.c.l.b16 %v3046
        %v3335 = vunpack.c.l.b16 %v3047
        %v3336 = vunpack.c.l.b16 %v3048
        %v3337 = vunpack.c.l.b16 %v3049
        %v3338 = vunpack.c.l.b16 %v3050
        %v3339 = vunpack.c.l.b16 %v3051
        %v3340 = vunpack.c.l.b16 %v3052
        %v3341 = vunpack.c.l.b16 %v3053
        %v3342 = vunpack.c.l.b16 %v3054
        %v3343 = vunpack.c.l.b16 %v3055
        %v3344 = vunpack.c.l.b16 %v3056
        %v3345 = vunpack.c.l.b16 %v3057
        %v3346 = vunpack.c.l.b16 %v3058
        %v3347 = vunpack.c.l.b16 %v3059
        %v3348 = vunpack.c.l.b16 %v3060
        %v3349 = vunpack.c.l.b16 %v3061
        %v3350 = vunpack.c.l.b16 %v3062
        %v3351 = vunpack.c.l.b16 %v3063
        %v3352 = vunpack.c.l.b16 %v3064
        %v3353 = vunpack.c.l.b16 %v3065
        %v3354 = vunpack.c.l.b16 %v3066
        %v3355 = vunpack.c.l.b16 %v3067
        %v3356 = vunpack.c.l.b16 %v3068
        %v3357 = vunpack.c.l.b16 %v3069
        %v3358 = vunpack.c.l.b16 %v3070
        %v3359 = vunpack.c.l.b16 %v3071
        %v3360 = vunpack.c.l.b16 %v3072
        %v3361 = vunpack.c.l.b16 %v3073
        %v3362 = vunpack.c.l.b16 %v3074
        %v3363 = vunpack.c.l.b16 %v3075
        %v3364 = vunpack.c.l.b16 %v3076
        %v3365 = vunpack.c.l.b16 %v3077
        %v3366 = vunpack.c.l.b16 %v3078
        %v3367 = vunpack.c.l.b16 %v3079
        %v3368 = vunpack.c.l.b16 %v3080
        %v3369 = vunpack.c.l.b16 %v3081
        %v3370 = vunpack.c.l.b16 %v3082
        %v3371 = vunpack.c.l.b16 %v3083
        %v3372 = vunpack.c.l.b16 %v3084
        %v3373 = vunpack.c.l.b16 %v3085
        %v3374 = vunpack.c.l.b16 %v3086
        %v3375 = vunpack.c.l.b16 %v3087
        %v3376 = vunpack.c.l.b16 %v3088
        %v3377 = vunpack.c.l.b16 %v3089
        %v3378 = vpack.c.b16 %v3235, %v3234
        %v3379 = vpack.c.b16 %v3237, %v3236
        %v3380 = vpack.c.b16 %v3239, %v3238
        %v3381 = vpack.c.b16 %v3241, %v3240
        %v3382 = vpack.c.b16 %v3243, %v3242
        %v3383 = vpack.c.b16 %v3245, %v3244
        %v3384 = vpack.c.b16 %v3247, %v3246
        %v3385 = vpack.c.b16 %v3249, %v3248
        %v3386 = vpack.c.b16 %v3251, %v3250
        %v3387 = vpack.c.b16 %v3253, %v3252
        %v3388 = vpack.c.b16 %v3255, %v3254
        %v3389 = vpack.c.b16 %v3257, %v3256
        %v3390 = vpack.c.b16 %v3259, %v3258
        %v3391 = vpack.c.b16 %v3261, %v3260
        %v3392 = vpack.c.b16 %v3263, %v3262
        %v3393 = vpack.c.b16 %v3265, %v3264
        %v3394 = vpack.c.b16 %v3267, %v3266
        %v3395 = vpack.c.b16 %v3269, %v3268
        %v3396 = vpack.c.b16 %v3271, %v3270
        %v3397 = vpack.c.b16 %v3273, %v3272
        %v3398 = vpack.c.b16 %v3275, %v3274
        %v3399 = vpack.c.b16 %v3277, %v3276
        %v3400 = vpack.c.b16 %v3279, %v3278
        %v3401 = vpack.c.b16 %v3281, %v3280
        %v3402 = vpack.c.b16 %v3283, %v3282
        %v3403 = vpack.c.b16 %v3285, %v3284
        %v3404 = vpack.c.b16 %v3287, %v3286
        %v3405 = vpack.c.b16 %v3289, %v3288
        %v3406 = vpack.c.b16 %v3291, %v3290
        %v3407 = vpack.c.b16 %v3293, %v3292
        %v3408 = vpack.c.b16 %v3295, %v3294
        %v3409 = vpack.c.b16 %v3297, %v3296
        %v3410 = vpack.c.b16 %v3299, %v3298
        %v3411 = vpack.c.b16 %v3301, %v3300
        %v3412 = vpack.c.b16 %v3303, %v3302
        %v3413 = vpack.c.b16 %v3305, %v3304
        %v3414 = vpack.c.b16 %v3307, %v3306
        %v3415 = vpack.c.b16 %v3309, %v3308
        %v3416 = vpack.c.b16 %v3311, %v3310
        %v3417 = vpack.c.b16 %v3313, %v3312
        %v3418 = vpack.c.b16 %v3315, %v3314
        %v3419 = vpack.c.b16 %v3317, %v3316
        %v3420 = vpack.c.b16 %v3319, %v3318
        %v3421 = vpack.c.b16 %v3321, %v3320
        %v3422 = vpack.c.b16 %v3323, %v3322
        %v3423 = vpack.c.b16 %v3325, %v3324
        %v3424 = vpack.c.b16 %v3327, %v3326
        %v3425 = vpack.c.b16 %v3329, %v3328
        %v3426 = vpack.c.b16 %v3331, %v3330
        %v3427 = vpack.c.b16 %v3333, %v3332
        %v3428 = vpack.c.b16 %v3335, %v3334
        %v3429 = vpack.c.b16 %v3337, %v3336
        %v3430 = vpack.c.b16 %v3339, %v3338
        %v3431 = vpack.c.b16 %v3341, %v3340
        %v3432 = vpack.c.b16 %v3343, %v3342
        %v3433 = vpack.c.b16 %v3345, %v3344
        %v3434 = vpack.c.b16 %v3347, %v3346
        %v3435 = vpack.c.b16 %v3349, %v3348
        %v3436 = vpack.c.b16 %v3351, %v3350
        %v3437 = vpack.c.b16 %v3353, %v3352
        %v3438 = vpack.c.b16 %v3355, %v3354
        %v3439 = vpack.c.b16 %v3357, %v3356
        %v3440 = vpack.c.b16 %v3359, %v3358
        %v3441 = vpack.c.b16 %v3361, %v3360
        %v3442 = vpack.c.b16 %v3363, %v3362
        %v3443 = vpack.c.b16 %v3365, %v3364
        %v3444 = vpack.c.b16 %v3367, %v3366
        %v3445 = vpack.c.b16 %v3369, %v3368
        %v3446 = vpack.c.b16 %v3371, %v3370
        %v3447 = vpack.c.b16 %v3373, %v3372
        %v3448 = vpack.c.b16 %v3375, %v3374
        %v3449 = vpack.c.b16 %v3377, %v3376
        %3522 = vmatprep.subr.bf16.mxu0 0
        %3523 = vmatpush1.bf16.msra.mxu0 %v3378
        %3524 = vmatprep.subr.bf16.mxu0 0
        %3525 = vmatpush1.bf16.msra.mxu0 %v3379
        %3526 = vmatprep.subr.bf16.mxu0 0
        %3527 = vmatpush1.bf16.msra.mxu0 %v3380
        %3528 = vmatprep.subr.bf16.mxu0 0
        %3529 = vmatpush1.bf16.msra.mxu0 %v3381
        %3530 = vmatprep.subr.bf16.mxu0 0
        %3531 = vmatpush1.bf16.msra.mxu0 %v3382
        %3532 = vmatprep.subr.bf16.mxu0 0
        %3533 = vmatpush1.bf16.msra.mxu0 %v3383
        %3534 = vmatprep.subr.bf16.mxu0 0
        %3535 = vmatpush1.bf16.msra.mxu0 %v3384
        %3536 = vmatprep.subr.bf16.mxu0 0
        %3537 = vmatpush1.bf16.msra.mxu0 %v3385
        %3538 = vmatprep.subr.bf16.mxu0 0
        %3539 = vmatpush1.bf16.msra.mxu0 %v3386
        %3540 = vmatprep.subr.bf16.mxu0 0
        %3541 = vmatpush1.bf16.msra.mxu0 %v3387
        %3542 = vmatprep.subr.bf16.mxu0 0
        %3543 = vmatpush1.bf16.msra.mxu0 %v3388
        %3544 = vmatprep.subr.bf16.mxu0 0
        %3545 = vmatpush1.bf16.msra.mxu0 %v3389
        %3546 = vmatprep.subr.bf16.mxu0 0
        %3547 = vmatpush1.bf16.msra.mxu0 %v3390
        %3548 = vmatprep.subr.bf16.mxu0 0
        %3549 = vmatpush1.bf16.msra.mxu0 %v3391
        %3550 = vmatprep.subr.bf16.mxu0 0
        %3551 = vmatpush1.bf16.msra.mxu0 %v3392
        %3552 = vmatprep.subr.bf16.mxu0 0
        %3553 = vmatpush1.bf16.msra.mxu0 %v3393
        %3554 = vmatprep.mubr.bf16.mxu0 %v501
        %3555 = vmatmul.mubr.bf16.gmra.mrb[0].mxu0 %v455
        %v3556 = vpop.f32.mrb[0].mxu0
        %v3557 = vadd.f32 %v251, %v3556
        %v3558 = vpop.f32.mrb[0].mxu0
        %v3559 = vpop.f32.mrb[0].mxu0
        %v3560 = vadd.f32 %v252, %v3559
        %v3561 = vpop.f32.mrb[0].mxu0
        %3562 = vmatprep.mubr.bf16.mxu0 %v2653
        %3563 = vmatmul.mubr.bf16.gmra.mrb[0].mxu0 %v2610
        %v3564 = vpop.f32.mrb[0].mxu0
        %v3565 = vadd.f32 %v253, %v3564
        %v3566 = vpop.f32.mrb[0].mxu0
        %v3567 = vpop.f32.mrb[0].mxu0
        %v3568 = vadd.f32 %v254, %v3567
        %v3569 = vpop.f32.mrb[0].mxu0
        %3570 = vmatprep.mubr.bf16.mxu0 %v2665
        %3571 = vmatmul.mubr.bf16.gmra.mrb[0].mxu0 %v2611
        %v3572 = vpop.f32.mrb[0].mxu0
        %v3573 = vadd.f32 %v255, %v3572
        %v3574 = vpop.f32.mrb[0].mxu0
        %v3575 = vpop.f32.mrb[0].mxu0
        %v3576 = vadd.f32 %v256, %v3575
        %v3577 = vpop.f32.mrb[0].mxu0
        %3578 = vmatprep.mubr.bf16.mxu0 %v2677
        %3579 = vmatmul.mubr.bf16.gmra.mrb[0].mxu0 %v2612
        %v3580 = vpop.f32.mrb[0].mxu0
        %v3581 = vadd.f32 %v257, %v3580
        %v3582 = vpop.f32.mrb[0].mxu0
        %v3583 = vpop.f32.mrb[0].mxu0
        %v3584 = vadd.f32 %v258, %v3583
        %v3585 = vpop.f32.mrb[0].mxu0
        %3586 = vmatprep.mubr.bf16.mxu0 %v2689
        %3587 = vmatmul.mubr.bf16.gmra.mrb[0].mxu0 %v2613
        %v3588 = vpop.f32.mrb[0].mxu0
        %v3589 = vadd.f32 %v259, %v3588
        %v3590 = vpop.f32.mrb[0].mxu0
        %v3591 = vpop.f32.mrb[0].mxu0
        %v3592 = vadd.f32 %v260, %v3591
        %v3593 = vpop.f32.mrb[0].mxu0
        %3594 = vmatprep.mubr.bf16.mxu0 %v2701
        %3595 = vmatmul.mubr.bf16.gmra.mrb[0].mxu0 %v2614
        %v3596 = vpop.f32.mrb[0].mxu0
        %v3597 = vadd.f32 %v261, %v3596
        %v3598 = vpop.f32.mrb[0].mxu0
        %v3599 = vpop.f32.mrb[0].mxu0
        %v3600 = vadd.f32 %v262, %v3599
        %v3601 = vpop.f32.mrb[0].mxu0
        %3602 = vmatprep.mubr.bf16.mxu0 %v2713
        %3603 = vmatmul.mubr.bf16.gmra.mrb[0].mxu0 %v2615
        %v3604 = vpop.f32.mrb[0].mxu0
        %v3605 = vadd.f32 %v263, %v3604
        %v3606 = vpop.f32.mrb[0].mxu0
        %v3607 = vpop.f32.mrb[0].mxu0
        %v3608 = vadd.f32 %v264, %v3607
        %v3609 = vpop.f32.mrb[0].mxu0
        %3610 = vmatprep.mubr.bf16.mxu0 %v2725
        %3611 = vmatmul.mubr.bf16.gmra.mrb[0].mxu0 %v2616
        %v3612 = vpop.f32.mrb[0].mxu0
        %v3613 = vadd.f32 %v265, %v3612
        %v3614 = vpop.f32.mrb[0].mxu0
        %v3615 = vpop.f32.mrb[0].mxu0
        %v3616 = vadd.f32 %v266, %v3615
        %v3617 = vpop.f32.mrb[0].mxu0
        %3618 = vmatprep.mubr.bf16.mxu0 %v2737
        %3619 = vmatmul.mubr.bf16.gmra.mrb[0].mxu0 %v2617
        %v3620 = vpop.f32.mrb[0].mxu0
        %v3621 = vadd.f32 %v267, %v3620
        %v3622 = vpop.f32.mrb[0].mxu0
        %v3623 = vpop.f32.mrb[0].mxu0
        %v3624 = vadd.f32 %v268, %v3623
        %v3625 = vpop.f32.mrb[0].mxu0
        %3626 = vmatprep.mubr.bf16.mxu0 %v2749
        %3627 = vmatmul.mubr.bf16.gmra.mrb[0].mxu0 %v2618
        %v3628 = vpop.f32.mrb[0].mxu0
        %v3629 = vadd.f32 %v269, %v3628
        %v3630 = vpop.f32.mrb[0].mxu0
        %v3631 = vpop.f32.mrb[0].mxu0
        %v3632 = vadd.f32 %v270, %v3631
        %v3633 = vpop.f32.mrb[0].mxu0
        %3634 = vmatprep.mubr.bf16.mxu0 %v2761
        %3635 = vmatmul.mubr.bf16.gmra.mrb[0].mxu0 %v2619
        %v3636 = vpop.f32.mrb[0].mxu0
        %v3637 = vadd.f32 %v271, %v3636
        %v3638 = vpop.f32.mrb[0].mxu0
        %v3639 = vpop.f32.mrb[0].mxu0
        %v3640 = vadd.f32 %v272, %v3639
        %v3641 = vpop.f32.mrb[0].mxu0
        %3642 = vmatprep.mubr.bf16.mxu0 %v2773
        %3643 = vmatmul.mubr.bf16.gmra.mrb[0].mxu0 %v2620
        %v3644 = vpop.f32.mrb[0].mxu0
        %v3645 = vadd.f32 %v273, %v3644
        %v3646 = vpop.f32.mrb[0].mxu0
        %v3647 = vpop.f32.mrb[0].mxu0
        %v3648 = vadd.f32 %v274, %v3647
        %v3649 = vpop.f32.mrb[0].mxu0
        %3650 = vmatprep.mubr.bf16.mxu0 %v2785
        %3651 = vmatmul.mubr.bf16.gmra.mrb[0].mxu0 %v2621
        %v3652 = vpop.f32.mrb[0].mxu0
        %v3653 = vadd.f32 %v275, %v3652
        %v3654 = vpop.f32.mrb[0].mxu0
        %v3655 = vpop.f32.mrb[0].mxu0
        %v3656 = vadd.f32 %v276, %v3655
        %v3657 = vpop.f32.mrb[0].mxu0
        %3658 = vmatprep.mubr.bf16.mxu0 %v2797
        %3659 = vmatmul.mubr.bf16.gmra.mrb[0].mxu0 %v2622
        %v3660 = vpop.f32.mrb[0].mxu0
        %v3661 = vadd.f32 %v277, %v3660
        %v3662 = vpop.f32.mrb[0].mxu0
        %v3663 = vpop.f32.mrb[0].mxu0
        %v3664 = vadd.f32 %v278, %v3663
        %v3665 = vpop.f32.mrb[0].mxu0
        %3666 = vmatprep.mubr.bf16.mxu0 %v2809
        %3667 = vmatmul.mubr.bf16.gmra.mrb[0].mxu0 %v2623
        %v3668 = vpop.f32.mrb[0].mxu0
        %v3669 = vadd.f32 %v279, %v3668
        %v3670 = vpop.f32.mrb[0].mxu0
        %v3671 = vpop.f32.mrb[0].mxu0
        %v3672 = vadd.f32 %v280, %v3671
        %v3673 = vpop.f32.mrb[0].mxu0
        %3674 = vmatprep.mubr.bf16.mxu0 %v2821
        %3675 = vmatmul.mubr.bf16.gmra.mrb[0].mxu0 %v2624
        %v3676 = vpop.f32.mrb[0].mxu0
        %v3677 = vadd.f32 %v281, %v3676
        %v3678 = vpop.f32.mrb[0].mxu0
        %v3679 = vpop.f32.mrb[0].mxu0
        %v3680 = vadd.f32 %v282, %v3679
        %v3681 = vpop.f32.mrb[0].mxu0
        %3682 = vdwg.mxu0
        %3683 = vmatprep.subr.bf16.mxu0 0
        %3684 = vmatpush1.bf16.msra.mxu0 %v3394
        %3685 = vmatprep.subr.bf16.mxu0 0
        %3686 = vmatpush1.bf16.msra.mxu0 %v3395
        %3687 = vmatprep.subr.bf16.mxu0 0
        %3688 = vmatpush1.bf16.msra.mxu0 %v3396
        %3689 = vmatprep.subr.bf16.mxu0 0
        %3690 = vmatpush1.bf16.msra.mxu0 %v3397
        %3691 = vmatprep.subr.bf16.mxu0 0
        %3692 = vmatpush1.bf16.msra.mxu0 %v3398
        %3693 = vmatprep.subr.bf16.mxu0 0
        %3694 = vmatpush1.bf16.msra.mxu0 %v3399
        %3695 = vmatprep.subr.bf16.mxu0 0
        %3696 = vmatpush1.bf16.msra.mxu0 %v3400
        %3697 = vmatprep.subr.bf16.mxu0 0
        %3698 = vmatpush1.bf16.msra.mxu0 %v3401
        %3699 = vmatprep.subr.bf16.mxu0 0
        %3700 = vmatpush1.bf16.msra.mxu0 %v3402
        %3701 = vmatprep.subr.bf16.mxu0 0
        %3702 = vmatpush1.bf16.msra.mxu0 %v3403
        %3703 = vmatprep.subr.bf16.mxu0 0
        %3704 = vmatpush1.bf16.msra.mxu0 %v3404
        %3705 = vmatprep.subr.bf16.mxu0 0
        %3706 = vmatpush1.bf16.msra.mxu0 %v3405
        %3707 = vmatprep.subr.bf16.mxu0 0
        %3708 = vmatpush1.bf16.msra.mxu0 %v3406
        %3709 = vmatprep.subr.bf16.mxu0 0
        %3710 = vmatpush1.bf16.msra.mxu0 %v3407
        %3711 = vmatprep.subr.bf16.mxu0 0
        %3712 = vmatpush1.bf16.msra.mxu0 %v3408
        %3713 = vmatprep.subr.bf16.mxu0 0
        %3714 = vmatpush1.bf16.msra.mxu0 %v3409
        %3715 = vmatprep.mubr.bf16.mxu0 %v2610
        %3716 = vmatmul.mubr.bf16.gmra.mrb[0].mxu0 %v733
        %v3717 = vpop.f32.mrb[0].mxu0
        %v3718 = vadd.f32 %v3557, %v3717
        %v3719 = vpop.f32.mrb[0].mxu0
        %v3720 = vpop.f32.mrb[0].mxu0
        %v3721 = vadd.f32 %v3560, %v3720
        %v3722 = vpop.f32.mrb[0].mxu0
        %3723 = vmatprep.mubr.bf16.mxu0 %v2611
        %3724 = vmatmul.mubr.bf16.gmra.mrb[0].mxu0 %v2869
        %v3725 = vpop.f32.mrb[0].mxu0
        %v3726 = vadd.f32 %v3565, %v3725
        %v3727 = vpop.f32.mrb[0].mxu0
        %v3728 = vpop.f32.mrb[0].mxu0
        %v3729 = vadd.f32 %v3568, %v3728
        %v3730 = vpop.f32.mrb[0].mxu0
        %3731 = vmatprep.mubr.bf16.mxu0 %v2612
        %3732 = vmatmul.mubr.bf16.gmra.mrb[0].mxu0 %v2872
        %v3733 = vpop.f32.mrb[0].mxu0
        %v3734 = vadd.f32 %v3573, %v3733
        %v3735 = vpop.f32.mrb[0].mxu0
        %v3736 = vpop.f32.mrb[0].mxu0
        %v3737 = vadd.f32 %v3576, %v3736
        %v3738 = vpop.f32.mrb[0].mxu0
        %3739 = vmatprep.mubr.bf16.mxu0 %v2613
        %3740 = vmatmul.mubr.bf16.gmra.mrb[0].mxu0 %v2875
        %v3741 = vpop.f32.mrb[0].mxu0
        %v3742 = vadd.f32 %v3581, %v3741
        %v3743 = vpop.f32.mrb[0].mxu0
        %v3744 = vpop.f32.mrb[0].mxu0
        %v3745 = vadd.f32 %v3584, %v3744
        %v3746 = vpop.f32.mrb[0].mxu0
        %3747 = vmatprep.mubr.bf16.mxu0 %v2614
        %3748 = vmatmul.mubr.bf16.gmra.mrb[0].mxu0 %v2878
        %v3749 = vpop.f32.mrb[0].mxu0
        %v3750 = vadd.f32 %v3589, %v3749
        %v3751 = vpop.f32.mrb[0].mxu0
        %v3752 = vpop.f32.mrb[0].mxu0
        %v3753 = vadd.f32 %v3592, %v3752
        %v3754 = vpop.f32.mrb[0].mxu0
        %3755 = vmatprep.mubr.bf16.mxu0 %v2615
        %3756 = vmatmul.mubr.bf16.gmra.mrb[0].mxu0 %v2881
        %v3757 = vpop.f32.mrb[0].mxu0
        %v3758 = vadd.f32 %v3597, %v3757
        %v3759 = vpop.f32.mrb[0].mxu0
        %v3760 = vpop.f32.mrb[0].mxu0
        %v3761 = vadd.f32 %v3600, %v3760
        %v3762 = vpop.f32.mrb[0].mxu0
        %3763 = vmatprep.mubr.bf16.mxu0 %v2616
        %3764 = vmatmul.mubr.bf16.gmra.mrb[0].mxu0 %v2884
        %v3765 = vpop.f32.mrb[0].mxu0
        %v3766 = vadd.f32 %v3605, %v3765
        %v3767 = vpop.f32.mrb[0].mxu0
        %v3768 = vpop.f32.mrb[0].mxu0
        %v3769 = vadd.f32 %v3608, %v3768
        %v3770 = vpop.f32.mrb[0].mxu0
        %3771 = vmatprep.mubr.bf16.mxu0 %v2617
        %3772 = vmatmul.mubr.bf16.gmra.mrb[0].mxu0 %v2887
        %v3773 = vpop.f32.mrb[0].mxu0
        %v3774 = vadd.f32 %v3613, %v3773
        %v3775 = vpop.f32.mrb[0].mxu0
        %v3776 = vpop.f32.mrb[0].mxu0
        %v3777 = vadd.f32 %v3616, %v3776
        %v3778 = vpop.f32.mrb[0].mxu0
        %3779 = vmatprep.mubr.bf16.mxu0 %v2618
        %3780 = vmatmul.mubr.bf16.gmra.mrb[0].mxu0 %v2890
        %v3781 = vpop.f32.mrb[0].mxu0
        %v3782 = vadd.f32 %v3621, %v3781
        %v3783 = vpop.f32.mrb[0].mxu0
        %v3784 = vpop.f32.mrb[0].mxu0
        %v3785 = vadd.f32 %v3624, %v3784
        %v3786 = vpop.f32.mrb[0].mxu0
        %3787 = vmatprep.mubr.bf16.mxu0 %v2619
        %3788 = vmatmul.mubr.bf16.gmra.mrb[0].mxu0 %v2893
        %v3789 = vpop.f32.mrb[0].mxu0
        %v3790 = vadd.f32 %v3629, %v3789
        %v3791 = vpop.f32.mrb[0].mxu0
        %v3792 = vpop.f32.mrb[0].mxu0
        %v3793 = vadd.f32 %v3632, %v3792
        %v3794 = vpop.f32.mrb[0].mxu0
        %3795 = vmatprep.mubr.bf16.mxu0 %v2620
        %3796 = vmatmul.mubr.bf16.gmra.mrb[0].mxu0 %v2896
        %v3797 = vpop.f32.mrb[0].mxu0
        %v3798 = vadd.f32 %v3637, %v3797
        %v3799 = vpop.f32.mrb[0].mxu0
        %v3800 = vpop.f32.mrb[0].mxu0
        %v3801 = vadd.f32 %v3640, %v3800
        %v3802 = vpop.f32.mrb[0].mxu0
        %3803 = vmatprep.mubr.bf16.mxu0 %v2621
        %3804 = vmatmul.mubr.bf16.gmra.mrb[0].mxu0 %v2899
        %v3805 = vpop.f32.mrb[0].mxu0
        %v3806 = vadd.f32 %v3645, %v3805
        %v3807 = vpop.f32.mrb[0].mxu0
        %v3808 = vpop.f32.mrb[0].mxu0
        %v3809 = vadd.f32 %v3648, %v3808
        %v3810 = vpop.f32.mrb[0].mxu0
        %3811 = vmatprep.mubr.bf16.mxu0 %v2622
        %3812 = vmatmul.mubr.bf16.gmra.mrb[0].mxu0 %v2902
        %v3813 = vpop.f32.mrb[0].mxu0
        %v3814 = vadd.f32 %v3653, %v3813
        %v3815 = vpop.f32.mrb[0].mxu0
        %v3816 = vpop.f32.mrb[0].mxu0
        %v3817 = vadd.f32 %v3656, %v3816
        %v3818 = vpop.f32.mrb[0].mxu0
        %3819 = vmatprep.mubr.bf16.mxu0 %v2623
        %3820 = vmatmul.mubr.bf16.gmra.mrb[0].mxu0 %v2905
        %v3821 = vpop.f32.mrb[0].mxu0
        %v3822 = vadd.f32 %v3661, %v3821
        %v3823 = vpop.f32.mrb[0].mxu0
        %v3824 = vpop.f32.mrb[0].mxu0
        %v3825 = vadd.f32 %v3664, %v3824
        %v3826 = vpop.f32.mrb[0].mxu0
        %3827 = vmatprep.mubr.bf16.mxu0 %v2624
        %3828 = vmatmul.mubr.bf16.gmra.mrb[0].mxu0 %v2908
        %v3829 = vpop.f32.mrb[0].mxu0
        %v3830 = vadd.f32 %v3669, %v3829
        %v3831 = vpop.f32.mrb[0].mxu0
        %v3832 = vpop.f32.mrb[0].mxu0
        %v3833 = vadd.f32 %v3672, %v3832
        %v3834 = vpop.f32.mrb[0].mxu0
        %3835 = vmatprep.mubr.bf16.mxu0 %v2625
        %3836 = vmatmul.mubr.bf16.gmra.mrb[0].mxu0 %v2911
        %v3837 = vpop.f32.mrb[0].mxu0
        %v3838 = vadd.f32 %v3677, %v3837
        %v3839 = vpop.f32.mrb[0].mxu0
        %v3840 = vpop.f32.mrb[0].mxu0
        %v3841 = vadd.f32 %v3680, %v3840
        %v3842 = vpop.f32.mrb[0].mxu0
        %3843 = vdwg.mxu0
        %3844 = vmatprep.subr.bf16.mxu0 0
        %3845 = vmatpush1.bf16.msra.mxu0 %v3410
        %3846 = vmatprep.subr.bf16.mxu0 0
        %3847 = vmatpush1.bf16.msra.mxu0 %v3411
        %3848 = vmatprep.subr.bf16.mxu0 0
        %3849 = vmatpush1.bf16.msra.mxu0 %v3412
        %3850 = vmatprep.subr.bf16.mxu0 0
        %3851 = vmatpush1.bf16.msra.mxu0 %v3413
        %3852 = vmatprep.subr.bf16.mxu0 0
        %3853 = vmatpush1.bf16.msra.mxu0 %v3414
        %3854 = vmatprep.subr.bf16.mxu0 0
        %3855 = vmatpush1.bf16.msra.mxu0 %v3415
        %3856 = vmatprep.subr.bf16.mxu0 0
        %3857 = vmatpush1.bf16.msra.mxu0 %v3416
        %3858 = vmatprep.subr.bf16.mxu0 0
        %3859 = vmatpush1.bf16.msra.mxu0 %v3417
        %3860 = vmatprep.subr.bf16.mxu0 0
        %3861 = vmatpush1.bf16.msra.mxu0 %v3418
        %3862 = vmatprep.subr.bf16.mxu0 0
        %3863 = vmatpush1.bf16.msra.mxu0 %v3419
        %3864 = vmatprep.subr.bf16.mxu0 0
        %3865 = vmatpush1.bf16.msra.mxu0 %v3420
        %3866 = vmatprep.subr.bf16.mxu0 0
        %3867 = vmatpush1.bf16.msra.mxu0 %v3421
        %3868 = vmatprep.subr.bf16.mxu0 0
        %3869 = vmatpush1.bf16.msra.mxu0 %v3422
        %3870 = vmatprep.subr.bf16.mxu0 0
        %3871 = vmatpush1.bf16.msra.mxu0 %v3423
        %3872 = vmatprep.subr.bf16.mxu0 0
        %3873 = vmatpush1.bf16.msra.mxu0 %v3424
        %3874 = vmatprep.subr.bf16.mxu0 0
        %3875 = vmatpush1.bf16.msra.mxu0 %v3425
        %3876 = vmatprep.mubr.bf16.mxu0 %v2869
        %3877 = vmatmul.mubr.bf16.gmra.mrb[0].mxu0 %v2653
        %v3878 = vpop.f32.mrb[0].mxu0
        %v3879 = vadd.f32 %v3718, %v3878
        %v3880 = vpop.f32.mrb[0].mxu0
        %v3881 = vpop.f32.mrb[0].mxu0
        %v3882 = vadd.f32 %v3721, %v3881
        %v3883 = vpop.f32.mrb[0].mxu0
        %3884 = vmatprep.mubr.bf16.mxu0 %v2872
        %3885 = vmatmul.mubr.bf16.gmra.mrb[0].mxu0 %v2665
        %v3886 = vpop.f32.mrb[0].mxu0
        %v3887 = vadd.f32 %v3726, %v3886
        %v3888 = vpop.f32.mrb[0].mxu0
        %v3889 = vpop.f32.mrb[0].mxu0
        %v3890 = vadd.f32 %v3729, %v3889
        %v3891 = vpop.f32.mrb[0].mxu0
        %3892 = vmatprep.mubr.bf16.mxu0 %v2875
        %3893 = vmatmul.mubr.bf16.gmra.mrb[0].mxu0 %v2677
        %v3894 = vpop.f32.mrb[0].mxu0
        %v3895 = vadd.f32 %v3734, %v3894
        %v3896 = vpop.f32.mrb[0].mxu0
        %v3897 = vpop.f32.mrb[0].mxu0
        %v3898 = vadd.f32 %v3737, %v3897
        %v3899 = vpop.f32.mrb[0].mxu0
        %3900 = vmatprep.mubr.bf16.mxu0 %v2878
        %3901 = vmatmul.mubr.bf16.gmra.mrb[0].mxu0 %v2689
        %v3902 = vpop.f32.mrb[0].mxu0
        %v3903 = vadd.f32 %v3742, %v3902
        %v3904 = vpop.f32.mrb[0].mxu0
        %v3905 = vpop.f32.mrb[0].mxu0
        %v3906 = vadd.f32 %v3745, %v3905
        %v3907 = vpop.f32.mrb[0].mxu0
        %3908 = vmatprep.mubr.bf16.mxu0 %v2881
        %3909 = vmatmul.mubr.bf16.gmra.mrb[0].mxu0 %v2701
        %v3910 = vpop.f32.mrb[0].mxu0
        %v3911 = vadd.f32 %v3750, %v3910
        %v3912 = vpop.f32.mrb[0].mxu0
        %v3913 = vpop.f32.mrb[0].mxu0
        %v3914 = vadd.f32 %v3753, %v3913
        %v3915 = vpop.f32.mrb[0].mxu0
        %3916 = vmatprep.mubr.bf16.mxu0 %v2884
        %3917 = vmatmul.mubr.bf16.gmra.mrb[0].mxu0 %v2713
        %v3918 = vpop.f32.mrb[0].mxu0
        %v3919 = vadd.f32 %v3758, %v3918
        %v3920 = vpop.f32.mrb[0].mxu0
        %v3921 = vpop.f32.mrb[0].mxu0
        %v3922 = vadd.f32 %v3761, %v3921
        %v3923 = vpop.f32.mrb[0].mxu0
        %3924 = vmatprep.mubr.bf16.mxu0 %v2887
        %3925 = vmatmul.mubr.bf16.gmra.mrb[0].mxu0 %v2725
        %v3926 = vpop.f32.mrb[0].mxu0
        %v3927 = vadd.f32 %v3766, %v3926
        %v3928 = vpop.f32.mrb[0].mxu0
        %v3929 = vpop.f32.mrb[0].mxu0
        %v3930 = vadd.f32 %v3769, %v3929
        %v3931 = vpop.f32.mrb[0].mxu0
        %3932 = vmatprep.mubr.bf16.mxu0 %v2890
        %3933 = vmatmul.mubr.bf16.gmra.mrb[0].mxu0 %v2737
        %v3934 = vpop.f32.mrb[0].mxu0
        %v3935 = vadd.f32 %v3774, %v3934
        %v3936 = vpop.f32.mrb[0].mxu0
        %v3937 = vpop.f32.mrb[0].mxu0
        %v3938 = vadd.f32 %v3777, %v3937
        %v3939 = vpop.f32.mrb[0].mxu0
        %3940 = vmatprep.mubr.bf16.mxu0 %v2893
        %3941 = vmatmul.mubr.bf16.gmra.mrb[0].mxu0 %v2749
        %v3942 = vpop.f32.mrb[0].mxu0
        %v3943 = vadd.f32 %v3782, %v3942
        %v3944 = vpop.f32.mrb[0].mxu0
        %v3945 = vpop.f32.mrb[0].mxu0
        %v3946 = vadd.f32 %v3785, %v3945
        %v3947 = vpop.f32.mrb[0].mxu0
        %3948 = vmatprep.mubr.bf16.mxu0 %v2896
        %3949 = vmatmul.mubr.bf16.gmra.mrb[0].mxu0 %v2761
        %v3950 = vpop.f32.mrb[0].mxu0
        %v3951 = vadd.f32 %v3790, %v3950
        %v3952 = vpop.f32.mrb[0].mxu0
        %v3953 = vpop.f32.mrb[0].mxu0
        %v3954 = vadd.f32 %v3793, %v3953
        %v3955 = vpop.f32.mrb[0].mxu0
        %3956 = vmatprep.mubr.bf16.mxu0 %v2899
        %3957 = vmatmul.mubr.bf16.gmra.mrb[0].mxu0 %v2773
        %v3958 = vpop.f32.mrb[0].mxu0
        %v3959 = vadd.f32 %v3798, %v3958
        %v3960 = vpop.f32.mrb[0].mxu0
        %v3961 = vpop.f32.mrb[0].mxu0
        %v3962 = vadd.f32 %v3801, %v3961
        %v3963 = vpop.f32.mrb[0].mxu0
        %3964 = vmatprep.mubr.bf16.mxu0 %v2902
        %3965 = vmatmul.mubr.bf16.gmra.mrb[0].mxu0 %v2785
        %v3966 = vpop.f32.mrb[0].mxu0
        %v3967 = vadd.f32 %v3806, %v3966
        %v3968 = vpop.f32.mrb[0].mxu0
        %v3969 = vpop.f32.mrb[0].mxu0
        %v3970 = vadd.f32 %v3809, %v3969
        %v3971 = vpop.f32.mrb[0].mxu0
        %3972 = vmatprep.mubr.bf16.mxu0 %v2905
        %3973 = vmatmul.mubr.bf16.gmra.mrb[0].mxu0 %v2797
        %v3974 = vpop.f32.mrb[0].mxu0
        %v3975 = vadd.f32 %v3814, %v3974
        %v3976 = vpop.f32.mrb[0].mxu0
        %v3977 = vpop.f32.mrb[0].mxu0
        %v3978 = vadd.f32 %v3817, %v3977
        %v3979 = vpop.f32.mrb[0].mxu0
        %3980 = vmatprep.mubr.bf16.mxu0 %v2908
        %3981 = vmatmul.mubr.bf16.gmra.mrb[0].mxu0 %v2809
        %v3982 = vpop.f32.mrb[0].mxu0
        %v3983 = vadd.f32 %v3822, %v3982
        %v3984 = vpop.f32.mrb[0].mxu0
        %v3985 = vpop.f32.mrb[0].mxu0
        %v3986 = vadd.f32 %v3825, %v3985
        %v3987 = vpop.f32.mrb[0].mxu0
        %3988 = vmatprep.mubr.bf16.mxu0 %v2911
        %3989 = vmatmul.mubr.bf16.gmra.mrb[0].mxu0 %v2821
        %v3990 = vpop.f32.mrb[0].mxu0
        %v3991 = vadd.f32 %v3830, %v3990
        %v3992 = vpop.f32.mrb[0].mxu0
        %v3993 = vpop.f32.mrb[0].mxu0
        %v3994 = vadd.f32 %v3833, %v3993
        %v3995 = vpop.f32.mrb[0].mxu0
        %3996 = vmatprep.mubr.bf16.mxu0 %v2944
        %3997 = vmatmul.mubr.bf16.gmra.mrb[0].mxu0 %v2938
        %v3998 = vpop.f32.mrb[0].mxu0
        %v3999 = vadd.f32 %v3838, %v3998
        %v4000 = vpop.f32.mrb[0].mxu0
        %v4001 = vpop.f32.mrb[0].mxu0
        %v4002 = vadd.f32 %v3841, %v4001
        %v4003 = vpop.f32.mrb[0].mxu0
        %4004 = vdwg.mxu0
        %4005 = vmatprep.subr.bf16.mxu0 0
        %4006 = vmatpush1.bf16.msra.mxu0 %v3426
        %4007 = vmatprep.subr.bf16.mxu0 0
        %4008 = vmatpush1.bf16.msra.mxu0 %v3427
        %4009 = vmatprep.subr.bf16.mxu0 0
        %4010 = vmatpush1.bf16.msra.mxu0 %v3428
        %4011 = vmatprep.subr.bf16.mxu0 0
        %4012 = vmatpush1.bf16.msra.mxu0 %v3429
        %4013 = vmatprep.subr.bf16.mxu0 0
        %4014 = vmatpush1.bf16.msra.mxu0 %v3430
        %4015 = vmatprep.subr.bf16.mxu0 0
        %4016 = vmatpush1.bf16.msra.mxu0 %v3431
        %4017 = vmatprep.subr.bf16.mxu0 0
        %4018 = vmatpush1.bf16.msra.mxu0 %v3432
        %4019 = vmatprep.subr.bf16.mxu0 0
        %4020 = vmatpush1.bf16.msra.mxu0 %v3433
        %4021 = vmatprep.subr.bf16.mxu0 0
        %4022 = vmatpush1.bf16.msra.mxu0 %v3434
        %4023 = vmatprep.subr.bf16.mxu0 0
        %4024 = vmatpush1.bf16.msra.mxu0 %v3435
        %4025 = vmatprep.subr.bf16.mxu0 0
        %4026 = vmatpush1.bf16.msra.mxu0 %v3436
        %4027 = vmatprep.subr.bf16.mxu0 0
        %4028 = vmatpush1.bf16.msra.mxu0 %v3437
        %4029 = vmatprep.subr.bf16.mxu0 0
        %4030 = vmatpush1.bf16.msra.mxu0 %v3438
        %4031 = vmatprep.subr.bf16.mxu0 0
        %4032 = vmatpush1.bf16.msra.mxu0 %v3439
        %4033 = vmatprep.subr.bf16.mxu0 0
        %4034 = vmatpush1.bf16.msra.mxu0 %v3440
        %4035 = vmatprep.subr.bf16.mxu0 0
        %4036 = vmatpush1.bf16.msra.mxu0 %v3441
        %4037 = vmatprep.mubr.bf16.mxu0 %v2665
        %4038 = vmatmul.mubr.bf16.gmra.mrb[0].mxu0 %v2611
        %v4039 = vpop.f32.mrb[0].mxu0
        %v4040 = vadd.f32 %v3879, %v4039
        %v4041 = vpop.f32.mrb[0].mxu0
        %v4042 = vpop.f32.mrb[0].mxu0
        %v4043 = vadd.f32 %v3882, %v4042
        %v4044 = vpop.f32.mrb[0].mxu0
        %4045 = vmatprep.mubr.bf16.mxu0 %v2677
        %4046 = vmatmul.mubr.bf16.gmra.mrb[0].mxu0 %v2612
        %v4047 = vpop.f32.mrb[0].mxu0
        %v4048 = vadd.f32 %v3887, %v4047
        %v4049 = vpop.f32.mrb[0].mxu0
        %v4050 = vpop.f32.mrb[0].mxu0
        %v4051 = vadd.f32 %v3890, %v4050
        %v4052 = vpop.f32.mrb[0].mxu0
        %4053 = vmatprep.mubr.bf16.mxu0 %v2689
        %4054 = vmatmul.mubr.bf16.gmra.mrb[0].mxu0 %v2613
        %v4055 = vpop.f32.mrb[0].mxu0
        %v4056 = vadd.f32 %v3895, %v4055
        %v4057 = vpop.f32.mrb[0].mxu0
        %v4058 = vpop.f32.mrb[0].mxu0
        %v4059 = vadd.f32 %v3898, %v4058
        %v4060 = vpop.f32.mrb[0].mxu0
        %4061 = vmatprep.mubr.bf16.mxu0 %v2701
        %4062 = vmatmul.mubr.bf16.gmra.mrb[0].mxu0 %v2614
        %v4063 = vpop.f32.mrb[0].mxu0
        %v4064 = vadd.f32 %v3903, %v4063
        %v4065 = vpop.f32.mrb[0].mxu0
        %v4066 = vpop.f32.mrb[0].mxu0
        %v4067 = vadd.f32 %v3906, %v4066
        %v4068 = vpop.f32.mrb[0].mxu0
        %4069 = vmatprep.mubr.bf16.mxu0 %v2713
        %4070 = vmatmul.mubr.bf16.gmra.mrb[0].mxu0 %v2615
        %v4071 = vpop.f32.mrb[0].mxu0
        %v4072 = vadd.f32 %v3911, %v4071
        %v4073 = vpop.f32.mrb[0].mxu0
        %v4074 = vpop.f32.mrb[0].mxu0
        %v4075 = vadd.f32 %v3914, %v4074
        %v4076 = vpop.f32.mrb[0].mxu0
        %4077 = vmatprep.mubr.bf16.mxu0 %v2725
        %4078 = vmatmul.mubr.bf16.gmra.mrb[0].mxu0 %v2616
        %v4079 = vpop.f32.mrb[0].mxu0
        %v4080 = vadd.f32 %v3919, %v4079
        %v4081 = vpop.f32.mrb[0].mxu0
        %v4082 = vpop.f32.mrb[0].mxu0
        %v4083 = vadd.f32 %v3922, %v4082
        %v4084 = vpop.f32.mrb[0].mxu0
        %4085 = vmatprep.mubr.bf16.mxu0 %v2737
        %4086 = vmatmul.mubr.bf16.gmra.mrb[0].mxu0 %v2617
        %v4087 = vpop.f32.mrb[0].mxu0
        %v4088 = vadd.f32 %v3927, %v4087
        %v4089 = vpop.f32.mrb[0].mxu0
        %v4090 = vpop.f32.mrb[0].mxu0
        %v4091 = vadd.f32 %v3930, %v4090
        %v4092 = vpop.f32.mrb[0].mxu0
        %4093 = vmatprep.mubr.bf16.mxu0 %v2749
        %4094 = vmatmul.mubr.bf16.gmra.mrb[0].mxu0 %v2618
        %v4095 = vpop.f32.mrb[0].mxu0
        %v4096 = vadd.f32 %v3935, %v4095
        %v4097 = vpop.f32.mrb[0].mxu0
        %v4098 = vpop.f32.mrb[0].mxu0
        %v4099 = vadd.f32 %v3938, %v4098
        %v4100 = vpop.f32.mrb[0].mxu0
        %4101 = vmatprep.mubr.bf16.mxu0 %v2761
        %4102 = vmatmul.mubr.bf16.gmra.mrb[0].mxu0 %v2619
        %v4103 = vpop.f32.mrb[0].mxu0
        %v4104 = vadd.f32 %v3943, %v4103
        %v4105 = vpop.f32.mrb[0].mxu0
        %v4106 = vpop.f32.mrb[0].mxu0
        %v4107 = vadd.f32 %v3946, %v4106
        %v4108 = vpop.f32.mrb[0].mxu0
        %4109 = vmatprep.mubr.bf16.mxu0 %v2773
        %4110 = vmatmul.mubr.bf16.gmra.mrb[0].mxu0 %v2620
        %v4111 = vpop.f32.mrb[0].mxu0
        %v4112 = vadd.f32 %v3951, %v4111
        %v4113 = vpop.f32.mrb[0].mxu0
        %v4114 = vpop.f32.mrb[0].mxu0
        %v4115 = vadd.f32 %v3954, %v4114
        %v4116 = vpop.f32.mrb[0].mxu0
        %4117 = vmatprep.mubr.bf16.mxu0 %v2785
        %4118 = vmatmul.mubr.bf16.gmra.mrb[0].mxu0 %v2621
        %v4119 = vpop.f32.mrb[0].mxu0
        %v4120 = vadd.f32 %v3959, %v4119
        %v4121 = vpop.f32.mrb[0].mxu0
        %v4122 = vpop.f32.mrb[0].mxu0
        %v4123 = vadd.f32 %v3962, %v4122
        %v4124 = vpop.f32.mrb[0].mxu0
        %4125 = vmatprep.mubr.bf16.mxu0 %v2797
        %4126 = vmatmul.mubr.bf16.gmra.mrb[0].mxu0 %v2622
        %v4127 = vpop.f32.mrb[0].mxu0
        %v4128 = vadd.f32 %v3967, %v4127
        %v4129 = vpop.f32.mrb[0].mxu0
        %v4130 = vpop.f32.mrb[0].mxu0
        %v4131 = vadd.f32 %v3970, %v4130
        %v4132 = vpop.f32.mrb[0].mxu0
        %4133 = vmatprep.mubr.bf16.mxu0 %v2809
        %4134 = vmatmul.mubr.bf16.gmra.mrb[0].mxu0 %v2623
        %v4135 = vpop.f32.mrb[0].mxu0
        %v4136 = vadd.f32 %v3975, %v4135
        %v4137 = vpop.f32.mrb[0].mxu0
        %v4138 = vpop.f32.mrb[0].mxu0
        %v4139 = vadd.f32 %v3978, %v4138
        %v4140 = vpop.f32.mrb[0].mxu0
        %4141 = vmatprep.mubr.bf16.mxu0 %v2821
        %4142 = vmatmul.mubr.bf16.gmra.mrb[0].mxu0 %v2624
        %v4143 = vpop.f32.mrb[0].mxu0
        %v4144 = vadd.f32 %v3983, %v4143
        %v4145 = vpop.f32.mrb[0].mxu0
        %v4146 = vpop.f32.mrb[0].mxu0
        %v4147 = vadd.f32 %v3986, %v4146
        %v4148 = vpop.f32.mrb[0].mxu0
        %4149 = vmatprep.mubr.bf16.mxu0 %v2938
        %4150 = vmatmul.mubr.bf16.gmra.mrb[0].mxu0 %v2625
        %v4151 = vpop.f32.mrb[0].mxu0
        %v4152 = vadd.f32 %v3991, %v4151
        %v4153 = vpop.f32.mrb[0].mxu0
        %v4154 = vpop.f32.mrb[0].mxu0
        %v4155 = vadd.f32 %v3994, %v4154
        %v4156 = vpop.f32.mrb[0].mxu0
        %4157 = vmatprep.mubr.bf16.mxu0 %v501
        %4158 = vmatmul.mubr.bf16.gmra.mrb[0].mxu0 %v455
        %v4159 = vpop.f32.mrb[0].mxu0
        %v4160 = vadd.f32 %v3999, %v4159
        %v4161 = vpop.f32.mrb[0].mxu0
        %v4162 = vpop.f32.mrb[0].mxu0
        %v4163 = vadd.f32 %v4002, %v4162
        %v4164 = vpop.f32.mrb[0].mxu0
        %4165 = vdwg.mxu0
        %4166 = vmatprep.subr.bf16.mxu0 0
        %4167 = vmatpush1.bf16.msra.mxu0 %v3442
        %4168 = vmatprep.subr.bf16.mxu0 0
        %4169 = vmatpush1.bf16.msra.mxu0 %v3443
        %4170 = vmatprep.subr.bf16.mxu0 0
        %4171 = vmatpush1.bf16.msra.mxu0 %v3444
        %4172 = vmatprep.subr.bf16.mxu0 0
        %4173 = vmatpush1.bf16.msra.mxu0 %v3445
        %4174 = vmatprep.subr.bf16.mxu0 0
        %4175 = vmatpush1.bf16.msra.mxu0 %v3446
        %4176 = vmatprep.subr.bf16.mxu0 0
        %4177 = vmatpush1.bf16.msra.mxu0 %v3447
        %4178 = vmatprep.subr.bf16.mxu0 0
        %4179 = vmatpush1.bf16.msra.mxu0 %v3448
        %4180 = vmatprep.subr.bf16.mxu0 0
        %4181 = vmatpush1.bf16.msra.mxu0 %v3449
        %4182 = vmatprep.subr.bf16.mxu0 0
        %4183 = vmatpush1.bf16.msra.mxu0 0
        %4184 = vmatprep.subr.bf16.mxu0 0
        %4185 = vmatpush1.bf16.msra.mxu0 0
        %4186 = vmatprep.subr.bf16.mxu0 0
        %4187 = vmatpush1.bf16.msra.mxu0 0
        %4188 = vmatprep.subr.bf16.mxu0 0
        %4189 = vmatpush1.bf16.msra.mxu0 0
        %4190 = vmatprep.subr.bf16.mxu0 0
        %4191 = vmatpush1.bf16.msra.mxu0 0
        %4192 = vmatprep.subr.bf16.mxu0 0
        %4193 = vmatpush1.bf16.msra.mxu0 0
        %4194 = vmatprep.subr.bf16.mxu0 0
        %4195 = vmatpush1.bf16.msra.mxu0 0
        %4196 = vmatprep.subr.bf16.mxu0 0
        %4197 = vmatpush1.bf16.msra.mxu0 0
        %4198 = vmatprep.mubr.bf16.mxu0 0
        %4199 = vmatmul.mubr.bf16.gmra.mrb[0].mxu0 %v2872
        %v4200 = vpop.f32.mrb[0].mxu0
        %v4201 = vadd.f32 %v4040, %v4200
        %v4202 = vpop.f32.mrb[0].mxu0
        %v4203 = vpop.f32.mrb[0].mxu0
        %v4204 = vadd.f32 %v4043, %v4203
        %v4205 = vpop.f32.mrb[0].mxu0
        %4206 = vmatprep.mubr.bf16.mxu0 0
        %4207 = vmatmul.mubr.bf16.gmra.mrb[0].mxu0 %v2875
        %v4208 = vpop.f32.mrb[0].mxu0
        %v4209 = vadd.f32 %v4048, %v4208
        %v4210 = vpop.f32.mrb[0].mxu0
        %v4211 = vpop.f32.mrb[0].mxu0
        %v4212 = vadd.f32 %v4051, %v4211
        %v4213 = vpop.f32.mrb[0].mxu0
        %4214 = vmatprep.mubr.bf16.mxu0 0
        %4215 = vmatmul.mubr.bf16.gmra.mrb[0].mxu0 %v2878
        %v4216 = vpop.f32.mrb[0].mxu0
        %v4217 = vadd.f32 %v4056, %v4216
        %v4218 = vpop.f32.mrb[0].mxu0
        %v4219 = vpop.f32.mrb[0].mxu0
        %v4220 = vadd.f32 %v4059, %v4219
        %v4221 = vpop.f32.mrb[0].mxu0
        %4222 = vmatprep.mubr.bf16.mxu0 0
        %4223 = vmatmul.mubr.bf16.gmra.mrb[0].mxu0 %v2881
        %v4224 = vpop.f32.mrb[0].mxu0
        %v4225 = vadd.f32 %v4064, %v4224
        %v4226 = vpop.f32.mrb[0].mxu0
        %v4227 = vpop.f32.mrb[0].mxu0
        %v4228 = vadd.f32 %v4067, %v4227
        %v4229 = vpop.f32.mrb[0].mxu0
        %4230 = vmatprep.mubr.bf16.mxu0 0
        %4231 = vmatmul.mubr.bf16.gmra.mrb[0].mxu0 %v2884
        %v4232 = vpop.f32.mrb[0].mxu0
        %v4233 = vadd.f32 %v4072, %v4232
        %v4234 = vpop.f32.mrb[0].mxu0
        %v4235 = vpop.f32.mrb[0].mxu0
        %v4236 = vadd.f32 %v4075, %v4235
        %v4237 = vpop.f32.mrb[0].mxu0
        %4238 = vmatprep.mubr.bf16.mxu0 0
        %4239 = vmatmul.mubr.bf16.gmra.mrb[0].mxu0 %v2887
        %v4240 = vpop.f32.mrb[0].mxu0
        %v4241 = vadd.f32 %v4080, %v4240
        %v4242 = vpop.f32.mrb[0].mxu0
        %v4243 = vpop.f32.mrb[0].mxu0
        %v4244 = vadd.f32 %v4083, %v4243
        %v4245 = vpop.f32.mrb[0].mxu0
        %4246 = vmatprep.mubr.bf16.mxu0 0
        %4247 = vmatmul.mubr.bf16.gmra.mrb[0].mxu0 %v2890
        %v4248 = vpop.f32.mrb[0].mxu0
        %v4249 = vadd.f32 %v4088, %v4248
        %v4250 = vpop.f32.mrb[0].mxu0
        %v4251 = vpop.f32.mrb[0].mxu0
        %v4252 = vadd.f32 %v4091, %v4251
        %v4253 = vpop.f32.mrb[0].mxu0
        %4254 = vmatprep.mubr.bf16.mxu0 0
        %4255 = vmatmul.mubr.bf16.gmra.mrb[0].mxu0 %v2893
        %v4256 = vpop.f32.mrb[0].mxu0
        %v4257 = vadd.f32 %v4096, %v4256
        %v4258 = vpop.f32.mrb[0].mxu0
        %v4259 = vpop.f32.mrb[0].mxu0
        %v4260 = vadd.f32 %v4099, %v4259
        %v4261 = vpop.f32.mrb[0].mxu0
        %4262 = vmatprep.mubr.bf16.mxu0 0
        %4263 = vmatmul.mubr.bf16.gmra.mrb[0].mxu0 %v2896
        %v4264 = vpop.f32.mrb[0].mxu0
        %v4265 = vadd.f32 %v4104, %v4264
        %v4266 = vpop.f32.mrb[0].mxu0
        %v4267 = vpop.f32.mrb[0].mxu0
        %v4268 = vadd.f32 %v4107, %v4267
        %v4269 = vpop.f32.mrb[0].mxu0
        %4270 = vmatprep.mubr.bf16.mxu0 0
        %4271 = vmatmul.mubr.bf16.gmra.mrb[0].mxu0 %v2899
        %v4272 = vpop.f32.mrb[0].mxu0
        %v4273 = vadd.f32 %v4112, %v4272
        %v4274 = vpop.f32.mrb[0].mxu0
        %v4275 = vpop.f32.mrb[0].mxu0
        %v4276 = vadd.f32 %v4115, %v4275
        %v4277 = vpop.f32.mrb[0].mxu0
        %4278 = vmatprep.mubr.bf16.mxu0 0
        %4279 = vmatmul.mubr.bf16.gmra.mrb[0].mxu0 %v2902
        %v4280 = vpop.f32.mrb[0].mxu0
        %v4281 = vadd.f32 %v4120, %v4280
        %v4282 = vpop.f32.mrb[0].mxu0
        %v4283 = vpop.f32.mrb[0].mxu0
        %v4284 = vadd.f32 %v4123, %v4283
        %v4285 = vpop.f32.mrb[0].mxu0
        %4286 = vmatprep.mubr.bf16.mxu0 0
        %4287 = vmatmul.mubr.bf16.gmra.mrb[0].mxu0 %v2905
        %v4288 = vpop.f32.mrb[0].mxu0
        %v4289 = vadd.f32 %v4128, %v4288
        %v4290 = vpop.f32.mrb[0].mxu0
        %v4291 = vpop.f32.mrb[0].mxu0
        %v4292 = vadd.f32 %v4131, %v4291
        %v4293 = vpop.f32.mrb[0].mxu0
        %4294 = vmatprep.mubr.bf16.mxu0 0
        %4295 = vmatmul.mubr.bf16.gmra.mrb[0].mxu0 %v2908
        %v4296 = vpop.f32.mrb[0].mxu0
        %v4297 = vadd.f32 %v4136, %v4296
        %v4298 = vpop.f32.mrb[0].mxu0
        %v4299 = vpop.f32.mrb[0].mxu0
        %v4300 = vadd.f32 %v4139, %v4299
        %v4301 = vpop.f32.mrb[0].mxu0
        %4302 = vmatprep.mubr.bf16.mxu0 0
        %4303 = vmatmul.mubr.bf16.gmra.mrb[0].mxu0 %v2911
        %v4304 = vpop.f32.mrb[0].mxu0
        %v4305 = vadd.f32 %v4144, %v4304
        %v4306 = vpop.f32.mrb[0].mxu0
        %v4307 = vpop.f32.mrb[0].mxu0
        %v4308 = vadd.f32 %v4147, %v4307
        %v4309 = vpop.f32.mrb[0].mxu0
        %4310 = vmatprep.mubr.bf16.mxu0 0
        %4311 = vmatmul.mubr.bf16.gmra.mrb[0].mxu0 %v2944
        %v4312 = vpop.f32.mrb[0].mxu0
        %v4313 = vadd.f32 %v4152, %v4312
        %v4314 = vpop.f32.mrb[0].mxu0
        %v4315 = vpop.f32.mrb[0].mxu0
        %v4316 = vadd.f32 %v4155, %v4315
        %v4317 = vpop.f32.mrb[0].mxu0
        %4318 = vmatprep.mubr.bf16.mxu0 0
        %4319 = vmatmul.mubr.bf16.gmra.mrb[0].mxu0 %v733
        %v4320 = vpop.f32.mrb[0].mxu0
        %v4321 = vadd.f32 %v4160, %v4320
        %v4322 = vpop.f32.mrb[0].mxu0
        %v4323 = vpop.f32.mrb[0].mxu0
        %v4324 = vadd.f32 %v4163, %v4323
        %v4325 = vpop.f32.mrb[0].mxu0
        %4326 = vdwg.mxu0
        %4327 = vst [vmem:[%s244] sm:$0xff] %v4201
        %4328 = vst [vmem:[%s244 + $0x8] sm:$0xff] %v4204
        %4329 = vst [vmem:[%s244 + $0x10] sm:$0xff] %v4209
        %4330 = vst [vmem:[%s244 + $0x18] sm:$0xff] %v4212
        %4331 = vst [vmem:[%s244 + $0x20] sm:$0xff] %v4217
        %4332 = vst [vmem:[%s244 + $0x28] sm:$0xff] %v4220
        %4333 = vst [vmem:[%s244 + $0x30] sm:$0xff] %v4225
        %4334 = vst [vmem:[%s244 + $0x38] sm:$0xff] %v4228
        %4335 = vst [vmem:[%s244 + $0x40] sm:$0xff] %v4233
        %4336 = vst [vmem:[%s244 + $0x48] sm:$0xff] %v4236
        %4337 = vst [vmem:[%s244 + $0x50] sm:$0xff] %v4241
        %4338 = vst [vmem:[%s244 + $0x58] sm:$0xff] %v4244
        %4339 = vst [vmem:[%s244 + $0x60] sm:$0xff] %v4249
        %4340 = vst [vmem:[%s244 + $0x68] sm:$0xff] %v4252
        %4341 = vst [vmem:[%s244 + $0x70] sm:$0xff] %v4257
        %4342 = vst [vmem:[%s244 + $0x78] sm:$0xff] %v4260
        %4343 = vst [vmem:[%s244 + $0x80] sm:$0xff] %v4265
        %4344 = vst [vmem:[%s244 + $0x88] sm:$0xff] %v4268
        %4345 = vst [vmem:[%s244 + $0x90] sm:$0xff] %v4273
        %4346 = vst [vmem:[%s244 + $0x98] sm:$0xff] %v4276
        %4347 = vst [vmem:[%s244 + $0xa0] sm:$0xff] %v4281
        %4348 = vst [vmem:[%s244 + $0xa8] sm:$0xff] %v4284
        %4349 = vst [vmem:[%s244 + $0xb0] sm:$0xff] %v4289
        %4350 = vst [vmem:[%s244 + $0xb8] sm:$0xff] %v4292
        %4351 = vst [vmem:[%s244 + $0xc0] sm:$0xff] %v4297
        %4352 = vst [vmem:[%s244 + $0xc8] sm:$0xff] %v4300
        %4353 = vst [vmem:[%s244 + $0xd0] sm:$0xff] %v4305
        %4354 = vst [vmem:[%s244 + $0xd8] sm:$0xff] %v4308
        %4355 = vst [vmem:[%s244 + $0xe0] sm:$0xff] %v4313
        %4356 = vst [vmem:[%s244 + $0xe8] sm:$0xff] %v4316
        %4357 = vst [vmem:[%s244 + $0xf0] sm:$0xff] %v4321
        %4358 = vst [vmem:[%s244 + $0xf8] sm:$0xff] %v4324
        %s4359 = sand.u32 %s159, 1
        %s4360 = scalar_lea.sflag [#allocation3], %s4359
        %s4361 = sand.u32 %s159, 1
        %s4362 = smul.addr %s4361, 256
        %s4363 = scalar_lea.vmem [#allocation2], %s4362
        // Predicated region
        $region45: #{basic_block_forward.1} parent=43 // pred_check
          %p4364 = pneg %p169
        $region46: #{basic_block_forward.1} parent=43 // pred_check_branch
          %4366 = sbr.rel (%p4364) target = $region48
        $region47: #{basic_block_forward.1} parent=43 // pred_region
          %s4368 = ssub.s32 4096, 4096
          %4369 = vsyncadd %s4360, %s4368
          %s4370 = smul.addr %s20, 32
          %s4371 = smul.addr %s4370, 128
          %s4372 = scalar_lea.hbm %s6, %s4371
          %s4373 = sshll.u32 %s4363, 4
          %s4374 = int_to_ptr.vmem [resolvable:$true] %s4373
          %4379 = dma.vmem_to_hbm [thread:$0]  %s4374, 4096, %s4372, %s4360, 128, 128, 8
        $region48: #{basic_block_forward.1} parent=43 // pred_fallthru
          _
      $region44: #{basic_block_forward.1} parent=5 // pred_fallthru
        _
      %p4380 = scmp.le.s32.totalorder 2, %s15
      // Predicated region
      $region49: #{basic_block_forward.1} parent=5 // pred_check
        %p4381 = pneg %p4380
      $region50: #{basic_block_forward.1} parent=5 // pred_check_branch
        %4383 = sbr.rel (%p4381) target = $region52
      $region51: #{basic_block_forward.1} parent=5 // pred_region
        %s4384 = ssub.s32 %s15, 2
        // Predicated region
        $region53: #{basic_block_forward.1} parent=51 // pred_check
          %p4385 = pneg %p175
        $region54: #{basic_block_forward.1} parent=51 // pred_check_branch
          %4387 = sbr.rel (%p4385) target = $region56
        $region55: #{basic_block_forward.1} parent=51 // pred_region
          %s4388 = sand.u32 %s160, 1
          %s4389 = scalar_lea.sflag [#allocation3], %s4388
          %s4390 = sand.u32 %s160, 1
          %s4391 = smul.addr %s4390, 256
          %s4392 = scalar_lea.vmem [#allocation2], %s4391
          %4393 = dma.done %s4389, 4096
        $region56: #{basic_block_forward.1} parent=51 // pred_fallthru
          _
      $region52: #{basic_block_forward.1} parent=5 // pred_fallthru
        _
    $region6: #{basic_block_forward.1} parent=1 // loop_footer
      %s19 = sadd.s32 1, %s15
    $region7: #{basic_block_forward.1} parent=1 // loop_footer_branch
      %14 = sbr.rel target = $region3
    $region8: #{basic_block_forward.1} parent=1 // loop_exit
      _
    %4394 = vsyncpa [#allocation3], 1
    %s4395 = scalar_lea.sflag [#allocation3], 1
    %4396 = vsyncpa %s4395, 1

</llo_original>
